<compile_context>
chip_gen: v7x
topology: tpu7x:2x2x1
jax: 0.10.0
libtpu: 0.0.40
codegen_flags: <defaults>
</compile_context>

<pallas_src>
import math
from functools import partial

import numpy as np
import jax
import jax.numpy as jnp
from jax.experimental import pallas as pl
from jax.experimental.pallas import tpu as pltpu


_VMEM_LIMIT = 32 * 1024 * 1024   # explicit scoped-VMEM budget (safe on v5e/v6e/v7x)
_TILE_M = 256                    # row tile for the standalone matmul kernels
_LN_EPS = 1e-5                   # nn.LayerNorm default eps


def _round_up(x, m):
    return (x + m - 1) // m * m


# ---------------------- row-tiled matmul (+bias) kernels ----------------------

def _linear_kernel(x_ref, w_ref, b_ref, o_ref):
    acc = jnp.dot(x_ref[...].astype(jnp.float32), w_ref[...],
                  preferred_element_type=jnp.float32)
    o_ref[...] = (acc + b_ref[...]).astype(o_ref.dtype)


def _ln_linear_kernel(x_ref, g_ref, beta_ref, w_ref, b_ref, o_ref, *, eps):
    # Fused LayerNorm prologue + matmul + bias: reads the activation tile once.
    x = x_ref[...].astype(jnp.float32)
    mu = jnp.mean(x, axis=-1, keepdims=True)
    var = jnp.mean((x - mu) ** 2, axis=-1, keepdims=True)
    x = (x - mu) * jax.lax.rsqrt(var + eps) * g_ref[...] + beta_ref[...]
    acc = jnp.dot(x, w_ref[...], preferred_element_type=jnp.float32)
    o_ref[...] = (acc + b_ref[...]).astype(o_ref.dtype)


def _row_tiled_call(kernel, x2d, row_consts, w, b, *, tile_m=_TILE_M):
    """Run `kernel` over row tiles of x2d; row_consts are (1, K) vectors
    (e.g. LN gamma/beta) broadcast to every tile.  Weight/bias blocks use a
    constant index_map so they are fetched once and stay VMEM-resident."""
    M, K = x2d.shape
    N = w.shape[1]
    tm = min(tile_m, _round_up(max(M, 1), 8))
    Mp = _round_up(M, tm)
    xp = jnp.pad(x2d, ((0, Mp - M), (0, 0))) if Mp != M else x2d

    const_specs = [pl.BlockSpec((1, K), lambda i: (0, 0)) for _ in row_consts]
    out = pl.pallas_call(
        kernel,
        grid=(Mp // tm,),
        in_specs=[pl.BlockSpec((tm, K), lambda i: (i, 0))] + const_specs + [
            pl.BlockSpec((K, N), lambda i: (0, 0)),
            pl.BlockSpec((1, N), lambda i: (0, 0)),
        ],
        out_specs=pl.BlockSpec((tm, N), lambda i: (i, 0)),
        out_shape=jax.ShapeDtypeStruct((Mp, N), x2d.dtype),
        compiler_params=pltpu.CompilerParams(
            dimension_semantics=("parallel",),
            vmem_limit_bytes=_VMEM_LIMIT),
    )(xp, *row_consts, w, b.reshape(1, N))
    return out[:M] if Mp != M else out


def linear(x2d, w, b):
    return _row_tiled_call(_linear_kernel, x2d, [], w, b)


def ln_linear(x2d, g, beta, w, b, eps=_LN_EPS):
    K = x2d.shape[1]
    return _row_tiled_call(partial(_ln_linear_kernel, eps=eps), x2d,
                           [g.reshape(1, K), beta.reshape(1, K)], w, b)


# ------------------------ fused transformer block kernel ----------------------

def _block_kernel(x_ref,
                  qkv_w_ref, qkv_b_ref, proj_w_ref, proj_b_ref,
                  fc1_w_ref, fc1_b_ref, fc2_w_ref, fc2_b_ref,
                  n1g_ref, n1b_ref, n2g_ref, n2b_ref,
                  o_ref, *, num_heads, eps):
    x = x_ref[0].astype(jnp.float32)               # (N, D), stays in VMEM
    N, D = x.shape
    dh = D // num_heads
    scale = dh ** -0.5

    def _ln(z, g, beta):
        mu = jnp.mean(z, axis=-1, keepdims=True)
        var = jnp.mean((z - mu) ** 2, axis=-1, keepdims=True)
        return (z - mu) * jax.lax.rsqrt(var + eps) * g + beta

    # ---- attention branch: LN1 -> qkv -> per-head softmax(QK^T)V -> proj ----
    h = _ln(x, n1g_ref[...], n1b_ref[...])
    qkv = jnp.dot(h, qkv_w_ref[...],
                  preferred_element_type=jnp.float32) + qkv_b_ref[...]
    proj_acc = jnp.zeros((N, D), jnp.float32)
    for hd in range(num_heads):
        lo = hd * dh
        q = qkv[:, lo:lo + dh]
        k = qkv[:, D + lo:D + lo + dh]
        v = qkv[:, 2 * D + lo:2 * D + lo + dh]
        s = jax.lax.dot_general(q, k, (((1,), (1,)), ((), ())),
                                preferred_element_type=jnp.float32) * scale
        s = s - jnp.max(s, axis=-1, keepdims=True)
        p = jnp.exp(s)
        p = p * pl.reciprocal(jnp.sum(p, axis=-1, keepdims=True), approx=True)
        o_h = jnp.dot(p, v, preferred_element_type=jnp.float32)
        # concat(heads) @ proj_w  ==  sum_h  o_h @ proj_w[h*dh:(h+1)*dh, :]
        # -> lane-dense (N, D) accumulation, no head concat / transpose needed.
        proj_acc = proj_acc + jnp.dot(o_h, proj_w_ref[lo:lo + dh, :],
                                      preferred_element_type=jnp.float32)
    x = x + proj_acc + proj_b_ref[...]              # fused residual add

    # ---- MLP branch: LN2 -> fc1 -> exact erf-GELU -> fc2 -> +residual -------
    h = _ln(x, n2g_ref[...], n2b_ref[...])
    h = jnp.dot(h, fc1_w_ref[...],
                preferred_element_type=jnp.float32) + fc1_b_ref[...]
    h = 0.5 * h * (1.0 + jax.lax.erf(h * (1.0 / math.sqrt(2.0))))  # exact GELU
    x = x + jnp.dot(h, fc2_w_ref[...],
                    preferred_element_type=jnp.float32) + fc2_b_ref[...]

    o_ref[0] = x.astype(o_ref.dtype)


def block_forward(p, x, num_heads, eps=_LN_EPS):
    B, N, D = x.shape
    hidden = p["fc1_w"].shape[1]

    def w_spec(r, c):
        return pl.BlockSpec((r, c), lambda b: (0, 0))

    return pl.pallas_call(
        partial(_block_kernel, num_heads=num_heads, eps=eps),
        grid=(B,),
        in_specs=[
            pl.BlockSpec((1, N, D), lambda b: (b, 0, 0)),   # x (per-batch tile)
            w_spec(D, 3 * D), w_spec(1, 3 * D),             # qkv
            w_spec(D, D), w_spec(1, D),                     # proj
            w_spec(D, hidden), w_spec(1, hidden),           # fc1
            w_spec(hidden, D), w_spec(1, D),                # fc2
            w_spec(1, D), w_spec(1, D),                     # norm1 gamma/beta
            w_spec(1, D), w_spec(1, D),                     # norm2 gamma/beta
        ],
        out_specs=pl.BlockSpec((1, N, D), lambda b: (b, 0, 0)),
        out_shape=jax.ShapeDtypeStruct((B, N, D), x.dtype),
        compiler_params=pltpu.CompilerParams(
            dimension_semantics=("parallel",),
            vmem_limit_bytes=_VMEM_LIMIT),
    )(x,
      p["qkv_w"], p["qkv_b"].reshape(1, -1),
      p["proj_w"], p["proj_b"].reshape(1, -1),
      p["fc1_w"], p["fc1_b"].reshape(1, -1),
      p["fc2_w"], p["fc2_b"].reshape(1, -1),
      p["norm1_g"].reshape(1, -1), p["norm1_b"].reshape(1, -1),
      p["norm2_g"].reshape(1, -1), p["norm2_b"].reshape(1, -1))


# ----------------------------- parameter creation -----------------------------

def _xavier(key, fan_in, fan_out):
    limit = math.sqrt(6.0 / (fan_in + fan_out))
    return jax.random.uniform(key, (fan_in, fan_out), jnp.float32, -limit, limit)


def get_2d_sincos_pos_embed(embed_dim, grid_size, cls_token=False):
    def _1d(dim, pos):
        omega = np.arange(dim // 2, dtype=np.float64) / (dim / 2.0)
        omega = 1.0 / 10000 ** omega
        out = np.einsum("m,d->md", pos.reshape(-1), omega)
        return np.concatenate([np.sin(out), np.cos(out)], axis=1)

    grid_h = np.arange(grid_size, dtype=np.float64)
    grid_w = np.arange(grid_size, dtype=np.float64)
    grid = np.meshgrid(grid_w, grid_h)          # w first (matches MAE reference)
    grid = np.stack(grid, axis=0).reshape([2, 1, grid_size, grid_size])
    emb_h = _1d(embed_dim // 2, grid[0])
    emb_w = _1d(embed_dim // 2, grid[1])
    pe = np.concatenate([emb_h, emb_w], axis=1)
    if cls_token:
        pe = np.concatenate([np.zeros([1, embed_dim]), pe], axis=0)
    return pe.astype(np.float32)


def init_params(key, inp_dim, embed_dim, out_dim, num_patches, depth, mlp_ratio):
    ks = iter(jax.random.split(key, 64))
    hidden = int(embed_dim * mlp_ratio)
    params = {
        "embed_w": _xavier(next(ks), inp_dim, embed_dim),
        "embed_b": jnp.zeros((embed_dim,), jnp.float32),
        "mask_token": 0.02 * jax.random.normal(next(ks), (1, 1, embed_dim), jnp.float32),
        "pos_embed": jnp.asarray(
            get_2d_sincos_pos_embed(embed_dim, int(num_patches ** 0.5), cls_token=True)
        )[None],  # (1, 1+P, D)
        "norm_g": jnp.ones((embed_dim,), jnp.float32),
        "norm_b": jnp.zeros((embed_dim,), jnp.float32),
        # pred head: Conv2d(embed_dim, out_dim, kernel_size=1) == per-token linear
        "pred_w": _xavier(next(ks), embed_dim, out_dim),
        "pred_b": jnp.zeros((out_dim,), jnp.float32),
        "blocks": [],
    }
    for _ in range(depth):
        blk = {
            "norm1_g": jnp.ones((embed_dim,), jnp.float32),
            "norm1_b": jnp.zeros((embed_dim,), jnp.float32),
            "qkv_w": _xavier(next(ks), embed_dim, 3 * embed_dim),
            "qkv_b": jnp.zeros((3 * embed_dim,), jnp.float32),   # qkv_bias=False
            "proj_w": _xavier(next(ks), embed_dim, embed_dim),
            "proj_b": jnp.zeros((embed_dim,), jnp.float32),
            "norm2_g": jnp.ones((embed_dim,), jnp.float32),
            "norm2_b": jnp.zeros((embed_dim,), jnp.float32),
            "fc1_w": _xavier(next(ks), embed_dim, hidden),
            "fc1_b": jnp.zeros((hidden,), jnp.float32),
            "fc2_w": _xavier(next(ks), hidden, embed_dim),
            "fc2_b": jnp.zeros((embed_dim,), jnp.float32),
        }
        params["blocks"].append(blk)
    return params


# -------------------------------- forward pass --------------------------------

def mae_decoder_forward(params, x, ids_restore, num_heads):
    B, L, _ = x.shape
    D = params["embed_w"].shape[1]
    P = ids_restore.shape[1]

    # embed Linear (row-tiled Pallas matmul)
    x = linear(x.reshape(B * L, -1), params["embed_w"],
               params["embed_b"]).reshape(B, L, D)

    # append mask tokens & unshuffle with ids_restore (XLA glue: data-dep gather)
    n_mask = P + 1 - L
    mask_tokens = jnp.broadcast_to(params["mask_token"], (B, n_mask, D))
    x_ = jnp.concatenate([x[:, 1:], mask_tokens], axis=1)          # (B, P, D)
    idx = jnp.broadcast_to(ids_restore[:, :, None], (B, P, D))
    x_ = jnp.take_along_axis(x_, idx, axis=1)
    x = jnp.concatenate([x[:, :1], x_], axis=1)                    # (B, 1+P, D)

    # frozen sincos positional embedding
    x = x + params["pos_embed"]

    # fused transformer blocks: one pallas_call per block, grid over batch
    for blk in params["blocks"]:
        x = block_forward(blk, x, num_heads)

    # final LayerNorm fused into the 1x1-conv prediction head.
    # LN is per-token and the head drops the cls token, so dropping cls before
    # the fused LN+matmul is exactly equivalent to norm-then-slice.
    toks = x[:, 1:].reshape(B * P, D)
    out = ln_linear(toks, params["norm_g"], params["norm_b"],
                    params["pred_w"], params["pred_b"])
    return out.reshape(B, P, -1)                                   # (B, P, out_dim)


# ------------------------------------ main -------------------------------------

if __name__ == "__main__":
    # small but shape-consistent config
    inp_dim, embed_dim, out_dim = 16, 32, 8
    num_patches, num_heads, depth, mlp_ratio = 16, 4, 1, 4.0
    B, L_keep = 2, 4            # encoder kept 4 patches (+1 cls token)

    root = jax.random.PRNGKey(0)
    k_param, k_x, k_perm = jax.random.split(root, 3)

    params = init_params(k_param, inp_dim, embed_dim, out_dim,
                         num_patches, depth, mlp_ratio)

    x = jax.random.normal(k_x, (B, 1 + L_keep, inp_dim), jnp.float32)
    ids_restore = jnp.stack(
        [jax.random.permutation(jax.random.fold_in(k_perm, b), num_patches)
         for b in range(B)], axis=0).astype(jnp.int32)              # (B, num_patches)

    fwd = jax.jit(partial(mae_decoder_forward, num_heads=num_heads))
    out = jax.block_until_ready(fwd(params, x, ids_restore))

    assert out.shape == (B, num_patches, out_dim), out.shape
    assert bool(jnp.all(jnp.isfinite(out)))
    print("KERNEL_OK")
</pallas_src>

<mosaic_0001>
module attributes {stable_mosaic.version = 11 : i64} {
  func.func @_linear_kernel(%arg0: i32, %arg1: memref<16x16xf32, #tpu.memory_space<vmem>>, %arg2: memref<16x32xf32, #tpu.memory_space<vmem>>, %arg3: memref<1x32xf32, #tpu.memory_space<vmem>>, %arg4: memref<16x32xf32, #tpu.memory_space<vmem>>) attributes {dimension_semantics = [#tpu.dimension_semantics<parallel>], iteration_bounds = array<i64: 1>, scalar_prefetch = 0 : i64, scratch_operands = 0 : i64, tpu.core_type = #tpu.core_type<tc>, window_params = [{transform_indices = @transform_0, window_bounds = array<i64: 16, 16>}, {pipeline_mode = #tpu.pipeline_mode<synchronous>, transform_indices = @transform_1, window_bounds = array<i64: 16, 32>}, {pipeline_mode = #tpu.pipeline_mode<synchronous>, transform_indices = @transform_2, window_bounds = array<i64: 1, 32>}, {transform_indices = @transform_3, window_bounds = array<i64: 16, 32>}]} {
    %c0 = arith.constant 0 : index
    %c0_0 = arith.constant 0 : index
    %0 = vector.load %arg1[%c0, %c0_0] : memref<16x16xf32, #tpu.memory_space<vmem>>, vector<16x16xf32>
    %c0_1 = arith.constant 0 : index
    %c0_2 = arith.constant 0 : index
    %1 = vector.load %arg2[%c0_1, %c0_2] : memref<16x32xf32, #tpu.memory_space<vmem>>, vector<16x32xf32>
    %cst = arith.constant dense<0.000000e+00> : vector<16x32xf32>
    %2 = tpu.matmul %0, %1, %cst {dimension_numbers = #tpu.dot_dimension_numbers<[1], [0], [0], [1], [0, 0, 1, 1], [], []>} : vector<16x16xf32>, vector<16x32xf32>, vector<16x32xf32> -> vector<16x32xf32>
    %c0_3 = arith.constant 0 : index
    %c0_4 = arith.constant 0 : index
    %3 = vector.load %arg3[%c0_3, %c0_4] : memref<1x32xf32, #tpu.memory_space<vmem>>, vector<1x32xf32>
    %4 = vector.broadcast %3 : vector<1x32xf32> to vector<16x32xf32>
    %5 = arith.addf %2, %4 : vector<16x32xf32>
    %c0_5 = arith.constant 0 : index
    %c0_6 = arith.constant 0 : index
    %6 = vector.load %arg4[%c0_5, %c0_6] : memref<16x32xf32, #tpu.memory_space<vmem>>, vector<16x32xf32>
    tpu.vector_store %arg4[%c0_5, %c0_6], %5 {strides = array<i32>} : memref<16x32xf32, #tpu.memory_space<vmem>>, vector<16x32xf32>,
    return
  }
  func.func @transform_0(%arg0: i32) -> (i32, i32) {
    %c0_i32 = arith.constant 0 : i32
    %c0_i32_0 = arith.constant 0 : i32
    return %arg0, %c0_i32 : i32, i32
  }
  func.func @transform_1(%arg0: i32) -> (i32, i32) {
    %c0_i32 = arith.constant 0 : i32
    %c0_i32_0 = arith.constant 0 : i32
    %c0_i32_1 = arith.constant 0 : i32
    return %c0_i32, %c0_i32_0 : i32, i32
  }
  func.func @transform_2(%arg0: i32) -> (i32, i32) {
    %c0_i32 = arith.constant 0 : i32
    %c0_i32_0 = arith.constant 0 : i32
    %c0_i32_1 = arith.constant 0 : i32
    return %c0_i32, %c0_i32_0 : i32, i32
  }
  func.func @transform_3(%arg0: i32) -> (i32, i32) {
    %c0_i32 = arith.constant 0 : i32
    %c0_i32_0 = arith.constant 0 : i32
    return %arg0, %c0_i32 : i32, i32
  }
}

module attributes {stable_mosaic.version = 11 : i64} {
  func.func @_ln_linear_kernel(%arg0: i32, %arg1: memref<32x32xf32, #tpu.memory_space<vmem>>, %arg2: memref<1x32xf32, #tpu.memory_space<vmem>>, %arg3: memref<1x32xf32, #tpu.memory_space<vmem>>, %arg4: memref<32x8xf32, #tpu.memory_space<vmem>>, %arg5: memref<1x8xf32, #tpu.memory_space<vmem>>, %arg6: memref<32x8xf32, #tpu.memory_space<vmem>>) attributes {dimension_semantics = [#tpu.dimension_semantics<parallel>], iteration_bounds = array<i64: 1>, scalar_prefetch = 0 : i64, scratch_operands = 0 : i64, tpu.core_type = #tpu.core_type<tc>, window_params = [{transform_indices = @transform_0, window_bounds = array<i64: 32, 32>}, {pipeline_mode = #tpu.pipeline_mode<synchronous>, transform_indices = @transform_1, window_bounds = array<i64: 1, 32>}, {pipeline_mode = #tpu.pipeline_mode<synchronous>, transform_indices = @transform_2, window_bounds = array<i64: 1, 32>}, {pipeline_mode = #tpu.pipeline_mode<synchronous>, transform_indices = @transform_3, window_bounds = array<i64: 32, 8>}, {pipeline_mode = #tpu.pipeline_mode<synchronous>, transform_indices = @transform_4, window_bounds = array<i64: 1, 8>}, {transform_indices = @transform_5, window_bounds = array<i64: 32, 8>}]} {
    %c0 = arith.constant 0 : index
    %c0_0 = arith.constant 0 : index
    %0 = vector.load %arg1[%c0, %c0_0] : memref<32x32xf32, #tpu.memory_space<vmem>>, vector<32x32xf32>
    %cst = arith.constant dense<0.000000e+00> : vector<32xf32>
    %1 = vector.multi_reduction <add>, %0, %cst [1] : vector<32x32xf32> to vector<32xf32>
    %2 = vector.shape_cast %1 : vector<32xf32> to vector<32x1xf32>
    %cst_1 = arith.constant 3.200000e+01 : f32
    %3 = vector.broadcast %cst_1 : f32 to vector<32x1xf32>
    %4 = arith.divf %2, %3 : vector<32x1xf32>
    %5 = vector.broadcast %4 : vector<32x1xf32> to vector<32x32xf32>
    %6 = arith.subf %0, %5 : vector<32x32xf32>
    %7 = arith.mulf %6, %6 : vector<32x32xf32>
    %cst_2 = arith.constant dense<0.000000e+00> : vector<32xf32>
    %8 = vector.multi_reduction <add>, %7, %cst_2 [1] : vector<32x32xf32> to vector<32xf32>
    %9 = vector.shape_cast %8 : vector<32xf32> to vector<32x1xf32>
    %cst_3 = arith.constant 3.200000e+01 : f32
    %10 = vector.broadcast %cst_3 : f32 to vector<32x1xf32>
    %11 = arith.divf %9, %10 : vector<32x1xf32>
    %12 = vector.broadcast %4 : vector<32x1xf32> to vector<32x32xf32>
    %13 = arith.subf %0, %12 : vector<32x32xf32>
    %cst_4 = arith.constant 9.99999974E-6 : f32
    %14 = vector.broadcast %cst_4 : f32 to vector<32x1xf32>
    %15 = arith.addf %11, %14 : vector<32x1xf32>
    %16 = math.rsqrt %15 : vector<32x1xf32>
    %17 = vector.broadcast %16 : vector<32x1xf32> to vector<32x32xf32>
    %18 = arith.mulf %13, %17 : vector<32x32xf32>
    %c0_5 = arith.constant 0 : index
    %c0_6 = arith.constant 0 : index
    %19 = vector.load %arg2[%c0_5, %c0_6] : memref<1x32xf32, #tpu.memory_space<vmem>>, vector<1x32xf32>
    %20 = vector.broadcast %19 : vector<1x32xf32> to vector<32x32xf32>
    %21 = arith.mulf %18, %20 : vector<32x32xf32>
    %c0_7 = arith.constant 0 : index
    %c0_8 = arith.constant 0 : index
    %22 = vector.load %arg3[%c0_7, %c0_8] : memref<1x32xf32, #tpu.memory_space<vmem>>, vector<1x32xf32>
    %23 = vector.broadcast %22 : vector<1x32xf32> to vector<32x32xf32>
    %24 = arith.addf %21, %23 : vector<32x32xf32>
    %c0_9 = arith.constant 0 : index
    %c0_10 = arith.constant 0 : index
    %25 = vector.load %arg4[%c0_9, %c0_10] : memref<32x8xf32, #tpu.memory_space<vmem>>, vector<32x8xf32>
    %cst_11 = arith.constant dense<0.000000e+00> : vector<32x8xf32>
    %26 = tpu.matmul %24, %25, %cst_11 {dimension_numbers = #tpu.dot_dimension_numbers<[1], [0], [0], [1], [0, 0, 1, 1], [], []>} : vector<32x32xf32>, vector<32x8xf32>, vector<32x8xf32> -> vector<32x8xf32>
    %c0_12 = arith.constant 0 : index
    %c0_13 = arith.constant 0 : index
    %27 = vector.load %arg5[%c0_12, %c0_13] : memref<1x8xf32, #tpu.memory_space<vmem>>, vector<1x8xf32>
    %28 = vector.broadcast %27 : vector<1x8xf32> to vector<32x8xf32>
    %29 = arith.addf %26, %28 : vector<32x8xf32>
    %c0_14 = arith.constant 0 : index
    %c0_15 = arith.constant 0 : index
    %30 = vector.load %arg6[%c0_14, %c0_15] : memref<32x8xf32, #tpu.memory_space<vmem>>, vector<32x8xf32>
    tpu.vector_store %arg6[%c0_14, %c0_15], %29 {strides = array<i32>} : memref<32x8xf32, #tpu.memory_space<vmem>>, vector<32x8xf32>,
    return
  }
  func.func @transform_0(%arg0: i32) -> (i32, i32) {
    %c0_i32 = arith.constant 0 : i32
    %c0_i32_0 = arith.constant 0 : i32
    return %arg0, %c0_i32 : i32, i32
  }
  func.func @transform_1(%arg0: i32) -> (i32, i32) {
    %c0_i32 = arith.constant 0 : i32
    %c0_i32_0 = arith.constant 0 : i32
    %c0_i32_1 = arith.constant 0 : i32
    return %c0_i32, %c0_i32_0 : i32, i32
  }
  func.func @transform_2(%arg0: i32) -> (i32, i32) {
    %c0_i32 = arith.constant 0 : i32
    %c0_i32_0 = arith.constant 0 : i32
    %c0_i32_1 = arith.constant 0 : i32
    return %c0_i32, %c0_i32_0 : i32, i32
  }
  func.func @transform_3(%arg0: i32) -> (i32, i32) {
    %c0_i32 = arith.constant 0 : i32
    %c0_i32_0 = arith.constant 0 : i32
    %c0_i32_1 = arith.constant 0 : i32
    return %c0_i32, %c0_i32_0 : i32, i32
  }
  func.func @transform_4(%arg0: i32) -> (i32, i32) {
    %c0_i32 = arith.constant 0 : i32
    %c0_i32_0 = arith.constant 0 : i32
    %c0_i32_1 = arith.constant 0 : i32
    return %c0_i32, %c0_i32_0 : i32, i32
  }
  func.func @transform_5(%arg0: i32) -> (i32, i32) {
    %c0_i32 = arith.constant 0 : i32
    %c0_i32_0 = arith.constant 0 : i32
    return %arg0, %c0_i32 : i32, i32
  }
}

module attributes {stable_mosaic.version = 11 : i64} {
  func.func @_block_kernel(%arg0: i32, %arg1: memref<1x17x32xf32, #tpu.memory_space<vmem>>, %arg2: memref<32x96xf32, #tpu.memory_space<vmem>>, %arg3: memref<1x96xf32, #tpu.memory_space<vmem>>, %arg4: memref<32x32xf32, #tpu.memory_space<vmem>>, %arg5: memref<1x32xf32, #tpu.memory_space<vmem>>, %arg6: memref<32x128xf32, #tpu.memory_space<vmem>>, %arg7: memref<1x128xf32, #tpu.memory_space<vmem>>, %arg8: memref<128x32xf32, #tpu.memory_space<vmem>>, %arg9: memref<1x32xf32, #tpu.memory_space<vmem>>, %arg10: memref<1x32xf32, #tpu.memory_space<vmem>>, %arg11: memref<1x32xf32, #tpu.memory_space<vmem>>, %arg12: memref<1x32xf32, #tpu.memory_space<vmem>>, %arg13: memref<1x32xf32, #tpu.memory_space<vmem>>, %arg14: memref<1x17x32xf32, #tpu.memory_space<vmem>>) attributes {dimension_semantics = [#tpu.dimension_semantics<parallel>], iteration_bounds = array<i64: 2>, scalar_prefetch = 0 : i64, scratch_operands = 0 : i64, tpu.core_type = #tpu.core_type<tc>, window_params = [{transform_indices = @transform_0, window_bounds = array<i64: 1, 17, 32>}, {pipeline_mode = #tpu.pipeline_mode<synchronous>, transform_indices = @transform_1, window_bounds = array<i64: 32, 96>}, {pipeline_mode = #tpu.pipeline_mode<synchronous>, transform_indices = @transform_2, window_bounds = array<i64: 1, 96>}, {pipeline_mode = #tpu.pipeline_mode<synchronous>, transform_indices = @transform_3, window_bounds = array<i64: 32, 32>}, {pipeline_mode = #tpu.pipeline_mode<synchronous>, transform_indices = @transform_4, window_bounds = array<i64: 1, 32>}, {pipeline_mode = #tpu.pipeline_mode<synchronous>, transform_indices = @transform_5, window_bounds = array<i64: 32, 128>}, {pipeline_mode = #tpu.pipeline_mode<synchronous>, transform_indices = @transform_6, window_bounds = array<i64: 1, 128>}, {pipeline_mode = #tpu.pipeline_mode<synchronous>, transform_indices = @transform_7, window_bounds = array<i64: 128, 32>}, {pipeline_mode = #tpu.pipeline_mode<synchronous>, transform_indices = @transform_8, window_bounds = array<i64: 1, 32>}, {pipeline_mode = #tpu.pipeline_mode<synchronous>, transform_indices = @transform_9, window_bounds = array<i64: 1, 32>}, {pipeline_mode = #tpu.pipeline_mode<synchronous>, transform_indices = @transform_10, window_bounds = array<i64: 1, 32>}, {pipeline_mode = #tpu.pipeline_mode<synchronous>, transform_indices = @transform_11, window_bounds = array<i64: 1, 32>}, {pipeline_mode = #tpu.pipeline_mode<synchronous>, transform_indices = @transform_12, window_bounds = array<i64: 1, 32>}, {transform_indices = @transform_13, window_bounds = array<i64: 1, 17, 32>}]} {
    %c0 = arith.constant 0 : index
    %c0_0 = arith.constant 0 : index
    %c0_1 = arith.constant 0 : index
    %0 = vector.load %arg1[%c0, %c0_0, %c0_1] : memref<1x17x32xf32, #tpu.memory_space<vmem>>, vector<1x17x32xf32>
    %1 = vector.shape_cast %0 : vector<1x17x32xf32> to vector<17x32xf32>
    %c0_2 = arith.constant 0 : index
    %c0_3 = arith.constant 0 : index
    %2 = vector.load %arg10[%c0_2, %c0_3] : memref<1x32xf32, #tpu.memory_space<vmem>>, vector<1x32xf32>
    %c0_4 = arith.constant 0 : index
    %c0_5 = arith.constant 0 : index
    %3 = vector.load %arg11[%c0_4, %c0_5] : memref<1x32xf32, #tpu.memory_space<vmem>>, vector<1x32xf32>
    %cst = arith.constant dense<0.000000e+00> : vector<17xf32>
    %4 = vector.multi_reduction <add>, %1, %cst [1] : vector<17x32xf32> to vector<17xf32>
    %5 = vector.shape_cast %4 : vector<17xf32> to vector<17x1xf32>
    %cst_6 = arith.constant 3.200000e+01 : f32
    %6 = vector.broadcast %cst_6 : f32 to vector<17x1xf32>
    %7 = arith.divf %5, %6 : vector<17x1xf32>
    %8 = vector.broadcast %7 : vector<17x1xf32> to vector<17x32xf32>
    %9 = arith.subf %1, %8 : vector<17x32xf32>
    %10 = arith.mulf %9, %9 : vector<17x32xf32>
    %cst_7 = arith.constant dense<0.000000e+00> : vector<17xf32>
    %11 = vector.multi_reduction <add>, %10, %cst_7 [1] : vector<17x32xf32> to vector<17xf32>
    %12 = vector.shape_cast %11 : vector<17xf32> to vector<17x1xf32>
    %cst_8 = arith.constant 3.200000e+01 : f32
    %13 = vector.broadcast %cst_8 : f32 to vector<17x1xf32>
    %14 = arith.divf %12, %13 : vector<17x1xf32>
    %15 = vector.broadcast %7 : vector<17x1xf32> to vector<17x32xf32>
    %16 = arith.subf %1, %15 : vector<17x32xf32>
    %cst_9 = arith.constant 9.99999974E-6 : f32
    %17 = vector.broadcast %cst_9 : f32 to vector<17x1xf32>
    %18 = arith.addf %14, %17 : vector<17x1xf32>
    %19 = math.rsqrt %18 : vector<17x1xf32>
    %20 = vector.broadcast %19 : vector<17x1xf32> to vector<17x32xf32>
    %21 = arith.mulf %16, %20 : vector<17x32xf32>
    %22 = vector.broadcast %2 : vector<1x32xf32> to vector<17x32xf32>
    %23 = arith.mulf %21, %22 : vector<17x32xf32>
    %24 = vector.broadcast %3 : vector<1x32xf32> to vector<17x32xf32>
    %25 = arith.addf %23, %24 : vector<17x32xf32>
    %c0_10 = arith.constant 0 : index
    %c0_11 = arith.constant 0 : index
    %26 = vector.load %arg2[%c0_10, %c0_11] : memref<32x96xf32, #tpu.memory_space<vmem>>, vector<32x96xf32>
    %cst_12 = arith.constant dense<0.000000e+00> : vector<17x96xf32>
    %27 = tpu.matmul %25, %26, %cst_12 {dimension_numbers = #tpu.dot_dimension_numbers<[1], [0], [0], [1], [0, 0, 1, 1], [], []>} : vector<17x32xf32>, vector<32x96xf32>, vector<17x96xf32> -> vector<17x96xf32>
    %c0_13 = arith.constant 0 : index
    %c0_14 = arith.constant 0 : index
    %28 = vector.load %arg3[%c0_13, %c0_14] : memref<1x96xf32, #tpu.memory_space<vmem>>, vector<1x96xf32>
    %29 = vector.broadcast %28 : vector<1x96xf32> to vector<17x96xf32>
    %30 = arith.addf %27, %29 : vector<17x96xf32>
    %cst_15 = arith.constant 0.000000e+00 : f32
    %31 = vector.broadcast %cst_15 : f32 to vector<17x32xf32>
    %32 = vector.extract_strided_slice %30 {offsets = [0, 0], sizes = [17, 8], strides = [1, 1]} : vector<17x96xf32> to vector<17x8xf32>
    %33 = vector.extract_strided_slice %30 {offsets = [0, 32], sizes = [17, 8], strides = [1, 1]} : vector<17x96xf32> to vector<17x8xf32>
    %34 = vector.extract_strided_slice %30 {offsets = [0, 64], sizes = [17, 8], strides = [1, 1]} : vector<17x96xf32> to vector<17x8xf32>
    %cst_16 = arith.constant dense<0.000000e+00> : vector<17x17xf32>
    %35 = tpu.matmul %32, %33, %cst_16 {dimension_numbers = #tpu.dot_dimension_numbers<[1], [1], [0], [0], [0, 0, 1, 0], [], []>} : vector<17x8xf32>, vector<17x8xf32>, vector<17x17xf32> -> vector<17x17xf32>
    %cst_17 = arith.constant 0.353553385 : f32
    %36 = vector.broadcast %cst_17 : f32 to vector<17x17xf32>
    %37 = arith.mulf %35, %36 : vector<17x17xf32>
    %cst_18 = arith.constant dense<0xFF800000> : vector<17xf32>
    %38 = vector.multi_reduction <maximumf>, %37, %cst_18 [1] : vector<17x17xf32> to vector<17xf32>
    %39 = vector.shape_cast %38 : vector<17xf32> to vector<17x1xf32>
    %40 = vector.broadcast %39 : vector<17x1xf32> to vector<17x17xf32>
    %41 = arith.subf %37, %40 : vector<17x17xf32>
    %42 = math.exp %41 : vector<17x17xf32>
    %cst_19 = arith.constant dense<0.000000e+00> : vector<17xf32>
    %43 = vector.multi_reduction <add>, %42, %cst_19 [1] : vector<17x17xf32> to vector<17xf32>
    %44 = vector.shape_cast %43 : vector<17xf32> to vector<17x1xf32>
    %45 = tpu.reciprocal %44 {approx = true} : vector<17x1xf32> -> vector<17x1xf32>
    %46 = vector.broadcast %45 : vector<17x1xf32> to vector<17x17xf32>
    %47 = arith.mulf %42, %46 : vector<17x17xf32>
    %cst_20 = arith.constant dense<0.000000e+00> : vector<17x8xf32>
    %48 = tpu.matmul %47, %34, %cst_20 {dimension_numbers = #tpu.dot_dimension_numbers<[1], [0], [0], [1], [0, 0, 1, 1], [], []>} : vector<17x17xf32>, vector<17x8xf32>, vector<17x8xf32> -> vector<17x8xf32>
    %c0_21 = arith.constant 0 : index
    %c0_22 = arith.constant 0 : index
    %49 = vector.load %arg4[%c0_21, %c0_22] : memref<32x32xf32, #tpu.memory_space<vmem>>, vector<8x32xf32>
    %cst_23 = arith.constant dense<0.000000e+00> : vector<17x32xf32>
    %50 = tpu.matmul %48, %49, %cst_23 {dimension_numbers = #tpu.dot_dimension_numbers<[1], [0], [0], [1], [0, 0, 1, 1], [], []>} : vector<17x8xf32>, vector<8x32xf32>, vector<17x32xf32> -> vector<17x32xf32>
    %51 = arith.addf %31, %50 : vector<17x32xf32>
    %52 = vector.extract_strided_slice %30 {offsets = [0, 8], sizes = [17, 8], strides = [1, 1]} : vector<17x96xf32> to vector<17x8xf32>
    %53 = vector.extract_strided_slice %30 {offsets = [0, 40], sizes = [17, 8], strides = [1, 1]} : vector<17x96xf32> to vector<17x8xf32>
    %54 = vector.extract_strided_slice %30 {offsets = [0, 72], sizes = [17, 8], strides = [1, 1]} : vector<17x96xf32> to vector<17x8xf32>
    %cst_24 = arith.constant dense<0.000000e+00> : vector<17x17xf32>
    %55 = tpu.matmul %52, %53, %cst_24 {dimension_numbers = #tpu.dot_dimension_numbers<[1], [1], [0], [0], [0, 0, 1, 0], [], []>} : vector<17x8xf32>, vector<17x8xf32>, vector<17x17xf32> -> vector<17x17xf32>
    %cst_25 = arith.constant 0.353553385 : f32
    %56 = vector.broadcast %cst_25 : f32 to vector<17x17xf32>
    %57 = arith.mulf %55, %56 : vector<17x17xf32>
    %cst_26 = arith.constant dense<0xFF800000> : vector<17xf32>
    %58 = vector.multi_reduction <maximumf>, %57, %cst_26 [1] : vector<17x17xf32> to vector<17xf32>
    %59 = vector.shape_cast %58 : vector<17xf32> to vector<17x1xf32>
    %60 = vector.broadcast %59 : vector<17x1xf32> to vector<17x17xf32>
    %61 = arith.subf %57, %60 : vector<17x17xf32>
    %62 = math.exp %61 : vector<17x17xf32>
    %cst_27 = arith.constant dense<0.000000e+00> : vector<17xf32>
    %63 = vector.multi_reduction <add>, %62, %cst_27 [1] : vector<17x17xf32> to vector<17xf32>
    %64 = vector.shape_cast %63 : vector<17xf32> to vector<17x1xf32>
    %65 = tpu.reciprocal %64 {approx = true} : vector<17x1xf32> -> vector<17x1xf32>
    %66 = vector.broadcast %65 : vector<17x1xf32> to vector<17x17xf32>
    %67 = arith.mulf %62, %66 : vector<17x17xf32>
    %cst_28 = arith.constant dense<0.000000e+00> : vector<17x8xf32>
    %68 = tpu.matmul %67, %54, %cst_28 {dimension_numbers = #tpu.dot_dimension_numbers<[1], [0], [0], [1], [0, 0, 1, 1], [], []>} : vector<17x17xf32>, vector<17x8xf32>, vector<17x8xf32> -> vector<17x8xf32>
    %c8 = arith.constant 8 : index
    %c0_29 = arith.constant 0 : index
    %69 = vector.load %arg4[%c8, %c0_29] : memref<32x32xf32, #tpu.memory_space<vmem>>, vector<8x32xf32>
    %cst_30 = arith.constant dense<0.000000e+00> : vector<17x32xf32>
    %70 = tpu.matmul %68, %69, %cst_30 {dimension_numbers = #tpu.dot_dimension_numbers<[1], [0], [0], [1], [0, 0, 1, 1], [], []>} : vector<17x8xf32>, vector<8x32xf32>, vector<17x32xf32> -> vector<17x32xf32>
    %71 = arith.addf %51, %70 : vector<17x32xf32>
    %72 = vector.extract_strided_slice %30 {offsets = [0, 16], sizes = [17, 8], strides = [1, 1]} : vector<17x96xf32> to vector<17x8xf32>
    %73 = vector.extract_strided_slice %30 {offsets = [0, 48], sizes = [17, 8], strides = [1, 1]} : vector<17x96xf32> to vector<17x8xf32>
    %74 = vector.extract_strided_slice %30 {offsets = [0, 80], sizes = [17, 8], strides = [1, 1]} : vector<17x96xf32> to vector<17x8xf32>
    %cst_31 = arith.constant dense<0.000000e+00> : vector<17x17xf32>
    %75 = tpu.matmul %72, %73, %cst_31 {dimension_numbers = #tpu.dot_dimension_numbers<[1], [1], [0], [0], [0, 0, 1, 0], [], []>} : vector<17x8xf32>, vector<17x8xf32>, vector<17x17xf32> -> vector<17x17xf32>
    %cst_32 = arith.constant 0.353553385 : f32
    %76 = vector.broadcast %cst_32 : f32 to vector<17x17xf32>
    %77 = arith.mulf %75, %76 : vector<17x17xf32>
    %cst_33 = arith.constant dense<0xFF800000> : vector<17xf32>
    %78 = vector.multi_reduction <maximumf>, %77, %cst_33 [1] : vector<17x17xf32> to vector<17xf32>
    %79 = vector.shape_cast %78 : vector<17xf32> to vector<17x1xf32>
    %80 = vector.broadcast %79 : vector<17x1xf32> to vector<17x17xf32>
    %81 = arith.subf %77, %80 : vector<17x17xf32>
    %82 = math.exp %81 : vector<17x17xf32>
    %cst_34 = arith.constant dense<0.000000e+00> : vector<17xf32>
    %83 = vector.multi_reduction <add>, %82, %cst_34 [1] : vector<17x17xf32> to vector<17xf32>
    %84 = vector.shape_cast %83 : vector<17xf32> to vector<17x1xf32>
    %85 = tpu.reciprocal %84 {approx = true} : vector<17x1xf32> -> vector<17x1xf32>
    %86 = vector.broadcast %85 : vector<17x1xf32> to vector<17x17xf32>
    %87 = arith.mulf %82, %86 : vector<17x17xf32>
    %cst_35 = arith.constant dense<0.000000e+00> : vector<17x8xf32>
    %88 = tpu.matmul %87, %74, %cst_35 {dimension_numbers = #tpu.dot_dimension_numbers<[1], [0], [0], [1], [0, 0, 1, 1], [], []>} : vector<17x17xf32>, vector<17x8xf32>, vector<17x8xf32> -> vector<17x8xf32>
    %c16 = arith.constant 16 : index
    %c0_36 = arith.constant 0 : index
    %89 = vector.load %arg4[%c16, %c0_36] : memref<32x32xf32, #tpu.memory_space<vmem>>, vector<8x32xf32>
    %cst_37 = arith.constant dense<0.000000e+00> : vector<17x32xf32>
    %90 = tpu.matmul %88, %89, %cst_37 {dimension_numbers = #tpu.dot_dimension_numbers<[1], [0], [0], [1], [0, 0, 1, 1], [], []>} : vector<17x8xf32>, vector<8x32xf32>, vector<17x32xf32> -> vector<17x32xf32>
    %91 = arith.addf %71, %90 : vector<17x32xf32>
    %92 = vector.extract_strided_slice %30 {offsets = [0, 24], sizes = [17, 8], strides = [1, 1]} : vector<17x96xf32> to vector<17x8xf32>
    %93 = vector.extract_strided_slice %30 {offsets = [0, 56], sizes = [17, 8], strides = [1, 1]} : vector<17x96xf32> to vector<17x8xf32>
    %94 = vector.extract_strided_slice %30 {offsets = [0, 88], sizes = [17, 8], strides = [1, 1]} : vector<17x96xf32> to vector<17x8xf32>
    %cst_38 = arith.constant dense<0.000000e+00> : vector<17x17xf32>
    %95 = tpu.matmul %92, %93, %cst_38 {dimension_numbers = #tpu.dot_dimension_numbers<[1], [1], [0], [0], [0, 0, 1, 0], [], []>} : vector<17x8xf32>, vector<17x8xf32>, vector<17x17xf32> -> vector<17x17xf32>
    %cst_39 = arith.constant 0.353553385 : f32
    %96 = vector.broadcast %cst_39 : f32 to vector<17x17xf32>
    %97 = arith.mulf %95, %96 : vector<17x17xf32>
    %cst_40 = arith.constant dense<0xFF800000> : vector<17xf32>
    %98 = vector.multi_reduction <maximumf>, %97, %cst_40 [1] : vector<17x17xf32> to vector<17xf32>
    %99 = vector.shape_cast %98 : vector<17xf32> to vector<17x1xf32>
    %100 = vector.broadcast %99 : vector<17x1xf32> to vector<17x17xf32>
    %101 = arith.subf %97, %100 : vector<17x17xf32>
    %102 = math.exp %101 : vector<17x17xf32>
    %cst_41 = arith.constant dense<0.000000e+00> : vector<17xf32>
    %103 = vector.multi_reduction <add>, %102, %cst_41 [1] : vector<17x17xf32> to vector<17xf32>
    %104 = vector.shape_cast %103 : vector<17xf32> to vector<17x1xf32>
    %105 = tpu.reciprocal %104 {approx = true} : vector<17x1xf32> -> vector<17x1xf32>
    %106 = vector.broadcast %105 : vector<17x1xf32> to vector<17x17xf32>
    %107 = arith.mulf %102, %106 : vector<17x17xf32>
    %cst_42 = arith.constant dense<0.000000e+00> : vector<17x8xf32>
    %108 = tpu.matmul %107, %94, %cst_42 {dimension_numbers = #tpu.dot_dimension_numbers<[1], [0], [0], [1], [0, 0, 1, 1], [], []>} : vector<17x17xf32>, vector<17x8xf32>, vector<17x8xf32> -> vector<17x8xf32>
    %c24 = arith.constant 24 : index
    %c0_43 = arith.constant 0 : index
    %109 = vector.load %arg4[%c24, %c0_43] : memref<32x32xf32, #tpu.memory_space<vmem>>, vector<8x32xf32>
    %cst_44 = arith.constant dense<0.000000e+00> : vector<17x32xf32>
    %110 = tpu.matmul %108, %109, %cst_44 {dimension_numbers = #tpu.dot_dimension_numbers<[1], [0], [0], [1], [0, 0, 1, 1], [], []>} : vector<17x8xf32>, vector<8x32xf32>, vector<17x32xf32> -> vector<17x32xf32>
    %111 = arith.addf %91, %110 : vector<17x32xf32>
    %112 = arith.addf %1, %111 : vector<17x32xf32>
    %c0_45 = arith.constant 0 : index
    %c0_46 = arith.constant 0 : index
    %113 = vector.load %arg5[%c0_45, %c0_46] : memref<1x32xf32, #tpu.memory_space<vmem>>, vector<1x32xf32>
    %114 = vector.broadcast %113 : vector<1x32xf32> to vector<17x32xf32>
    %115 = arith.addf %112, %114 : vector<17x32xf32>
    %c0_47 = arith.constant 0 : index
    %c0_48 = arith.constant 0 : index
    %116 = vector.load %arg12[%c0_47, %c0_48] : memref<1x32xf32, #tpu.memory_space<vmem>>, vector<1x32xf32>
    %c0_49 = arith.constant 0 : index
    %c0_50 = arith.constant 0 : index
    %117 = vector.load %arg13[%c0_49, %c0_50] : memref<1x32xf32, #tpu.memory_space<vmem>>, vector<1x32xf32>
    %cst_51 = arith.constant dense<0.000000e+00> : vector<17xf32>
    %118 = vector.multi_reduction <add>, %115, %cst_51 [1] : vector<17x32xf32> to vector<17xf32>
    %119 = vector.shape_cast %118 : vector<17xf32> to vector<17x1xf32>
    %cst_52 = arith.constant 3.200000e+01 : f32
    %120 = vector.broadcast %cst_52 : f32 to vector<17x1xf32>
    %121 = arith.divf %119, %120 : vector<17x1xf32>
    %122 = vector.broadcast %121 : vector<17x1xf32> to vector<17x32xf32>
    %123 = arith.subf %115, %122 : vector<17x32xf32>
    %124 = arith.mulf %123, %123 : vector<17x32xf32>
    %cst_53 = arith.constant dense<0.000000e+00> : vector<17xf32>
    %125 = vector.multi_reduction <add>, %124, %cst_53 [1] : vector<17x32xf32> to vector<17xf32>
    %126 = vector.shape_cast %125 : vector<17xf32> to vector<17x1xf32>
    %cst_54 = arith.constant 3.200000e+01 : f32
    %127 = vector.broadcast %cst_54 : f32 to vector<17x1xf32>
    %128 = arith.divf %126, %127 : vector<17x1xf32>
    %129 = vector.broadcast %121 : vector<17x1xf32> to vector<17x32xf32>
    %130 = arith.subf %115, %129 : vector<17x32xf32>
    %cst_55 = arith.constant 9.99999974E-6 : f32
    %131 = vector.broadcast %cst_55 : f32 to vector<17x1xf32>
    %132 = arith.addf %128, %131 : vector<17x1xf32>
    %133 = math.rsqrt %132 : vector<17x1xf32>
    %134 = vector.broadcast %133 : vector<17x1xf32> to vector<17x32xf32>
    %135 = arith.mulf %130, %134 : vector<17x32xf32>
    %136 = vector.broadcast %116 : vector<1x32xf32> to vector<17x32xf32>
    %137 = arith.mulf %135, %136 : vector<17x32xf32>
    %138 = vector.broadcast %117 : vector<1x32xf32> to vector<17x32xf32>
    %139 = arith.addf %137, %138 : vector<17x32xf32>
    %c0_56 = arith.constant 0 : index
    %c0_57 = arith.constant 0 : index
    %140 = vector.load %arg6[%c0_56, %c0_57] : memref<32x128xf32, #tpu.memory_space<vmem>>, vector<32x128xf32>
    %cst_58 = arith.constant dense<0.000000e+00> : vector<17x128xf32>
    %141 = tpu.matmul %139, %140, %cst_58 {dimension_numbers = #tpu.dot_dimension_numbers<[1], [0], [0], [1], [0, 0, 1, 1], [], []>} : vector<17x32xf32>, vector<32x128xf32>, vector<17x128xf32> -> vector<17x128xf32>
    %c0_59 = arith.constant 0 : index
    %c0_60 = arith.constant 0 : index
    %142 = vector.load %arg7[%c0_59, %c0_60] : memref<1x128xf32, #tpu.memory_space<vmem>>, vector<1x128xf32>
    %143 = vector.broadcast %142 : vector<1x128xf32> to vector<17x128xf32>
    %144 = arith.addf %141, %143 : vector<17x128xf32>
    %cst_61 = arith.constant 5.000000e-01 : f32
    %145 = vector.broadcast %cst_61 : f32 to vector<17x128xf32>
    %146 = arith.mulf %145, %144 : vector<17x128xf32>
    %cst_62 = arith.constant 0.707106769 : f32
    %147 = vector.broadcast %cst_62 : f32 to vector<17x128xf32>
    %148 = arith.mulf %144, %147 : vector<17x128xf32>
    %149 = math.erf %148 : vector<17x128xf32>
    %cst_63 = arith.constant 1.000000e+00 : f32
    %150 = vector.broadcast %cst_63 : f32 to vector<17x128xf32>
    %151 = arith.addf %150, %149 : vector<17x128xf32>
    %152 = arith.mulf %146, %151 : vector<17x128xf32>
    %c0_64 = arith.constant 0 : index
    %c0_65 = arith.constant 0 : index
    %153 = vector.load %arg8[%c0_64, %c0_65] : memref<128x32xf32, #tpu.memory_space<vmem>>, vector<128x32xf32>
    %cst_66 = arith.constant dense<0.000000e+00> : vector<17x32xf32>
    %154 = tpu.matmul %152, %153, %cst_66 {dimension_numbers = #tpu.dot_dimension_numbers<[1], [0], [0], [1], [0, 0, 1, 1], [], []>} : vector<17x128xf32>, vector<128x32xf32>, vector<17x32xf32> -> vector<17x32xf32>
    %155 = arith.addf %115, %154 : vector<17x32xf32>
    %c0_67 = arith.constant 0 : index
    %c0_68 = arith.constant 0 : index
    %156 = vector.load %arg9[%c0_67, %c0_68] : memref<1x32xf32, #tpu.memory_space<vmem>>, vector<1x32xf32>
    %157 = vector.broadcast %156 : vector<1x32xf32> to vector<17x32xf32>
    %158 = arith.addf %155, %157 : vector<17x32xf32>
    %c0_69 = arith.constant 0 : index
    %c0_70 = arith.constant 0 : index
    %c0_71 = arith.constant 0 : index
    %159 = vector.load %arg14[%c0_69, %c0_70, %c0_71] : memref<1x17x32xf32, #tpu.memory_space<vmem>>, vector<1x17x32xf32>
    %160 = vector.shape_cast %159 : vector<1x17x32xf32> to vector<17x32xf32>
    %161 = vector.shape_cast %158 : vector<17x32xf32> to vector<1x17x32xf32>
    tpu.vector_store %arg14[%c0_69, %c0_70, %c0_71], %161 {strides = array<i32>} : memref<1x17x32xf32, #tpu.memory_space<vmem>>, vector<1x17x32xf32>,
    return
  }
  func.func @transform_0(%arg0: i32) -> (i32, i32, i32) {
    %c0_i32 = arith.constant 0 : i32
    %c0_i32_0 = arith.constant 0 : i32
    %c0_i32_1 = arith.constant 0 : i32
    return %arg0, %c0_i32, %c0_i32_0 : i32, i32, i32
  }
  func.func @transform_1(%arg0: i32) -> (i32, i32) {
    %c0_i32 = arith.constant 0 : i32
    %c0_i32_0 = arith.constant 0 : i32
    %c0_i32_1 = arith.constant 0 : i32
    return %c0_i32, %c0_i32_0 : i32, i32
  }
  func.func @transform_2(%arg0: i32) -> (i32, i32) {
    %c0_i32 = arith.constant 0 : i32
    %c0_i32_0 = arith.constant 0 : i32
    %c0_i32_1 = arith.constant 0 : i32
    return %c0_i32, %c0_i32_0 : i32, i32
  }
  func.func @transform_3(%arg0: i32) -> (i32, i32) {
    %c0_i32 = arith.constant 0 : i32
    %c0_i32_0 = arith.constant 0 : i32
    %c0_i32_1 = arith.constant 0 : i32
    return %c0_i32, %c0_i32_0 : i32, i32
  }
  func.func @transform_4(%arg0: i32) -> (i32, i32) {
    %c0_i32 = arith.constant 0 : i32
    %c0_i32_0 = arith.constant 0 : i32
    %c0_i32_1 = arith.constant 0 : i32
    return %c0_i32, %c0_i32_0 : i32, i32
  }
  func.func @transform_5(%arg0: i32) -> (i32, i32) {
    %c0_i32 = arith.constant 0 : i32
    %c0_i32_0 = arith.constant 0 : i32
    %c0_i32_1 = arith.constant 0 : i32
    return %c0_i32, %c0_i32_0 : i32, i32
  }
  func.func @transform_6(%arg0: i32) -> (i32, i32) {
    %c0_i32 = arith.constant 0 : i32
    %c0_i32_0 = arith.constant 0 : i32
    %c0_i32_1 = arith.constant 0 : i32
    return %c0_i32, %c0_i32_0 : i32, i32
  }
  func.func @transform_7(%arg0: i32) -> (i32, i32) {
    %c0_i32 = arith.constant 0 : i32
    %c0_i32_0 = arith.constant 0 : i32
    %c0_i32_1 = arith.constant 0 : i32
    return %c0_i32, %c0_i32_0 : i32, i32
  }
  func.func @transform_8(%arg0: i32) -> (i32, i32) {
    %c0_i32 = arith.constant 0 : i32
    %c0_i32_0 = arith.constant 0 : i32
    %c0_i32_1 = arith.constant 0 : i32
    return %c0_i32, %c0_i32_0 : i32, i32
  }
  func.func @transform_9(%arg0: i32) -> (i32, i32) {
    %c0_i32 = arith.constant 0 : i32
    %c0_i32_0 = arith.constant 0 : i32
    %c0_i32_1 = arith.constant 0 : i32
    return %c0_i32, %c0_i32_0 : i32, i32
  }
  func.func @transform_10(%arg0: i32) -> (i32, i32) {
    %c0_i32 = arith.constant 0 : i32
    %c0_i32_0 = arith.constant 0 : i32
    %c0_i32_1 = arith.constant 0 : i32
    return %c0_i32, %c0_i32_0 : i32, i32
  }
  func.func @transform_11(%arg0: i32) -> (i32, i32) {
    %c0_i32 = arith.constant 0 : i32
    %c0_i32_0 = arith.constant 0 : i32
    %c0_i32_1 = arith.constant 0 : i32
    return %c0_i32, %c0_i32_0 : i32, i32
  }
  func.func @transform_12(%arg0: i32) -> (i32, i32) {
    %c0_i32 = arith.constant 0 : i32
    %c0_i32_0 = arith.constant 0 : i32
    %c0_i32_1 = arith.constant 0 : i32
    return %c0_i32, %c0_i32_0 : i32, i32
  }
  func.func @transform_13(%arg0: i32) -> (i32, i32, i32) {
    %c0_i32 = arith.constant 0 : i32
    %c0_i32_0 = arith.constant 0 : i32
    %c0_i32_1 = arith.constant 0 : i32
    return %arg0, %c0_i32, %c0_i32_0 : i32, i32, i32
  }
}

</mosaic_0001>

<llo_original>
// kernel: mae_decoder_forward.5
$region0: #{mae_decoder_forward.5}
  #allocation0 [shape = 'u32[]', space=smem, size = 0x4, offset = 0x4, fixed_abs, tag = 'smem constant byte address 0x4 - core index']
  #allocation1 [shape = 'u32[144,128]{1,0:T(1,128)}', space=vmem, size = 0x12000, scoped, tag = 'internal scratch']
  %s0 = inlined_call_operand.vmem [shape: f32[32,32], index: 0, kind: input, shape index: {}]
  %s1 = inlined_call_operand.vmem [shape: f32[1,32], index: 1, kind: input, shape index: {}]
  %s2 = inlined_call_operand.vmem [shape: f32[1,32], index: 2, kind: input, shape index: {}]
  %s3 = inlined_call_operand.vmem [shape: f32[32,8], index: 3, kind: input, shape index: {}]
  %s4 = inlined_call_operand.vmem [shape: f32[1,8], index: 4, kind: input, shape index: {}]
  %s5 = inlined_call_operand.vmem [shape: f32[32,8], index: 5, kind: output, shape index: {}]
  %s6 = sld [smem:[#allocation0]]
  $region30: #{mae_decoder_forward.5} parent=0
    _
  %s8 = ssub.s32 1, %s6
  %s9 = scalar_select 0, %s8, %s6
  // Predicated region
  $region2: #{mae_decoder_forward.5} parent=0 // pred_check
    _
  $region3: #{mae_decoder_forward.5} parent=0 // pred_check_branch
    %11 = sbr.rel (0) target = $region5
  $region4: #{mae_decoder_forward.5} parent=0 // pred_region
    _
  $region5: #{mae_decoder_forward.5} parent=0 // pred_fallthru
    _
  // Predicated region
  $region6: #{mae_decoder_forward.5} parent=0 // pred_check
    _
  $region7: #{mae_decoder_forward.5} parent=0 // pred_check_branch
    %13 = sbr.rel (0) target = $region9
  $region8: #{mae_decoder_forward.5} parent=0 // pred_region
    _
  $region9: #{mae_decoder_forward.5} parent=0 // pred_fallthru
    _
  // Predicated region
  $region10: #{mae_decoder_forward.5} parent=0 // pred_check
    _
  $region11: #{mae_decoder_forward.5} parent=0 // pred_check_branch
    %15 = sbr.rel (0) target = $region13
  $region12: #{mae_decoder_forward.5} parent=0 // pred_region
    _
  $region13: #{mae_decoder_forward.5} parent=0 // pred_fallthru
    _
  // Predicated region
  $region14: #{mae_decoder_forward.5} parent=0 // pred_check
    _
  $region15: #{mae_decoder_forward.5} parent=0 // pred_check_branch
    %17 = sbr.rel (0) target = $region17
  $region16: #{mae_decoder_forward.5} parent=0 // pred_region
    _
  $region17: #{mae_decoder_forward.5} parent=0 // pred_fallthru
    _
  // Predicated region
  $region18: #{mae_decoder_forward.5} parent=0 // pred_check
    _
  $region19: #{mae_decoder_forward.5} parent=0 // pred_check_branch
    %19 = sbr.rel (0) target = $region21
  $region20: #{mae_decoder_forward.5} parent=0 // pred_region
    _
  $region21: #{mae_decoder_forward.5} parent=0 // pred_fallthru
    _
  %v20 = vld [vmem:[%s0] sm:$0xff]
  %v21 = vld [vmem:[%s0 + $0x8] sm:$0xff]
  %v22 = vld [vmem:[%s0 + $0x10] sm:$0xff]
  %v23 = vld [vmem:[%s0 + $0x18] sm:$0xff]
  %vm24 = vcmask 261120
  %v25 = vsel %vm24, %v20, 0.0
  %26 = vadd.xlane.f32.xlu0 %v25
  %v27 = vpop.xlane.xlu0 %26
  %v28 = vsel %vm24, %v21, 0.0
  %29 = vadd.xlane.f32.xlu0 %v28
  %v30 = vpop.xlane.xlu0 %29
  %v31 = vsel %vm24, %v22, 0.0
  %32 = vadd.xlane.f32.xlu0 %v31
  %v33 = vpop.xlane.xlu0 %32
  %v34 = vsel %vm24, %v23, 0.0
  %35 = vadd.xlane.f32.xlu0 %v34
  %v36 = vpop.xlane.xlu0 %35
  %v37 = vrcp.pop 32.0
  %v38 = vmul.f32 %v27, %v37
  %v39 = vmul.f32 %v30, %v37
  %v40 = vmul.f32 %v33, %v37
  %v41 = vmul.f32 %v36, %v37
  %v42 = vsub.f32 %v20, %v38
  %v43 = vsub.f32 %v21, %v39
  %v44 = vsub.f32 %v22, %v40
  %v45 = vsub.f32 %v23, %v41
  %v46 = vmul.f32 %v42, %v42
  %v47 = vmul.f32 %v43, %v43
  %v48 = vmul.f32 %v44, %v44
  %v49 = vmul.f32 %v45, %v45
  %v50 = vsel %vm24, %v46, 0.0
  %51 = vadd.xlane.f32.xlu0 %v50
  %v52 = vpop.xlane.xlu0 %51
  %v53 = vsel %vm24, %v47, 0.0
  %54 = vadd.xlane.f32.xlu0 %v53
  %v55 = vpop.xlane.xlu0 %54
  %v56 = vsel %vm24, %v48, 0.0
  %57 = vadd.xlane.f32.xlu0 %v56
  %v58 = vpop.xlane.xlu0 %57
  %v59 = vsel %vm24, %v49, 0.0
  %60 = vadd.xlane.f32.xlu0 %v59
  %v61 = vpop.xlane.xlu0 %60
  %v62 = vmul.f32 %v52, %v37
  %v63 = vmul.f32 %v55, %v37
  %v64 = vmul.f32 %v58, %v37
  %v65 = vmul.f32 %v61, %v37
  %v66 = vadd.f32 %v62, 1e-05
  %v67 = vadd.f32 %v63, 1e-05
  %v68 = vadd.f32 %v64, 1e-05
  %v69 = vadd.f32 %v65, 1e-05
  %v70 = vrsqrt.pop %v66
  %v71 = vrsqrt.pop %v67
  %v72 = vrsqrt.pop %v68
  %v73 = vrsqrt.pop %v69
  %v74 = vmul.f32 %v42, %v70
  %v75 = vmul.f32 %v43, %v71
  %v76 = vmul.f32 %v44, %v72
  %v77 = vmul.f32 %v45, %v73
  %v78 = vld [vmem:[%s1] sm:$0x1]
  %v80 = vlaneseq
  %v81 = vshrl.u32 %v80, 7
  %v82 = vsub.s32 0, %v81
  %v83 = vrot.slane %v78, %v82
  %v85 = vmul.f32 %v74, %v83
  %v86 = vmul.f32 %v75, %v83
  %v87 = vmul.f32 %v76, %v83
  %v88 = vmul.f32 %v77, %v83
  %v89 = vld [vmem:[%s2] sm:$0x1]
  %v91 = vlaneseq
  %v92 = vshrl.u32 %v91, 7
  %v93 = vsub.s32 0, %v92
  %v94 = vrot.slane %v89, %v93
  %v96 = vadd.f32 %v85, %v94
  %v97 = vadd.f32 %v86, %v94
  %v98 = vadd.f32 %v87, %v94
  %v99 = vadd.f32 %v88, %v94
  %v100 = vld [vmem:[%s3] sm:$0xff]
  %v101 = vld [vmem:[%s3 + $0x8] sm:$0xff]
  %v102 = vld [vmem:[%s3 + $0x10] sm:$0xff]
  %v103 = vld [vmem:[%s3 + $0x18] sm:$0xff]
  %v104 = vld [vmem:[%s4] sm:$0x1]
  %v106 = vlaneseq
  %v107 = vshrl.u32 %v106, 7
  %v108 = vsub.s32 0, %v107
  %v109 = vrot.slane %v104, %v108
  %v112 = vsel %vm24, %v96, 0
  %v115 = vsel %vm24, %v97, 0
  %v118 = vsel %vm24, %v98, 0
  %v121 = vsel %vm24, %v99, 0
  %123 = vmatprep.subr.mxu0 0.0
  %124 = vmatpush1.msra.mxu0 %v100
  %125 = vmatprep.subr.mxu0 0.0
  %126 = vmatpush1.msra.mxu0 %v101
  %127 = vmatprep.subr.mxu0 0.0
  %128 = vmatpush1.msra.mxu0 %v102
  %129 = vmatprep.subr.mxu0 0.0
  %130 = vmatpush1.msra.mxu0 %v103
  %131 = vmatprep.subr.mxu0 0.0
  %132 = vmatpush1.msra.mxu0 0.0
  %133 = vmatprep.subr.mxu0 0.0
  %134 = vmatpush1.msra.mxu0 0.0
  %135 = vmatprep.subr.mxu0 0.0
  %136 = vmatpush1.msra.mxu0 0.0
  %137 = vmatprep.subr.mxu0 0.0
  %138 = vmatpush1.msra.mxu0 0.0
  %139 = vmatprep.subr.mxu0 0.0
  %140 = vmatpush1.msra.mxu0 0.0
  %141 = vmatprep.subr.mxu0 0.0
  %142 = vmatpush1.msra.mxu0 0.0
  %143 = vmatprep.subr.mxu0 0.0
  %144 = vmatpush1.msra.mxu0 0.0
  %145 = vmatprep.subr.mxu0 0.0
  %146 = vmatpush1.msra.mxu0 0.0
  %147 = vmatprep.subr.mxu0 0.0
  %148 = vmatpush1.msra.mxu0 0.0
  %149 = vmatprep.subr.mxu0 0.0
  %150 = vmatpush1.msra.mxu0 0.0
  %151 = vmatprep.subr.mxu0 0.0
  %152 = vmatpush1.msra.mxu0 0.0
  %153 = vmatprep.subr.mxu0 0.0
  %154 = vmatpush1.msra.mxu0 0.0
  %155 = vmatprep.subr.mxu0 0.0
  %156 = vmatpush1.msra.mxu0 0.0
  %157 = vmatprep.subr.mxu0 0.0
  %158 = vmatpush1.msra.mxu0 0.0
  %159 = vmatprep.subr.mxu0 0.0
  %160 = vmatpush1.msra.mxu0 0.0
  %161 = vmatprep.subr.mxu0 0.0
  %162 = vmatpush1.msra.mxu0 0.0
  %163 = vmatprep.subr.mxu0 0.0
  %164 = vmatpush1.msra.mxu0 0.0
  %165 = vmatprep.subr.mxu0 0.0
  %166 = vmatpush1.msra.mxu0 0.0
  %167 = vmatprep.subr.mxu0 0.0
  %168 = vmatpush1.msra.mxu0 0.0
  %169 = vmatprep.subr.mxu0 0.0
  %170 = vmatpush1.msra.mxu0 0.0
  %171 = vmatprep.subr.mxu0 0.0
  %172 = vmatpush1.msra.mxu0 0.0
  %173 = vmatprep.subr.mxu0 0.0
  %174 = vmatpush1.msra.mxu0 0.0
  %175 = vmatprep.subr.mxu0 0.0
  %176 = vmatpush1.msra.mxu0 0.0
  %177 = vmatprep.subr.mxu0 0.0
  %178 = vmatpush1.msra.mxu0 0.0
  %179 = vmatprep.subr.mxu0 0.0
  %180 = vmatpush1.msra.mxu0 0.0
  %181 = vmatprep.subr.mxu0 0.0
  %182 = vmatpush1.msra.mxu0 0.0
  %183 = vmatprep.subr.mxu0 0.0
  %184 = vmatpush1.msra.mxu0 0.0
  %185 = vmatprep.subr.mxu0 0.0
  %186 = vmatpush1.msra.mxu0 0.0
  %187 = vmatprep.mubr.f32.mxu0 0.0
  %188 = vmatmul.mubr.f32.gmra.mrb[0].mxu0 %v112
  %v189 = vpop.f32.mrb[0].mxu0
  %v190 = vadd.f32 %v109, %v189
  %v191 = vpop.f32.mrb[0].mxu0
  %192 = vmatprep.mubr.f32.mxu0 0.0
  %193 = vmatmul.mubr.f32.gmra.mrb[0].mxu0 %v115
  %v194 = vpop.f32.mrb[0].mxu0
  %v195 = vadd.f32 %v109, %v194
  %v196 = vpop.f32.mrb[0].mxu0
  %197 = vmatprep.mubr.f32.mxu0 0.0
  %198 = vmatmul.mubr.f32.gmra.mrb[0].mxu0 %v118
  %v199 = vpop.f32.mrb[0].mxu0
  %v200 = vadd.f32 %v109, %v199
  %v201 = vpop.f32.mrb[0].mxu0
  %202 = vmatprep.mubr.f32.mxu0 0.0
  %203 = vmatmul.mubr.f32.gmra.mrb[0].mxu0 %v121
  %v204 = vpop.f32.mrb[0].mxu0
  %v205 = vadd.f32 %v109, %v204
  %v206 = vpop.f32.mrb[0].mxu0
  %207 = vdwg.mxu0
  %vm208 = vcmask 64512
  %209 = vst.msk [vmem:[%s5] sm:$0xff] %vm208, %v190
  %210 = vst.msk [vmem:[%s5 + $0x8] sm:$0xff] %vm208, %v195
  %211 = vst.msk [vmem:[%s5 + $0x10] sm:$0xff] %vm208, %v200
  %212 = vst.msk [vmem:[%s5 + $0x18] sm:$0xff] %vm208, %v205
  // Predicated region
  $region22: #{mae_decoder_forward.5} parent=0 // pred_check
    _
  $region23: #{mae_decoder_forward.5} parent=0 // pred_check_branch
    %214 = sbr.rel (0) target = $region25
  $region24: #{mae_decoder_forward.5} parent=0 // pred_region
    _
  $region25: #{mae_decoder_forward.5} parent=0 // pred_fallthru
    _
  // Predicated region
  $region26: #{mae_decoder_forward.5} parent=0 // pred_check
    _
  $region27: #{mae_decoder_forward.5} parent=0 // pred_check_branch
    %216 = sbr.rel (0) target = $region29
  $region28: #{mae_decoder_forward.5} parent=0 // pred_region
    _
  $region29: #{mae_decoder_forward.5} parent=0 // pred_fallthru
    _

// kernel: mae_decoder_forward.3
$region0: #{mae_decoder_forward.3}
  #allocation0 [shape = 'u32[]', space=smem, size = 0x4, offset = 0x4, fixed_abs, tag = 'smem constant byte address 0x4 - core index']
  #allocation1 [shape = 'u32[144,128]{1,0:T(1,128)}', space=vmem, size = 0x12000, scoped, tag = 'internal scratch']
  %s0 = inlined_call_operand.vmem [shape: f32[16,16], index: 0, kind: input, shape index: {}]
  %s1 = inlined_call_operand.vmem [shape: f32[16,32], index: 1, kind: input, shape index: {}]
  %s2 = inlined_call_operand.vmem [shape: f32[1,32], index: 2, kind: input, shape index: {}]
  %s3 = inlined_call_operand.vmem [shape: f32[16,32], index: 3, kind: output, shape index: {}]
  %s4 = sld [smem:[#allocation0]]
  $region22: #{mae_decoder_forward.3} parent=0
    _
  %s6 = ssub.s32 1, %s4
  %s7 = scalar_select 0, %s6, %s4
  // Predicated region
  $region2: #{mae_decoder_forward.3} parent=0 // pred_check
    _
  $region3: #{mae_decoder_forward.3} parent=0 // pred_check_branch
    %9 = sbr.rel (0) target = $region5
  $region4: #{mae_decoder_forward.3} parent=0 // pred_region
    _
  $region5: #{mae_decoder_forward.3} parent=0 // pred_fallthru
    _
  // Predicated region
  $region6: #{mae_decoder_forward.3} parent=0 // pred_check
    _
  $region7: #{mae_decoder_forward.3} parent=0 // pred_check_branch
    %11 = sbr.rel (0) target = $region9
  $region8: #{mae_decoder_forward.3} parent=0 // pred_region
    _
  $region9: #{mae_decoder_forward.3} parent=0 // pred_fallthru
    _
  // Predicated region
  $region10: #{mae_decoder_forward.3} parent=0 // pred_check
    _
  $region11: #{mae_decoder_forward.3} parent=0 // pred_check_branch
    %13 = sbr.rel (0) target = $region13
  $region12: #{mae_decoder_forward.3} parent=0 // pred_region
    _
  $region13: #{mae_decoder_forward.3} parent=0 // pred_fallthru
    _
  %v14 = vld [vmem:[%s0] sm:$0xff]
  %v15 = vld [vmem:[%s0 + $0x8] sm:$0xff]
  %v16 = vld [vmem:[%s1] sm:$0xff]
  %v17 = vld [vmem:[%s1 + $0x8] sm:$0xff]
  %v18 = vld [vmem:[%s2] sm:$0x1]
  %v20 = vlaneseq
  %v21 = vshrl.u32 %v20, 7
  %v22 = vsub.s32 0, %v21
  %v23 = vrot.slane %v18, %v22
  %vm25 = vcmask 130048
  %v27 = vsel %vm25, %v14, 0
  %v30 = vsel %vm25, %v15, 0
  %32 = vmatprep.subr.mxu0 0.0
  %33 = vmatpush1.msra.mxu0 %v16
  %34 = vmatprep.subr.mxu0 0.0
  %35 = vmatpush1.msra.mxu0 %v17
  %36 = vmatprep.subr.mxu0 0.0
  %37 = vmatpush1.msra.mxu0 0.0
  %38 = vmatprep.subr.mxu0 0.0
  %39 = vmatpush1.msra.mxu0 0.0
  %40 = vmatprep.subr.mxu0 0.0
  %41 = vmatpush1.msra.mxu0 0.0
  %42 = vmatprep.subr.mxu0 0.0
  %43 = vmatpush1.msra.mxu0 0.0
  %44 = vmatprep.subr.mxu0 0.0
  %45 = vmatpush1.msra.mxu0 0.0
  %46 = vmatprep.subr.mxu0 0.0
  %47 = vmatpush1.msra.mxu0 0.0
  %48 = vmatprep.subr.mxu0 0.0
  %49 = vmatpush1.msra.mxu0 0.0
  %50 = vmatprep.subr.mxu0 0.0
  %51 = vmatpush1.msra.mxu0 0.0
  %52 = vmatprep.subr.mxu0 0.0
  %53 = vmatpush1.msra.mxu0 0.0
  %54 = vmatprep.subr.mxu0 0.0
  %55 = vmatpush1.msra.mxu0 0.0
  %56 = vmatprep.subr.mxu0 0.0
  %57 = vmatpush1.msra.mxu0 0.0
  %58 = vmatprep.subr.mxu0 0.0
  %59 = vmatpush1.msra.mxu0 0.0
  %60 = vmatprep.subr.mxu0 0.0
  %61 = vmatpush1.msra.mxu0 0.0
  %62 = vmatprep.subr.mxu0 0.0
  %63 = vmatpush1.msra.mxu0 0.0
  %64 = vmatprep.subr.mxu0 0.0
  %65 = vmatpush1.msra.mxu0 0.0
  %66 = vmatprep.subr.mxu0 0.0
  %67 = vmatpush1.msra.mxu0 0.0
  %68 = vmatprep.subr.mxu0 0.0
  %69 = vmatpush1.msra.mxu0 0.0
  %70 = vmatprep.subr.mxu0 0.0
  %71 = vmatpush1.msra.mxu0 0.0
  %72 = vmatprep.subr.mxu0 0.0
  %73 = vmatpush1.msra.mxu0 0.0
  %74 = vmatprep.subr.mxu0 0.0
  %75 = vmatpush1.msra.mxu0 0.0
  %76 = vmatprep.subr.mxu0 0.0
  %77 = vmatpush1.msra.mxu0 0.0
  %78 = vmatprep.subr.mxu0 0.0
  %79 = vmatpush1.msra.mxu0 0.0
  %80 = vmatprep.subr.mxu0 0.0
  %81 = vmatpush1.msra.mxu0 0.0
  %82 = vmatprep.subr.mxu0 0.0
  %83 = vmatpush1.msra.mxu0 0.0
  %84 = vmatprep.subr.mxu0 0.0
  %85 = vmatpush1.msra.mxu0 0.0
  %86 = vmatprep.subr.mxu0 0.0
  %87 = vmatpush1.msra.mxu0 0.0
  %88 = vmatprep.subr.mxu0 0.0
  %89 = vmatpush1.msra.mxu0 0.0
  %90 = vmatprep.subr.mxu0 0.0
  %91 = vmatpush1.msra.mxu0 0.0
  %92 = vmatprep.subr.mxu0 0.0
  %93 = vmatpush1.msra.mxu0 0.0
  %94 = vmatprep.subr.mxu0 0.0
  %95 = vmatpush1.msra.mxu0 0.0
  %96 = vmatprep.mubr.f32.mxu0 0.0
  %97 = vmatmul.mubr.f32.gmra.mrb[0].mxu0 %v27
  %v98 = vpop.f32.mrb[0].mxu0
  %v99 = vadd.f32 %v23, %v98
  %v100 = vpop.f32.mrb[0].mxu0
  %101 = vmatprep.mubr.f32.mxu0 0.0
  %102 = vmatmul.mubr.f32.gmra.mrb[0].mxu0 %v30
  %v103 = vpop.f32.mrb[0].mxu0
  %v104 = vadd.f32 %v23, %v103
  %v105 = vpop.f32.mrb[0].mxu0
  %106 = vdwg.mxu0
  %vm107 = vcmask 261120
  %108 = vst.msk [vmem:[%s3] sm:$0xff] %vm107, %v99
  %109 = vst.msk [vmem:[%s3 + $0x8] sm:$0xff] %vm107, %v104
  // Predicated region
  $region14: #{mae_decoder_forward.3} parent=0 // pred_check
    _
  $region15: #{mae_decoder_forward.3} parent=0 // pred_check_branch
    %111 = sbr.rel (0) target = $region17
  $region16: #{mae_decoder_forward.3} parent=0 // pred_region
    _
  $region17: #{mae_decoder_forward.3} parent=0 // pred_fallthru
    _
  // Predicated region
  $region18: #{mae_decoder_forward.3} parent=0 // pred_check
    _
  $region19: #{mae_decoder_forward.3} parent=0 // pred_check_branch
    %113 = sbr.rel (0) target = $region21
  $region20: #{mae_decoder_forward.3} parent=0 // pred_region
    _
  $region21: #{mae_decoder_forward.3} parent=0 // pred_fallthru
    _

// kernel: mae_decoder_forward.4
$region0: #{mae_decoder_forward.4}
  #allocation0 [shape = 'u32[]', space=smem, size = 0x4, offset = 0x4, fixed_abs, tag = 'smem constant byte address 0x4 - core index']
  #allocation1 [shape = 'u32[144,128]{1,0:T(1,128)}', space=vmem, size = 0x12000, scoped, tag = 'internal scratch']
  %s0 = inlined_call_operand.vmem [shape: f32[2,17,32], index: 0, kind: input, shape index: {}]
  %s1 = inlined_call_operand.vmem [shape: f32[32,96], index: 1, kind: input, shape index: {}]
  %s2 = inlined_call_operand.vmem [shape: f32[1,96], index: 2, kind: input, shape index: {}]
  %s3 = inlined_call_operand.vmem [shape: f32[32,32], index: 3, kind: input, shape index: {}]
  %s4 = inlined_call_operand.vmem [shape: f32[1,32], index: 4, kind: input, shape index: {}]
  %s5 = inlined_call_operand.vmem [shape: f32[32,128], index: 5, kind: input, shape index: {}]
  %s6 = inlined_call_operand.vmem [shape: f32[1,128], index: 6, kind: input, shape index: {}]
  %s7 = inlined_call_operand.vmem [shape: f32[128,32], index: 7, kind: input, shape index: {}]
  %s8 = inlined_call_operand.vmem [shape: f32[1,32], index: 8, kind: input, shape index: {}]
  %s9 = inlined_call_operand.vmem [shape: f32[1,32], index: 9, kind: input, shape index: {}]
  %s10 = inlined_call_operand.vmem [shape: f32[1,32], index: 10, kind: input, shape index: {}]
  %s11 = inlined_call_operand.vmem [shape: f32[1,32], index: 11, kind: input, shape index: {}]
  %s12 = inlined_call_operand.vmem [shape: f32[1,32], index: 12, kind: input, shape index: {}]
  %s13 = inlined_call_operand.vmem [shape: f32[2,17,32], index: 13, kind: output, shape index: {}]
  %s14 = sld [smem:[#allocation0]]
  $region85: #{mae_decoder_forward.4} parent=0
    _
  %s16 = ssub.s32 1, %s14
  %s17 = scalar_select 0, %s16, %s14
  loop: start=0, step=1, limit=4
  $region2: #{mae_decoder_forward.4} parent=0 // loop_pre_header
    _
  $region3: #{mae_decoder_forward.4} parent=0 // loop_header
    %s19 = sphi 0, %s23
    %p20 = scmp.ge.s32.totalorder %s19, 4
    %s29 = sphi 0, %s31
    %s32 = sphi 0, %s29
    %s33 = sphi 0, %s32
    %s49 = sphi 0, %s33
    %s53 = sphi 0, %s53
    %s55 = sphi 0, %s53
    %s56 = sphi 0, %s55
    %s70 = sphi 0, %s56
    %s74 = sphi 0, %s74
    %s76 = sphi 0, %s74
    %s77 = sphi 0, %s76
    %s91 = sphi 0, %s77
    %s95 = sphi 0, %s95
    %s97 = sphi 0, %s95
    %s98 = sphi 0, %s97
    %s112 = sphi 0, %s98
    %s116 = sphi 0, %s116
    %s118 = sphi 0, %s116
    %s119 = sphi 0, %s118
    %s133 = sphi 0, %s119
    %s137 = sphi 0, %s137
    %s139 = sphi 0, %s137
    %s140 = sphi 0, %s139
    %s154 = sphi 0, %s140
    %s158 = sphi 0, %s158
    %s160 = sphi 0, %s158
    %s161 = sphi 0, %s160
    %s175 = sphi 0, %s161
    %s179 = sphi 0, %s179
    %s181 = sphi 0, %s179
    %s182 = sphi 0, %s181
    %s196 = sphi 0, %s182
    %s200 = sphi 0, %s200
    %s202 = sphi 0, %s200
    %s203 = sphi 0, %s202
    %s217 = sphi 0, %s203
    %s221 = sphi 0, %s221
    %s223 = sphi 0, %s221
    %s224 = sphi 0, %s223
    %s238 = sphi 0, %s224
    %s242 = sphi 0, %s242
    %s244 = sphi 0, %s242
    %s245 = sphi 0, %s244
    %s259 = sphi 0, %s245
    %s263 = sphi 0, %s263
    %s265 = sphi 0, %s263
    %s266 = sphi 0, %s265
    %s280 = sphi 0, %s266
    %s284 = sphi 0, %s284
    %s286 = sphi 0, %s284
    %s287 = sphi 0, %s286
    %s301 = sphi 0, %s287
    %s307 = sphi 0, %s309
    %s310 = sphi 0, %s307
    %s311 = sphi 0, %s310
    %s327 = sphi 0, %s311
  $region4: #{mae_decoder_forward.4} parent=0 // loop_header_branch
    %22 = sbr.rel (%p20) target = $region8
  $region5: #{mae_decoder_forward.4} parent=0 // loop_body
    %s24 = ssub.s32 %s19, 1
    %s25 = ssub.s32 %s19, 2
    %s26 = sadd.s32 %s19, 1
    %s27 = ssub.s32 %s19, %s26
    %p28 = scmp.eq.s32.totalorder %s27, 0
    %s30 = sadd.s32 %s29, 1
    %s31 = scalar_select %p28, %s29, %s30
    %p34 = pneg %p28
    %p35 = scmp.eq.s32.totalorder %s19, 1
    %p36 = por %p34, %p35
    %p37 = scmp.ne.s32.totalorder %s29, %s32
    %p38 = scmp.eq.s32.totalorder %s19, 0
    %p39 = por %p37, %p38
    %p40 = scmp.ne.s32.totalorder %s29, %s32
    %p41 = scmp.eq.s32.totalorder %s24, 1
    %p42 = por %p40, %p41
    %p43 = scmp.ne.s32.totalorder %s32, %s33
    %p44 = scmp.eq.s32.totalorder %s24, 0
    %p45 = por %p43, %p44
    %p46 = scmp.ne.s32.totalorder %s32, %s33
    %p47 = scmp.eq.s32.totalorder %s25, 1
    %p48 = por %p46, %p47
    %p50 = scmp.ne.s32.totalorder %s33, %s49
    %p51 = scmp.eq.s32.totalorder %s25, 0
    %p52 = por %p50, %p51
    %s54 = sadd.s32 %s53, 1
    %p57 = scmp.eq.s32.totalorder %s19, 1
    %p58 = scmp.ne.s32.totalorder %s53, %s55
    %p59 = scmp.eq.s32.totalorder %s19, 0
    %p60 = por %p58, %p59
    %p61 = scmp.ne.s32.totalorder %s53, %s55
    %p62 = scmp.eq.s32.totalorder %s24, 1
    %p63 = por %p61, %p62
    %p64 = scmp.ne.s32.totalorder %s55, %s56
    %p65 = scmp.eq.s32.totalorder %s24, 0
    %p66 = por %p64, %p65
    %p67 = scmp.ne.s32.totalorder %s55, %s56
    %p68 = scmp.eq.s32.totalorder %s25, 1
    %p69 = por %p67, %p68
    %p71 = scmp.ne.s32.totalorder %s56, %s70
    %p72 = scmp.eq.s32.totalorder %s25, 0
    %p73 = por %p71, %p72
    %s75 = sadd.s32 %s74, 1
    %p78 = scmp.eq.s32.totalorder %s19, 1
    %p79 = scmp.ne.s32.totalorder %s74, %s76
    %p80 = scmp.eq.s32.totalorder %s19, 0
    %p81 = por %p79, %p80
    %p82 = scmp.ne.s32.totalorder %s74, %s76
    %p83 = scmp.eq.s32.totalorder %s24, 1
    %p84 = por %p82, %p83
    %p85 = scmp.ne.s32.totalorder %s76, %s77
    %p86 = scmp.eq.s32.totalorder %s24, 0
    %p87 = por %p85, %p86
    %p88 = scmp.ne.s32.totalorder %s76, %s77
    %p89 = scmp.eq.s32.totalorder %s25, 1
    %p90 = por %p88, %p89
    %p92 = scmp.ne.s32.totalorder %s77, %s91
    %p93 = scmp.eq.s32.totalorder %s25, 0
    %p94 = por %p92, %p93
    %s96 = sadd.s32 %s95, 1
    %p99 = scmp.eq.s32.totalorder %s19, 1
    %p100 = scmp.ne.s32.totalorder %s95, %s97
    %p101 = scmp.eq.s32.totalorder %s19, 0
    %p102 = por %p100, %p101
    %p103 = scmp.ne.s32.totalorder %s95, %s97
    %p104 = scmp.eq.s32.totalorder %s24, 1
    %p105 = por %p103, %p104
    %p106 = scmp.ne.s32.totalorder %s97, %s98
    %p107 = scmp.eq.s32.totalorder %s24, 0
    %p108 = por %p106, %p107
    %p109 = scmp.ne.s32.totalorder %s97, %s98
    %p110 = scmp.eq.s32.totalorder %s25, 1
    %p111 = por %p109, %p110
    %p113 = scmp.ne.s32.totalorder %s98, %s112
    %p114 = scmp.eq.s32.totalorder %s25, 0
    %p115 = por %p113, %p114
    %s117 = sadd.s32 %s116, 1
    %p120 = scmp.eq.s32.totalorder %s19, 1
    %p121 = scmp.ne.s32.totalorder %s116, %s118
    %p122 = scmp.eq.s32.totalorder %s19, 0
    %p123 = por %p121, %p122
    %p124 = scmp.ne.s32.totalorder %s116, %s118
    %p125 = scmp.eq.s32.totalorder %s24, 1
    %p126 = por %p124, %p125
    %p127 = scmp.ne.s32.totalorder %s118, %s119
    %p128 = scmp.eq.s32.totalorder %s24, 0
    %p129 = por %p127, %p128
    %p130 = scmp.ne.s32.totalorder %s118, %s119
    %p131 = scmp.eq.s32.totalorder %s25, 1
    %p132 = por %p130, %p131
    %p134 = scmp.ne.s32.totalorder %s119, %s133
    %p135 = scmp.eq.s32.totalorder %s25, 0
    %p136 = por %p134, %p135
    %s138 = sadd.s32 %s137, 1
    %p141 = scmp.eq.s32.totalorder %s19, 1
    %p142 = scmp.ne.s32.totalorder %s137, %s139
    %p143 = scmp.eq.s32.totalorder %s19, 0
    %p144 = por %p142, %p143
    %p145 = scmp.ne.s32.totalorder %s137, %s139
    %p146 = scmp.eq.s32.totalorder %s24, 1
    %p147 = por %p145, %p146
    %p148 = scmp.ne.s32.totalorder %s139, %s140
    %p149 = scmp.eq.s32.totalorder %s24, 0
    %p150 = por %p148, %p149
    %p151 = scmp.ne.s32.totalorder %s139, %s140
    %p152 = scmp.eq.s32.totalorder %s25, 1
    %p153 = por %p151, %p152
    %p155 = scmp.ne.s32.totalorder %s140, %s154
    %p156 = scmp.eq.s32.totalorder %s25, 0
    %p157 = por %p155, %p156
    %s159 = sadd.s32 %s158, 1
    %p162 = scmp.eq.s32.totalorder %s19, 1
    %p163 = scmp.ne.s32.totalorder %s158, %s160
    %p164 = scmp.eq.s32.totalorder %s19, 0
    %p165 = por %p163, %p164
    %p166 = scmp.ne.s32.totalorder %s158, %s160
    %p167 = scmp.eq.s32.totalorder %s24, 1
    %p168 = por %p166, %p167
    %p169 = scmp.ne.s32.totalorder %s160, %s161
    %p170 = scmp.eq.s32.totalorder %s24, 0
    %p171 = por %p169, %p170
    %p172 = scmp.ne.s32.totalorder %s160, %s161
    %p173 = scmp.eq.s32.totalorder %s25, 1
    %p174 = por %p172, %p173
    %p176 = scmp.ne.s32.totalorder %s161, %s175
    %p177 = scmp.eq.s32.totalorder %s25, 0
    %p178 = por %p176, %p177
    %s180 = sadd.s32 %s179, 1
    %p183 = scmp.eq.s32.totalorder %s19, 1
    %p184 = scmp.ne.s32.totalorder %s179, %s181
    %p185 = scmp.eq.s32.totalorder %s19, 0
    %p186 = por %p184, %p185
    %p187 = scmp.ne.s32.totalorder %s179, %s181
    %p188 = scmp.eq.s32.totalorder %s24, 1
    %p189 = por %p187, %p188
    %p190 = scmp.ne.s32.totalorder %s181, %s182
    %p191 = scmp.eq.s32.totalorder %s24, 0
    %p192 = por %p190, %p191
    %p193 = scmp.ne.s32.totalorder %s181, %s182
    %p194 = scmp.eq.s32.totalorder %s25, 1
    %p195 = por %p193, %p194
    %p197 = scmp.ne.s32.totalorder %s182, %s196
    %p198 = scmp.eq.s32.totalorder %s25, 0
    %p199 = por %p197, %p198
    %s201 = sadd.s32 %s200, 1
    %p204 = scmp.eq.s32.totalorder %s19, 1
    %p205 = scmp.ne.s32.totalorder %s200, %s202
    %p206 = scmp.eq.s32.totalorder %s19, 0
    %p207 = por %p205, %p206
    %p208 = scmp.ne.s32.totalorder %s200, %s202
    %p209 = scmp.eq.s32.totalorder %s24, 1
    %p210 = por %p208, %p209
    %p211 = scmp.ne.s32.totalorder %s202, %s203
    %p212 = scmp.eq.s32.totalorder %s24, 0
    %p213 = por %p211, %p212
    %p214 = scmp.ne.s32.totalorder %s202, %s203
    %p215 = scmp.eq.s32.totalorder %s25, 1
    %p216 = por %p214, %p215
    %p218 = scmp.ne.s32.totalorder %s203, %s217
    %p219 = scmp.eq.s32.totalorder %s25, 0
    %p220 = por %p218, %p219
    %s222 = sadd.s32 %s221, 1
    %p225 = scmp.eq.s32.totalorder %s19, 1
    %p226 = scmp.ne.s32.totalorder %s221, %s223
    %p227 = scmp.eq.s32.totalorder %s19, 0
    %p228 = por %p226, %p227
    %p229 = scmp.ne.s32.totalorder %s221, %s223
    %p230 = scmp.eq.s32.totalorder %s24, 1
    %p231 = por %p229, %p230
    %p232 = scmp.ne.s32.totalorder %s223, %s224
    %p233 = scmp.eq.s32.totalorder %s24, 0
    %p234 = por %p232, %p233
    %p235 = scmp.ne.s32.totalorder %s223, %s224
    %p236 = scmp.eq.s32.totalorder %s25, 1
    %p237 = por %p235, %p236
    %p239 = scmp.ne.s32.totalorder %s224, %s238
    %p240 = scmp.eq.s32.totalorder %s25, 0
    %p241 = por %p239, %p240
    %s243 = sadd.s32 %s242, 1
    %p246 = scmp.eq.s32.totalorder %s19, 1
    %p247 = scmp.ne.s32.totalorder %s242, %s244
    %p248 = scmp.eq.s32.totalorder %s19, 0
    %p249 = por %p247, %p248
    %p250 = scmp.ne.s32.totalorder %s242, %s244
    %p251 = scmp.eq.s32.totalorder %s24, 1
    %p252 = por %p250, %p251
    %p253 = scmp.ne.s32.totalorder %s244, %s245
    %p254 = scmp.eq.s32.totalorder %s24, 0
    %p255 = por %p253, %p254
    %p256 = scmp.ne.s32.totalorder %s244, %s245
    %p257 = scmp.eq.s32.totalorder %s25, 1
    %p258 = por %p256, %p257
    %p260 = scmp.ne.s32.totalorder %s245, %s259
    %p261 = scmp.eq.s32.totalorder %s25, 0
    %p262 = por %p260, %p261
    %s264 = sadd.s32 %s263, 1
    %p267 = scmp.eq.s32.totalorder %s19, 1
    %p268 = scmp.ne.s32.totalorder %s263, %s265
    %p269 = scmp.eq.s32.totalorder %s19, 0
    %p270 = por %p268, %p269
    %p271 = scmp.ne.s32.totalorder %s263, %s265
    %p272 = scmp.eq.s32.totalorder %s24, 1
    %p273 = por %p271, %p272
    %p274 = scmp.ne.s32.totalorder %s265, %s266
    %p275 = scmp.eq.s32.totalorder %s24, 0
    %p276 = por %p274, %p275
    %p277 = scmp.ne.s32.totalorder %s265, %s266
    %p278 = scmp.eq.s32.totalorder %s25, 1
    %p279 = por %p277, %p278
    %p281 = scmp.ne.s32.totalorder %s266, %s280
    %p282 = scmp.eq.s32.totalorder %s25, 0
    %p283 = por %p281, %p282
    %s285 = sadd.s32 %s284, 1
    %p288 = scmp.eq.s32.totalorder %s19, 1
    %p289 = scmp.ne.s32.totalorder %s284, %s286
    %p290 = scmp.eq.s32.totalorder %s19, 0
    %p291 = por %p289, %p290
    %p292 = scmp.ne.s32.totalorder %s284, %s286
    %p293 = scmp.eq.s32.totalorder %s24, 1
    %p294 = por %p292, %p293
    %p295 = scmp.ne.s32.totalorder %s286, %s287
    %p296 = scmp.eq.s32.totalorder %s24, 0
    %p297 = por %p295, %p296
    %p298 = scmp.ne.s32.totalorder %s286, %s287
    %p299 = scmp.eq.s32.totalorder %s25, 1
    %p300 = por %p298, %p299
    %p302 = scmp.ne.s32.totalorder %s287, %s301
    %p303 = scmp.eq.s32.totalorder %s25, 0
    %p304 = por %p302, %p303
    %s305 = ssub.s32 %s19, %s26
    %p306 = scmp.eq.s32.totalorder %s305, 0
    %s308 = sadd.s32 %s307, 1
    %s309 = scalar_select %p306, %s307, %s308
    %p312 = pneg %p306
    %p313 = scmp.eq.s32.totalorder %s19, 1
    %p314 = por %p312, %p313
    %p315 = scmp.ne.s32.totalorder %s307, %s310
    %p316 = scmp.eq.s32.totalorder %s19, 0
    %p317 = por %p315, %p316
    %p318 = scmp.ne.s32.totalorder %s307, %s310
    %p319 = scmp.eq.s32.totalorder %s24, 1
    %p320 = por %p318, %p319
    %p321 = scmp.ne.s32.totalorder %s310, %s311
    %p322 = scmp.eq.s32.totalorder %s24, 0
    %p323 = por %p321, %p322
    %p324 = scmp.ne.s32.totalorder %s310, %s311
    %p325 = scmp.eq.s32.totalorder %s25, 1
    %p326 = por %p324, %p325
    %p328 = scmp.ne.s32.totalorder %s311, %s327
    %p329 = scmp.eq.s32.totalorder %s25, 0
    %p330 = por %p328, %p329
    %p331 = scmp.le.s32.totalorder 1, %s19
    %p332 = scmp.lt.s32.totalorder %s19, 3
    %p333 = pnand %p331, %p332
    %p334 = pneg %p333
    // Predicated region
    $region9: #{mae_decoder_forward.4} parent=5 // pred_check
      _
    $region10: #{mae_decoder_forward.4} parent=5 // pred_check_branch
      %336 = sbr.rel (%p333) target = $region12
    $region11: #{mae_decoder_forward.4} parent=5 // pred_region
      %s337 = ssub.s32 %s19, 1
      // Predicated region
      $region13: #{mae_decoder_forward.4} parent=11 // pred_check
        %p338 = pneg %p66
      $region14: #{mae_decoder_forward.4} parent=11 // pred_check_branch
        %340 = sbr.rel (%p338) target = $region16
      $region15: #{mae_decoder_forward.4} parent=11 // pred_region
        _
      $region16: #{mae_decoder_forward.4} parent=11 // pred_fallthru
        _
      // Predicated region
      $region17: #{mae_decoder_forward.4} parent=11 // pred_check
        %p341 = pneg %p87
      $region18: #{mae_decoder_forward.4} parent=11 // pred_check_branch
        %343 = sbr.rel (%p341) target = $region20
      $region19: #{mae_decoder_forward.4} parent=11 // pred_region
        _
      $region20: #{mae_decoder_forward.4} parent=11 // pred_fallthru
        _
      // Predicated region
      $region21: #{mae_decoder_forward.4} parent=11 // pred_check
        %p344 = pneg %p108
      $region22: #{mae_decoder_forward.4} parent=11 // pred_check_branch
        %346 = sbr.rel (%p344) target = $region24
      $region23: #{mae_decoder_forward.4} parent=11 // pred_region
        _
      $region24: #{mae_decoder_forward.4} parent=11 // pred_fallthru
        _
      // Predicated region
      $region25: #{mae_decoder_forward.4} parent=11 // pred_check
        %p347 = pneg %p129
      $region26: #{mae_decoder_forward.4} parent=11 // pred_check_branch
        %349 = sbr.rel (%p347) target = $region28
      $region27: #{mae_decoder_forward.4} parent=11 // pred_region
        _
      $region28: #{mae_decoder_forward.4} parent=11 // pred_fallthru
        _
      // Predicated region
      $region29: #{mae_decoder_forward.4} parent=11 // pred_check
        %p350 = pneg %p150
      $region30: #{mae_decoder_forward.4} parent=11 // pred_check_branch
        %352 = sbr.rel (%p350) target = $region32
      $region31: #{mae_decoder_forward.4} parent=11 // pred_region
        _
      $region32: #{mae_decoder_forward.4} parent=11 // pred_fallthru
        _
      // Predicated region
      $region33: #{mae_decoder_forward.4} parent=11 // pred_check
        %p353 = pneg %p171
      $region34: #{mae_decoder_forward.4} parent=11 // pred_check_branch
        %355 = sbr.rel (%p353) target = $region36
      $region35: #{mae_decoder_forward.4} parent=11 // pred_region
        _
      $region36: #{mae_decoder_forward.4} parent=11 // pred_fallthru
        _
      // Predicated region
      $region37: #{mae_decoder_forward.4} parent=11 // pred_check
        %p356 = pneg %p192
      $region38: #{mae_decoder_forward.4} parent=11 // pred_check_branch
        %358 = sbr.rel (%p356) target = $region40
      $region39: #{mae_decoder_forward.4} parent=11 // pred_region
        _
      $region40: #{mae_decoder_forward.4} parent=11 // pred_fallthru
        _
      // Predicated region
      $region41: #{mae_decoder_forward.4} parent=11 // pred_check
        %p359 = pneg %p213
      $region42: #{mae_decoder_forward.4} parent=11 // pred_check_branch
        %361 = sbr.rel (%p359) target = $region44
      $region43: #{mae_decoder_forward.4} parent=11 // pred_region
        _
      $region44: #{mae_decoder_forward.4} parent=11 // pred_fallthru
        _
      // Predicated region
      $region45: #{mae_decoder_forward.4} parent=11 // pred_check
        %p362 = pneg %p234
      $region46: #{mae_decoder_forward.4} parent=11 // pred_check_branch
        %364 = sbr.rel (%p362) target = $region48
      $region47: #{mae_decoder_forward.4} parent=11 // pred_region
        _
      $region48: #{mae_decoder_forward.4} parent=11 // pred_fallthru
        _
      // Predicated region
      $region49: #{mae_decoder_forward.4} parent=11 // pred_check
        %p365 = pneg %p255
      $region50: #{mae_decoder_forward.4} parent=11 // pred_check_branch
        %367 = sbr.rel (%p365) target = $region52
      $region51: #{mae_decoder_forward.4} parent=11 // pred_region
        _
      $region52: #{mae_decoder_forward.4} parent=11 // pred_fallthru
        _
      // Predicated region
      $region53: #{mae_decoder_forward.4} parent=11 // pred_check
        %p368 = pneg %p276
      $region54: #{mae_decoder_forward.4} parent=11 // pred_check_branch
        %370 = sbr.rel (%p368) target = $region56
      $region55: #{mae_decoder_forward.4} parent=11 // pred_region
        _
      $region56: #{mae_decoder_forward.4} parent=11 // pred_fallthru
        _
      // Predicated region
      $region57: #{mae_decoder_forward.4} parent=11 // pred_check
        %p371 = pneg %p297
      $region58: #{mae_decoder_forward.4} parent=11 // pred_check_branch
        %373 = sbr.rel (%p371) target = $region60
      $region59: #{mae_decoder_forward.4} parent=11 // pred_region
        _
      $region60: #{mae_decoder_forward.4} parent=11 // pred_fallthru
        _
    $region12: #{mae_decoder_forward.4} parent=5 // pred_fallthru
      _
    %p374 = scmp.lt.s32.totalorder %s19, 2
    // Predicated region
    $region61: #{mae_decoder_forward.4} parent=5 // pred_check
      %p375 = pneg %p374
    $region62: #{mae_decoder_forward.4} parent=5 // pred_check_branch
      %377 = sbr.rel (%p375) target = $region64
    $region63: #{mae_decoder_forward.4} parent=5 // pred_region
      // Predicated region
      $region65: #{mae_decoder_forward.4} parent=63 // pred_check
        %p378 = pneg %p39
      $region66: #{mae_decoder_forward.4} parent=63 // pred_check_branch
        %380 = sbr.rel (%p378) target = $region68
      $region67: #{mae_decoder_forward.4} parent=63 // pred_region
        %p381 = scmp.lt.s32.totalorder %s19, 1
        %s382 = scalar_select %p381, %s19, 1
        %s383 = smul.addr %s382, 3
        %s384 = smul.addr %s383, 8
        %s385 = scalar_lea.vmem %s0, %s384
      $region68: #{mae_decoder_forward.4} parent=63 // pred_fallthru
        _
    $region64: #{mae_decoder_forward.4} parent=5 // pred_fallthru
      _
    %p386 = scmp.le.s32.totalorder 1, %s19
    %p387 = scmp.lt.s32.totalorder %s19, 3
    %p388 = pnand %p386, %p387
    %p389 = pneg %p388
    // Predicated region
    $region69: #{mae_decoder_forward.4} parent=5 // pred_check
      _
    $region70: #{mae_decoder_forward.4} parent=5 // pred_check_branch
      %391 = sbr.rel (%p388) target = $region72
    $region71: #{mae_decoder_forward.4} parent=5 // pred_region
      %s392 = ssub.s32 %s19, 1
      %p393 = scmp.lt.s32.totalorder %s24, 1
      %s394 = scalar_select %p393, %s24, 1
      %s395 = smul.addr %s394, 3
      %s396 = smul.addr %s395, 8
      %s397 = scalar_lea.vmem %s0, %s396
      %p398 = pneg %p45
      %p399 = pneg %p42
      %p400 = pneg %p66
      %p401 = pneg %p63
      %p402 = pneg %p87
      %p403 = pneg %p84
      %p404 = pneg %p108
      %p405 = pneg %p105
      %p406 = pneg %p129
      %p407 = pneg %p126
      %p408 = pneg %p150
      %p409 = pneg %p147
      %p410 = pneg %p171
      %p411 = pneg %p168
      %p412 = pneg %p192
      %p413 = pneg %p189
      %p414 = pneg %p213
      %p415 = pneg %p210
      %p416 = pneg %p234
      %p417 = pneg %p231
      %p418 = pneg %p255
      %p419 = pneg %p252
      %p420 = pneg %p276
      %p421 = pneg %p273
      %p422 = pneg %p297
      %p423 = pneg %p294
      %p424 = pneg %p323
      %p425 = pneg %p320
      %p426 = scmp.lt.s32.totalorder %s24, 1
      %s427 = scalar_select %p426, %s24, 1
      %s428 = smul.addr %s427, 3
      %s429 = smul.addr %s428, 8
      %s430 = scalar_lea.vmem %s13, %s429
      %p431 = scmp.lt.s32.totalorder %s24, 1
      %s432 = scalar_select %p431, %s24, 1
      %s433 = smul.addr %s432, 3
      %s434 = smul.addr %s433, 8
      %s435 = scalar_lea.vmem %s0, %s434
      %p436 = scmp.lt.s32.totalorder %s24, 1
      %s437 = scalar_select %p436, %s24, 1
      %s438 = smul.addr %s437, 3
      %s439 = smul.addr %s438, 8
      %s440 = scalar_lea.vmem %s13, %s439
      %v441 = vld [vmem:[%s435] sm:$0xff]
      %v442 = vld [vmem:[%s435 + $0x8] sm:$0xff]
      %v443 = vld [vmem:[%s435 + $0x10] sm:$0x1]
      %v444 = vld [vmem:[%s9] sm:$0x1]
      %v445 = vld [vmem:[%s10] sm:$0x1]
      %vm446 = vcmask 261120
      %v447 = vsel %vm446, %v441, 0.0
      %448 = vadd.xlane.f32.xlu0 %v447
      %v449 = vpop.xlane.xlu0 %448
      %v450 = vsel %vm446, %v442, 0.0
      %451 = vadd.xlane.f32.xlu0 %v450
      %v452 = vpop.xlane.xlu0 %451
      %vm453 = vcmask 253952
      %v454 = vsel %vm453, %v443, 0.0
      %455 = vadd.xlane.f32.xlu0 %v454
      %v456 = vpop.xlane.xlu0 %455
      %v457 = vrcp.pop 32.0
      %v458 = vmul.f32 %v449, %v457
      %v459 = vmul.f32 %v452, %v457
      %v460 = vmul.f32 %v456, %v457
      %v461 = vsub.f32 %v441, %v458
      %v462 = vsub.f32 %v442, %v459
      %v463 = vsub.f32 %v443, %v460
      %v464 = vmul.f32 %v461, %v461
      %v465 = vmul.f32 %v462, %v462
      %v466 = vmul.f32 %v463, %v463
      %v467 = vsel %vm446, %v464, 0.0
      %468 = vadd.xlane.f32.xlu0 %v467
      %v469 = vpop.xlane.xlu0 %468
      %v470 = vsel %vm446, %v465, 0.0
      %471 = vadd.xlane.f32.xlu0 %v470
      %v472 = vpop.xlane.xlu0 %471
      %v473 = vsel %vm453, %v466, 0.0
      %474 = vadd.xlane.f32.xlu0 %v473
      %v475 = vpop.xlane.xlu0 %474
      %v476 = vmul.f32 %v469, %v457
      %v477 = vmul.f32 %v472, %v457
      %v478 = vmul.f32 %v475, %v457
      %v479 = vadd.f32 %v476, 1e-05
      %v480 = vadd.f32 %v477, 1e-05
      %v481 = vadd.f32 %v478, 1e-05
      %v482 = vrsqrt.pop %v479
      %v483 = vrsqrt.pop %v480
      %v484 = vrsqrt.pop %v481
      %v485 = vmul.f32 %v461, %v482
      %v486 = vmul.f32 %v462, %v483
      %v487 = vmul.f32 %v463, %v484
      %v489 = vlaneseq
      %v490 = vshrl.u32 %v489, 7
      %v491 = vsub.s32 0, %v490
      %v492 = vrot.slane %v444, %v491
      %v494 = vmul.f32 %v485, %v492
      %v495 = vmul.f32 %v486, %v492
      %v496 = vmul.f32 %v487, %v492
      %v498 = vlaneseq
      %v499 = vshrl.u32 %v498, 7
      %v500 = vsub.s32 0, %v499
      %v501 = vrot.slane %v445, %v500
      %v503 = vadd.f32 %v494, %v501
      %v504 = vadd.f32 %v495, %v501
      %v505 = vadd.f32 %v496, %v501
      %v506 = vld [vmem:[%s1] sm:$0xff]
      %v507 = vld [vmem:[%s1 + $0x8] sm:$0xff]
      %v508 = vld [vmem:[%s1 + $0x10] sm:$0xff]
      %v509 = vld [vmem:[%s1 + $0x18] sm:$0xff]
      %v510 = vld [vmem:[%s2] sm:$0x1]
      %v512 = vlaneseq
      %v513 = vshrl.u32 %v512, 7
      %v514 = vsub.s32 0, %v513
      %v515 = vrot.slane %v510, %v514
      %v518 = vsel %vm446, %v503, 0
      %v521 = vsel %vm446, %v504, 0
      %v524 = vsel %vm446, %v505, 0
      %526 = vmatprep.subr.mxu0 0.0
      %527 = vmatpush1.msra.mxu0 %v506
      %528 = vmatprep.subr.mxu0 0.0
      %529 = vmatpush1.msra.mxu0 %v507
      %530 = vmatprep.subr.mxu0 0.0
      %531 = vmatpush1.msra.mxu0 %v508
      %532 = vmatprep.subr.mxu0 0.0
      %533 = vmatpush1.msra.mxu0 %v509
      %534 = vmatprep.subr.mxu0 0.0
      %535 = vmatpush1.msra.mxu0 0.0
      %536 = vmatprep.subr.mxu0 0.0
      %537 = vmatpush1.msra.mxu0 0.0
      %538 = vmatprep.subr.mxu0 0.0
      %539 = vmatpush1.msra.mxu0 0.0
      %540 = vmatprep.subr.mxu0 0.0
      %541 = vmatpush1.msra.mxu0 0.0
      %542 = vmatprep.subr.mxu0 0.0
      %543 = vmatpush1.msra.mxu0 0.0
      %544 = vmatprep.subr.mxu0 0.0
      %545 = vmatpush1.msra.mxu0 0.0
      %546 = vmatprep.subr.mxu0 0.0
      %547 = vmatpush1.msra.mxu0 0.0
      %548 = vmatprep.subr.mxu0 0.0
      %549 = vmatpush1.msra.mxu0 0.0
      %550 = vmatprep.subr.mxu0 0.0
      %551 = vmatpush1.msra.mxu0 0.0
      %552 = vmatprep.subr.mxu0 0.0
      %553 = vmatpush1.msra.mxu0 0.0
      %554 = vmatprep.subr.mxu0 0.0
      %555 = vmatpush1.msra.mxu0 0.0
      %556 = vmatprep.subr.mxu0 0.0
      %557 = vmatpush1.msra.mxu0 0.0
      %558 = vmatprep.subr.mxu0 0.0
      %559 = vmatpush1.msra.mxu0 0.0
      %560 = vmatprep.subr.mxu0 0.0
      %561 = vmatpush1.msra.mxu0 0.0
      %562 = vmatprep.subr.mxu0 0.0
      %563 = vmatpush1.msra.mxu0 0.0
      %564 = vmatprep.subr.mxu0 0.0
      %565 = vmatpush1.msra.mxu0 0.0
      %566 = vmatprep.subr.mxu0 0.0
      %567 = vmatpush1.msra.mxu0 0.0
      %568 = vmatprep.subr.mxu0 0.0
      %569 = vmatpush1.msra.mxu0 0.0
      %570 = vmatprep.subr.mxu0 0.0
      %571 = vmatpush1.msra.mxu0 0.0
      %572 = vmatprep.subr.mxu0 0.0
      %573 = vmatpush1.msra.mxu0 0.0
      %574 = vmatprep.subr.mxu0 0.0
      %575 = vmatpush1.msra.mxu0 0.0
      %576 = vmatprep.subr.mxu0 0.0
      %577 = vmatpush1.msra.mxu0 0.0
      %578 = vmatprep.subr.mxu0 0.0
      %579 = vmatpush1.msra.mxu0 0.0
      %580 = vmatprep.subr.mxu0 0.0
      %581 = vmatpush1.msra.mxu0 0.0
      %582 = vmatprep.subr.mxu0 0.0
      %583 = vmatpush1.msra.mxu0 0.0
      %584 = vmatprep.subr.mxu0 0.0
      %585 = vmatpush1.msra.mxu0 0.0
      %586 = vmatprep.subr.mxu0 0.0
      %587 = vmatpush1.msra.mxu0 0.0
      %588 = vmatprep.subr.mxu0 0.0
      %589 = vmatpush1.msra.mxu0 0.0
      %590 = vmatprep.mubr.f32.mxu0 0.0
      %591 = vmatmul.mubr.f32.gmra.mrb[0].mxu0 %v518
      %v592 = vpop.f32.mrb[0].mxu0
      %v593 = vadd.f32 %v515, %v592
      %v594 = vpop.f32.mrb[0].mxu0
      %595 = vmatprep.mubr.f32.mxu0 0.0
      %596 = vmatmul.mubr.f32.gmra.mrb[0].mxu0 %v521
      %v597 = vpop.f32.mrb[0].mxu0
      %v598 = vadd.f32 %v515, %v597
      %v599 = vpop.f32.mrb[0].mxu0
      %600 = vmatprep.mubr.f32.mxu0 0.0
      %601 = vmatmul.mubr.f32.gmra.mrb[0].mxu0 %v524
      %v602 = vpop.f32.mrb[0].mxu0
      %v603 = vadd.f32 %v515, %v602
      %v604 = vpop.f32.mrb[0].mxu0
      %605 = vdwg.mxu0
      %609 = vrot.lane.b32.xlu0 %v593, 96
      %v610 = vpop.permute.xlu0 %609
      %611 = vrot.lane.b32.xlu0 %v598, 96
      %v612 = vpop.permute.xlu0 %611
      %613 = vrot.lane.b32.xlu0 %v603, 96
      %v614 = vpop.permute.xlu0 %613
      %vm615 = vcmask 64512
      %v616 = vsel %vm615, %v593, 0
      %v618 = vsel %vm615, %v598, 0
      %v620 = vsel %vm615, %v603, 0
      %v622 = vsel %vm615, %v610, 0
      %v624 = vsel %vm615, %v612, 0
      %v626 = vsel %vm615, %v614, 0
      %628 = vmatprep.subr.mxu0 0.0
      %629 = vmatpush1.xpose.msra.mxu0 %v622
      %630 = vmatprep.subr.mxu0 0.0
      %631 = vmatpush1.xpose.msra.mxu0 %v624
      %632 = vmatprep.subr.mxu0 0.0
      %633 = vmatpush1.xpose.msra.mxu0 %v626
      %634 = vmatprep.subr.mxu0 0.0
      %635 = vmatpush1.xpose.msra.mxu0 0.0
      %636 = vmatprep.subr.mxu0 0.0
      %637 = vmatpush1.xpose.msra.mxu0 0.0
      %638 = vmatprep.subr.mxu0 0.0
      %639 = vmatpush1.xpose.msra.mxu0 0.0
      %640 = vmatprep.subr.mxu0 0.0
      %641 = vmatpush1.xpose.msra.mxu0 0.0
      %642 = vmatprep.subr.mxu0 0.0
      %643 = vmatpush1.xpose.msra.mxu0 0.0
      %644 = vmatprep.subr.mxu0 0.0
      %645 = vmatpush1.xpose.msra.mxu0 0.0
      %646 = vmatprep.subr.mxu0 0.0
      %647 = vmatpush1.xpose.msra.mxu0 0.0
      %648 = vmatprep.subr.mxu0 0.0
      %649 = vmatpush1.xpose.msra.mxu0 0.0
      %650 = vmatprep.subr.mxu0 0.0
      %651 = vmatpush1.xpose.msra.mxu0 0.0
      %652 = vmatprep.subr.mxu0 0.0
      %653 = vmatpush1.xpose.msra.mxu0 0.0
      %654 = vmatprep.subr.mxu0 0.0
      %655 = vmatpush1.xpose.msra.mxu0 0.0
      %656 = vmatprep.subr.mxu0 0.0
      %657 = vmatpush1.xpose.msra.mxu0 0.0
      %658 = vmatprep.subr.mxu0 0.0
      %659 = vmatpush1.xpose.msra.mxu0 0.0
      %660 = vmatprep.subr.mxu0 0.0
      %661 = vmatpush1.xpose.msra.mxu0 0.0
      %662 = vmatprep.subr.mxu0 0.0
      %663 = vmatpush1.xpose.msra.mxu0 0.0
      %664 = vmatprep.subr.mxu0 0.0
      %665 = vmatpush1.xpose.msra.mxu0 0.0
      %666 = vmatprep.subr.mxu0 0.0
      %667 = vmatpush1.xpose.msra.mxu0 0.0
      %668 = vmatprep.subr.mxu0 0.0
      %669 = vmatpush1.xpose.msra.mxu0 0.0
      %670 = vmatprep.subr.mxu0 0.0
      %671 = vmatpush1.xpose.msra.mxu0 0.0
      %672 = vmatprep.subr.mxu0 0.0
      %673 = vmatpush1.xpose.msra.mxu0 0.0
      %674 = vmatprep.subr.mxu0 0.0
      %675 = vmatpush1.xpose.msra.mxu0 0.0
      %676 = vmatprep.subr.mxu0 0.0
      %677 = vmatpush1.xpose.msra.mxu0 0.0
      %678 = vmatprep.subr.mxu0 0.0
      %679 = vmatpush1.xpose.msra.mxu0 0.0
      %680 = vmatprep.subr.mxu0 0.0
      %681 = vmatpush1.xpose.msra.mxu0 0.0
      %682 = vmatprep.subr.mxu0 0.0
      %683 = vmatpush1.xpose.msra.mxu0 0.0
      %684 = vmatprep.subr.mxu0 0.0
      %685 = vmatpush1.xpose.msra.mxu0 0.0
      %686 = vmatprep.subr.mxu0 0.0
      %687 = vmatpush1.xpose.msra.mxu0 0.0
      %688 = vmatprep.subr.mxu0 0.0
      %689 = vmatpush1.xpose.msra.mxu0 0.0
      %690 = vmatprep.subr.mxu0 0.0
      %691 = vmatpush1.xpose.msra.mxu0 0.0
      %692 = vmatprep.mubr.f32.mxu0 0.0
      %693 = vmatmul.mubr.f32.gmra.mrb[0].mxu0 %v616
      %v694 = vpop.f32.mrb[0].mxu0
      %v695 = vadd.f32 0.0, %v694
      %v696 = vpop.f32.mrb[0].mxu0
      %697 = vmatprep.mubr.f32.mxu0 0.0
      %698 = vmatmul.mubr.f32.gmra.mrb[0].mxu0 %v618
      %v699 = vpop.f32.mrb[0].mxu0
      %v700 = vadd.f32 0.0, %v699
      %v701 = vpop.f32.mrb[0].mxu0
      %702 = vmatprep.mubr.f32.mxu0 0.0
      %703 = vmatmul.mubr.f32.gmra.mrb[0].mxu0 %v620
      %v704 = vpop.f32.mrb[0].mxu0
      %v705 = vadd.f32 0.0, %v704
      %v706 = vpop.f32.mrb[0].mxu0
      %707 = vdwg.mxu0
      %v708 = vmul.f32 %v695, 0.35355338
      %v709 = vmul.f32 %v700, 0.35355338
      %v710 = vmul.f32 %v705, 0.35355338
      %vm711 = vcmask 138240
      %v712 = vsel %vm711, %v708, -inf
      %713 = vmax.xlane.f32.xlu0 %v712
      %v714 = vpop.xlane.xlu0 %713
      %v715 = vsel %vm711, %v709, -inf
      %716 = vmax.xlane.f32.xlu0 %v715
      %v717 = vpop.xlane.xlu0 %716
      %vm718 = vcmask 131072
      %v719 = vsel %vm718, %v710, -inf
      %720 = vmax.xlane.f32.xlu0 %v719
      %v721 = vpop.xlane.xlu0 %720
      %v722 = vsub.f32 %v708, %v714
      %v723 = vsub.f32 %v709, %v717
      %v724 = vsub.f32 %v710, %v721
      %v725 = vmul.f32 %v722, 1.442695
      %v726 = vpow.pop %v725
      %v727 = vmul.f32 %v723, 1.442695
      %v728 = vpow.pop %v727
      %v729 = vmul.f32 %v724, 1.442695
      %v730 = vpow.pop %v729
      %v731 = vsel %vm711, %v726, 0.0
      %732 = vadd.xlane.f32.xlu0 %v731
      %v733 = vpop.xlane.xlu0 %732
      %v734 = vsel %vm711, %v728, 0.0
      %735 = vadd.xlane.f32.xlu0 %v734
      %v736 = vpop.xlane.xlu0 %735
      %v737 = vsel %vm718, %v730, 0.0
      %738 = vadd.xlane.f32.xlu0 %v737
      %v739 = vpop.xlane.xlu0 %738
      %v740 = vrcp.pop %v733
      %v741 = vrcp.pop %v736
      %v742 = vrcp.pop %v739
      %v743 = vmul.f32 %v726, %v740
      %v744 = vmul.f32 %v728, %v741
      %v745 = vmul.f32 %v730, %v742
      %746 = vrot.lane.b32.xlu0 %v593, 64
      %v747 = vpop.permute.xlu0 %746
      %748 = vrot.lane.b32.xlu0 %v598, 64
      %v749 = vpop.permute.xlu0 %748
      %750 = vrot.lane.b32.xlu0 %v603, 64
      %v751 = vpop.permute.xlu0 %750
      %v755 = vsel %vm711, %v743, 0
      %v758 = vsel %vm711, %v744, 0
      %v761 = vsel %vm711, %v745, 0
      %vm763 = vcmask 1040384
      %v764 = vsel %vm763, %v751, 0
      %766 = vmatprep.subr.mxu0 0.0
      %767 = vmatpush1.msra.mxu0 %v747
      %768 = vmatprep.subr.mxu0 0.0
      %769 = vmatpush1.msra.mxu0 %v749
      %770 = vmatprep.subr.mxu0 0.0
      %771 = vmatpush1.msra.mxu0 %v764
      %772 = vmatprep.subr.mxu0 0.0
      %773 = vmatpush1.msra.mxu0 0.0
      %774 = vmatprep.subr.mxu0 0.0
      %775 = vmatpush1.msra.mxu0 0.0
      %776 = vmatprep.subr.mxu0 0.0
      %777 = vmatpush1.msra.mxu0 0.0
      %778 = vmatprep.subr.mxu0 0.0
      %779 = vmatpush1.msra.mxu0 0.0
      %780 = vmatprep.subr.mxu0 0.0
      %781 = vmatpush1.msra.mxu0 0.0
      %782 = vmatprep.subr.mxu0 0.0
      %783 = vmatpush1.msra.mxu0 0.0
      %784 = vmatprep.subr.mxu0 0.0
      %785 = vmatpush1.msra.mxu0 0.0
      %786 = vmatprep.subr.mxu0 0.0
      %787 = vmatpush1.msra.mxu0 0.0
      %788 = vmatprep.subr.mxu0 0.0
      %789 = vmatpush1.msra.mxu0 0.0
      %790 = vmatprep.subr.mxu0 0.0
      %791 = vmatpush1.msra.mxu0 0.0
      %792 = vmatprep.subr.mxu0 0.0
      %793 = vmatpush1.msra.mxu0 0.0
      %794 = vmatprep.subr.mxu0 0.0
      %795 = vmatpush1.msra.mxu0 0.0
      %796 = vmatprep.subr.mxu0 0.0
      %797 = vmatpush1.msra.mxu0 0.0
      %798 = vmatprep.subr.mxu0 0.0
      %799 = vmatpush1.msra.mxu0 0.0
      %800 = vmatprep.subr.mxu0 0.0
      %801 = vmatpush1.msra.mxu0 0.0
      %802 = vmatprep.subr.mxu0 0.0
      %803 = vmatpush1.msra.mxu0 0.0
      %804 = vmatprep.subr.mxu0 0.0
      %805 = vmatpush1.msra.mxu0 0.0
      %806 = vmatprep.subr.mxu0 0.0
      %807 = vmatpush1.msra.mxu0 0.0
      %808 = vmatprep.subr.mxu0 0.0
      %809 = vmatpush1.msra.mxu0 0.0
      %810 = vmatprep.subr.mxu0 0.0
      %811 = vmatpush1.msra.mxu0 0.0
      %812 = vmatprep.subr.mxu0 0.0
      %813 = vmatpush1.msra.mxu0 0.0
      %814 = vmatprep.subr.mxu0 0.0
      %815 = vmatpush1.msra.mxu0 0.0
      %816 = vmatprep.subr.mxu0 0.0
      %817 = vmatpush1.msra.mxu0 0.0
      %818 = vmatprep.subr.mxu0 0.0
      %819 = vmatpush1.msra.mxu0 0.0
      %820 = vmatprep.subr.mxu0 0.0
      %821 = vmatpush1.msra.mxu0 0.0
      %822 = vmatprep.subr.mxu0 0.0
      %823 = vmatpush1.msra.mxu0 0.0
      %824 = vmatprep.subr.mxu0 0.0
      %825 = vmatpush1.msra.mxu0 0.0
      %826 = vmatprep.subr.mxu0 0.0
      %827 = vmatpush1.msra.mxu0 0.0
      %828 = vmatprep.subr.mxu0 0.0
      %829 = vmatpush1.msra.mxu0 0.0
      %830 = vmatprep.mubr.f32.mxu0 0.0
      %831 = vmatmul.mubr.f32.gmra.mrb[0].mxu0 %v755
      %v832 = vpop.f32.mrb[0].mxu0
      %v833 = vadd.f32 0.0, %v832
      %v834 = vpop.f32.mrb[0].mxu0
      %835 = vmatprep.mubr.f32.mxu0 0.0
      %836 = vmatmul.mubr.f32.gmra.mrb[0].mxu0 %v758
      %v837 = vpop.f32.mrb[0].mxu0
      %v838 = vadd.f32 0.0, %v837
      %v839 = vpop.f32.mrb[0].mxu0
      %840 = vmatprep.mubr.f32.mxu0 0.0
      %841 = vmatmul.mubr.f32.gmra.mrb[0].mxu0 %v761
      %v842 = vpop.f32.mrb[0].mxu0
      %v843 = vadd.f32 0.0, %v842
      %v844 = vpop.f32.mrb[0].mxu0
      %845 = vdwg.mxu0
      %v846 = vld [vmem:[%s3] sm:$0xff]
      %847 = vrot.lane.b32.xlu0 %v593, 120
      %v848 = vpop.permute.xlu0 %847
      %849 = vrot.lane.b32.xlu0 %v598, 120
      %v850 = vpop.permute.xlu0 %849
      %851 = vrot.lane.b32.xlu0 %v603, 120
      %v852 = vpop.permute.xlu0 %851
      %853 = vrot.lane.b32.xlu0 %v593, 88
      %v854 = vpop.permute.xlu0 %853
      %855 = vrot.lane.b32.xlu0 %v598, 88
      %v856 = vpop.permute.xlu0 %855
      %857 = vrot.lane.b32.xlu0 %v603, 88
      %v858 = vpop.permute.xlu0 %857
      %v859 = vsel %vm615, %v848, 0
      %v861 = vsel %vm615, %v850, 0
      %v863 = vsel %vm615, %v852, 0
      %v865 = vsel %vm615, %v854, 0
      %v867 = vsel %vm615, %v856, 0
      %v869 = vsel %vm615, %v858, 0
      %871 = vmatprep.subr.mxu0 0.0
      %872 = vmatpush1.xpose.msra.mxu0 %v865
      %873 = vmatprep.subr.mxu0 0.0
      %874 = vmatpush1.xpose.msra.mxu0 %v867
      %875 = vmatprep.subr.mxu0 0.0
      %876 = vmatpush1.xpose.msra.mxu0 %v869
      %877 = vmatprep.subr.mxu0 0.0
      %878 = vmatpush1.xpose.msra.mxu0 0.0
      %879 = vmatprep.subr.mxu0 0.0
      %880 = vmatpush1.xpose.msra.mxu0 0.0
      %881 = vmatprep.subr.mxu0 0.0
      %882 = vmatpush1.xpose.msra.mxu0 0.0
      %883 = vmatprep.subr.mxu0 0.0
      %884 = vmatpush1.xpose.msra.mxu0 0.0
      %885 = vmatprep.subr.mxu0 0.0
      %886 = vmatpush1.xpose.msra.mxu0 0.0
      %887 = vmatprep.subr.mxu0 0.0
      %888 = vmatpush1.xpose.msra.mxu0 0.0
      %889 = vmatprep.subr.mxu0 0.0
      %890 = vmatpush1.xpose.msra.mxu0 0.0
      %891 = vmatprep.subr.mxu0 0.0
      %892 = vmatpush1.xpose.msra.mxu0 0.0
      %893 = vmatprep.subr.mxu0 0.0
      %894 = vmatpush1.xpose.msra.mxu0 0.0
      %895 = vmatprep.subr.mxu0 0.0
      %896 = vmatpush1.xpose.msra.mxu0 0.0
      %897 = vmatprep.subr.mxu0 0.0
      %898 = vmatpush1.xpose.msra.mxu0 0.0
      %899 = vmatprep.subr.mxu0 0.0
      %900 = vmatpush1.xpose.msra.mxu0 0.0
      %901 = vmatprep.subr.mxu0 0.0
      %902 = vmatpush1.xpose.msra.mxu0 0.0
      %903 = vmatprep.subr.mxu0 0.0
      %904 = vmatpush1.xpose.msra.mxu0 0.0
      %905 = vmatprep.subr.mxu0 0.0
      %906 = vmatpush1.xpose.msra.mxu0 0.0
      %907 = vmatprep.subr.mxu0 0.0
      %908 = vmatpush1.xpose.msra.mxu0 0.0
      %909 = vmatprep.subr.mxu0 0.0
      %910 = vmatpush1.xpose.msra.mxu0 0.0
      %911 = vmatprep.subr.mxu0 0.0
      %912 = vmatpush1.xpose.msra.mxu0 0.0
      %913 = vmatprep.subr.mxu0 0.0
      %914 = vmatpush1.xpose.msra.mxu0 0.0
      %915 = vmatprep.subr.mxu0 0.0
      %916 = vmatpush1.xpose.msra.mxu0 0.0
      %917 = vmatprep.subr.mxu0 0.0
      %918 = vmatpush1.xpose.msra.mxu0 0.0
      %919 = vmatprep.subr.mxu0 0.0
      %920 = vmatpush1.xpose.msra.mxu0 0.0
      %921 = vmatprep.subr.mxu0 0.0
      %922 = vmatpush1.xpose.msra.mxu0 0.0
      %923 = vmatprep.subr.mxu0 0.0
      %924 = vmatpush1.xpose.msra.mxu0 0.0
      %925 = vmatprep.subr.mxu0 0.0
      %926 = vmatpush1.xpose.msra.mxu0 0.0
      %927 = vmatprep.subr.mxu0 0.0
      %928 = vmatpush1.xpose.msra.mxu0 0.0
      %929 = vmatprep.subr.mxu0 0.0
      %930 = vmatpush1.xpose.msra.mxu0 0.0
      %931 = vmatprep.subr.mxu0 0.0
      %932 = vmatpush1.xpose.msra.mxu0 0.0
      %933 = vmatprep.subr.mxu0 0.0
      %934 = vmatpush1.xpose.msra.mxu0 0.0
      %935 = vmatprep.mubr.f32.mxu0 0.0
      %936 = vmatmul.mubr.f32.gmra.mrb[0].mxu0 %v859
      %v937 = vpop.f32.mrb[0].mxu0
      %v938 = vadd.f32 0.0, %v937
      %v939 = vpop.f32.mrb[0].mxu0
      %940 = vmatprep.mubr.f32.mxu0 0.0
      %941 = vmatmul.mubr.f32.gmra.mrb[0].mxu0 %v861
      %v942 = vpop.f32.mrb[0].mxu0
      %v943 = vadd.f32 0.0, %v942
      %v944 = vpop.f32.mrb[0].mxu0
      %945 = vmatprep.mubr.f32.mxu0 0.0
      %946 = vmatmul.mubr.f32.gmra.mrb[0].mxu0 %v863
      %v947 = vpop.f32.mrb[0].mxu0
      %v948 = vadd.f32 0.0, %v947
      %v949 = vpop.f32.mrb[0].mxu0
      %950 = vdwg.mxu0
      %v951 = vmul.f32 %v938, 0.35355338
      %v952 = vmul.f32 %v943, 0.35355338
      %v953 = vmul.f32 %v948, 0.35355338
      %v954 = vsel %vm711, %v951, -inf
      %955 = vmax.xlane.f32.xlu0 %v954
      %v956 = vpop.xlane.xlu0 %955
      %v957 = vsel %vm711, %v952, -inf
      %958 = vmax.xlane.f32.xlu0 %v957
      %v959 = vpop.xlane.xlu0 %958
      %v960 = vsel %vm718, %v953, -inf
      %961 = vmax.xlane.f32.xlu0 %v960
      %v962 = vpop.xlane.xlu0 %961
      %v963 = vsub.f32 %v951, %v956
      %v964 = vsub.f32 %v952, %v959
      %v965 = vsub.f32 %v953, %v962
      %v966 = vmul.f32 %v963, 1.442695
      %v967 = vpow.pop %v966
      %v968 = vmul.f32 %v964, 1.442695
      %v969 = vpow.pop %v968
      %v970 = vmul.f32 %v965, 1.442695
      %v971 = vpow.pop %v970
      %v972 = vsel %vm711, %v967, 0.0
      %973 = vadd.xlane.f32.xlu0 %v972
      %v974 = vpop.xlane.xlu0 %973
      %v975 = vsel %vm711, %v969, 0.0
      %976 = vadd.xlane.f32.xlu0 %v975
      %v977 = vpop.xlane.xlu0 %976
      %v978 = vsel %vm718, %v971, 0.0
      %979 = vadd.xlane.f32.xlu0 %v978
      %v980 = vpop.xlane.xlu0 %979
      %v981 = vrcp.pop %v974
      %v982 = vrcp.pop %v977
      %v983 = vrcp.pop %v980
      %v984 = vmul.f32 %v967, %v981
      %v985 = vmul.f32 %v969, %v982
      %v986 = vmul.f32 %v971, %v983
      %987 = vrot.lane.b32.xlu0 %v593, 56
      %v988 = vpop.permute.xlu0 %987
      %989 = vrot.lane.b32.xlu0 %v598, 56
      %v990 = vpop.permute.xlu0 %989
      %991 = vrot.lane.b32.xlu0 %v603, 56
      %v992 = vpop.permute.xlu0 %991
      %v996 = vsel %vm711, %v984, 0
      %v999 = vsel %vm711, %v985, 0
      %v1002 = vsel %vm711, %v986, 0
      %v1004 = vsel %vm763, %v992, 0
      %1006 = vmatprep.subr.mxu0 0.0
      %1007 = vmatpush1.msra.mxu0 %v988
      %1008 = vmatprep.subr.mxu0 0.0
      %1009 = vmatpush1.msra.mxu0 %v990
      %1010 = vmatprep.subr.mxu0 0.0
      %1011 = vmatpush1.msra.mxu0 %v1004
      %1012 = vmatprep.subr.mxu0 0.0
      %1013 = vmatpush1.msra.mxu0 0.0
      %1014 = vmatprep.subr.mxu0 0.0
      %1015 = vmatpush1.msra.mxu0 0.0
      %1016 = vmatprep.subr.mxu0 0.0
      %1017 = vmatpush1.msra.mxu0 0.0
      %1018 = vmatprep.subr.mxu0 0.0
      %1019 = vmatpush1.msra.mxu0 0.0
      %1020 = vmatprep.subr.mxu0 0.0
      %1021 = vmatpush1.msra.mxu0 0.0
      %1022 = vmatprep.subr.mxu0 0.0
      %1023 = vmatpush1.msra.mxu0 0.0
      %1024 = vmatprep.subr.mxu0 0.0
      %1025 = vmatpush1.msra.mxu0 0.0
      %1026 = vmatprep.subr.mxu0 0.0
      %1027 = vmatpush1.msra.mxu0 0.0
      %1028 = vmatprep.subr.mxu0 0.0
      %1029 = vmatpush1.msra.mxu0 0.0
      %1030 = vmatprep.subr.mxu0 0.0
      %1031 = vmatpush1.msra.mxu0 0.0
      %1032 = vmatprep.subr.mxu0 0.0
      %1033 = vmatpush1.msra.mxu0 0.0
      %1034 = vmatprep.subr.mxu0 0.0
      %1035 = vmatpush1.msra.mxu0 0.0
      %1036 = vmatprep.subr.mxu0 0.0
      %1037 = vmatpush1.msra.mxu0 0.0
      %1038 = vmatprep.subr.mxu0 0.0
      %1039 = vmatpush1.msra.mxu0 0.0
      %1040 = vmatprep.subr.mxu0 0.0
      %1041 = vmatpush1.msra.mxu0 0.0
      %1042 = vmatprep.subr.mxu0 0.0
      %1043 = vmatpush1.msra.mxu0 0.0
      %1044 = vmatprep.subr.mxu0 0.0
      %1045 = vmatpush1.msra.mxu0 0.0
      %1046 = vmatprep.subr.mxu0 0.0
      %1047 = vmatpush1.msra.mxu0 0.0
      %1048 = vmatprep.subr.mxu0 0.0
      %1049 = vmatpush1.msra.mxu0 0.0
      %1050 = vmatprep.subr.mxu0 0.0
      %1051 = vmatpush1.msra.mxu0 0.0
      %1052 = vmatprep.subr.mxu0 0.0
      %1053 = vmatpush1.msra.mxu0 0.0
      %1054 = vmatprep.subr.mxu0 0.0
      %1055 = vmatpush1.msra.mxu0 0.0
      %1056 = vmatprep.subr.mxu0 0.0
      %1057 = vmatpush1.msra.mxu0 0.0
      %1058 = vmatprep.subr.mxu0 0.0
      %1059 = vmatpush1.msra.mxu0 0.0
      %1060 = vmatprep.subr.mxu0 0.0
      %1061 = vmatpush1.msra.mxu0 0.0
      %1062 = vmatprep.subr.mxu0 0.0
      %1063 = vmatpush1.msra.mxu0 0.0
      %1064 = vmatprep.subr.mxu0 0.0
      %1065 = vmatpush1.msra.mxu0 0.0
      %1066 = vmatprep.subr.mxu0 0.0
      %1067 = vmatpush1.msra.mxu0 0.0
      %1068 = vmatprep.subr.mxu0 0.0
      %1069 = vmatpush1.msra.mxu0 0.0
      %1070 = vmatprep.mubr.f32.mxu0 0.0
      %1071 = vmatmul.mubr.f32.gmra.mrb[0].mxu0 %v996
      %v1072 = vpop.f32.mrb[0].mxu0
      %v1073 = vadd.f32 0.0, %v1072
      %v1074 = vpop.f32.mrb[0].mxu0
      %1075 = vmatprep.mubr.f32.mxu0 0.0
      %1076 = vmatmul.mubr.f32.gmra.mrb[0].mxu0 %v999
      %v1077 = vpop.f32.mrb[0].mxu0
      %v1078 = vadd.f32 0.0, %v1077
      %v1079 = vpop.f32.mrb[0].mxu0
      %1080 = vmatprep.mubr.f32.mxu0 0.0
      %1081 = vmatmul.mubr.f32.gmra.mrb[0].mxu0 %v1002
      %v1082 = vpop.f32.mrb[0].mxu0
      %v1083 = vadd.f32 0.0, %v1082
      %v1084 = vpop.f32.mrb[0].mxu0
      %1085 = vdwg.mxu0
      %v1086 = vld [vmem:[%s3 + $0x8] sm:$0xff]
      %v1088 = vsel %vm615, %v1073, 0
      %v1091 = vsel %vm615, %v1078, 0
      %v1094 = vsel %vm615, %v1083, 0
      %1096 = vmatprep.subr.mxu0 0.0
      %1097 = vmatpush1.msra.mxu0 %v1086
      %1098 = vmatprep.subr.mxu0 0.0
      %1099 = vmatpush1.msra.mxu0 0.0
      %1100 = vmatprep.subr.mxu0 0.0
      %1101 = vmatpush1.msra.mxu0 0.0
      %1102 = vmatprep.subr.mxu0 0.0
      %1103 = vmatpush1.msra.mxu0 0.0
      %1104 = vmatprep.subr.mxu0 0.0
      %1105 = vmatpush1.msra.mxu0 0.0
      %1106 = vmatprep.subr.mxu0 0.0
      %1107 = vmatpush1.msra.mxu0 0.0
      %1108 = vmatprep.subr.mxu0 0.0
      %1109 = vmatpush1.msra.mxu0 0.0
      %1110 = vmatprep.subr.mxu0 0.0
      %1111 = vmatpush1.msra.mxu0 0.0
      %1112 = vmatprep.subr.mxu0 0.0
      %1113 = vmatpush1.msra.mxu0 0.0
      %1114 = vmatprep.subr.mxu0 0.0
      %1115 = vmatpush1.msra.mxu0 0.0
      %1116 = vmatprep.subr.mxu0 0.0
      %1117 = vmatpush1.msra.mxu0 0.0
      %1118 = vmatprep.subr.mxu0 0.0
      %1119 = vmatpush1.msra.mxu0 0.0
      %1120 = vmatprep.subr.mxu0 0.0
      %1121 = vmatpush1.msra.mxu0 0.0
      %1122 = vmatprep.subr.mxu0 0.0
      %1123 = vmatpush1.msra.mxu0 0.0
      %1124 = vmatprep.subr.mxu0 0.0
      %1125 = vmatpush1.msra.mxu0 0.0
      %1126 = vmatprep.subr.mxu0 0.0
      %1127 = vmatpush1.msra.mxu0 0.0
      %1128 = vmatprep.subr.mxu0 0.0
      %1129 = vmatpush1.msra.mxu0 0.0
      %1130 = vmatprep.subr.mxu0 0.0
      %1131 = vmatpush1.msra.mxu0 0.0
      %1132 = vmatprep.subr.mxu0 0.0
      %1133 = vmatpush1.msra.mxu0 0.0
      %1134 = vmatprep.subr.mxu0 0.0
      %1135 = vmatpush1.msra.mxu0 0.0
      %1136 = vmatprep.subr.mxu0 0.0
      %1137 = vmatpush1.msra.mxu0 0.0
      %1138 = vmatprep.subr.mxu0 0.0
      %1139 = vmatpush1.msra.mxu0 0.0
      %1140 = vmatprep.subr.mxu0 0.0
      %1141 = vmatpush1.msra.mxu0 0.0
      %1142 = vmatprep.subr.mxu0 0.0
      %1143 = vmatpush1.msra.mxu0 0.0
      %1144 = vmatprep.subr.mxu0 0.0
      %1145 = vmatpush1.msra.mxu0 0.0
      %1146 = vmatprep.subr.mxu0 0.0
      %1147 = vmatpush1.msra.mxu0 0.0
      %1148 = vmatprep.subr.mxu0 0.0
      %1149 = vmatpush1.msra.mxu0 0.0
      %1150 = vmatprep.subr.mxu0 0.0
      %1151 = vmatpush1.msra.mxu0 0.0
      %1152 = vmatprep.subr.mxu0 0.0
      %1153 = vmatpush1.msra.mxu0 0.0
      %1154 = vmatprep.subr.mxu0 0.0
      %1155 = vmatpush1.msra.mxu0 0.0
      %1156 = vmatprep.subr.mxu0 0.0
      %1157 = vmatpush1.msra.mxu0 0.0
      %1158 = vmatprep.subr.mxu0 0.0
      %1159 = vmatpush1.msra.mxu0 0.0
      %1160 = vmatprep.mubr.f32.mxu0 0.0
      %1161 = vmatmul.mubr.f32.gmra.mrb[0].mxu0 %v1088
      %v1162 = vpop.f32.mrb[0].mxu0
      %v1163 = vadd.f32 0.0, %v1162
      %v1164 = vpop.f32.mrb[0].mxu0
      %1165 = vmatprep.mubr.f32.mxu0 0.0
      %1166 = vmatmul.mubr.f32.gmra.mrb[0].mxu0 %v1091
      %v1167 = vpop.f32.mrb[0].mxu0
      %v1168 = vadd.f32 0.0, %v1167
      %v1169 = vpop.f32.mrb[0].mxu0
      %1170 = vmatprep.mubr.f32.mxu0 0.0
      %1171 = vmatmul.mubr.f32.gmra.mrb[0].mxu0 %v1094
      %v1172 = vpop.f32.mrb[0].mxu0
      %v1173 = vadd.f32 0.0, %v1172
      %v1174 = vpop.f32.mrb[0].mxu0
      %1175 = vdwg.mxu0
      %v1177 = vsel %vm615, %v833, 0
      %v1180 = vsel %vm615, %v838, 0
      %v1183 = vsel %vm615, %v843, 0
      %1185 = vmatprep.subr.mxu0 0.0
      %1186 = vmatpush1.msra.mxu0 %v846
      %1187 = vmatprep.subr.mxu0 0.0
      %1188 = vmatpush1.msra.mxu0 0.0
      %1189 = vmatprep.subr.mxu0 0.0
      %1190 = vmatpush1.msra.mxu0 0.0
      %1191 = vmatprep.subr.mxu0 0.0
      %1192 = vmatpush1.msra.mxu0 0.0
      %1193 = vmatprep.subr.mxu0 0.0
      %1194 = vmatpush1.msra.mxu0 0.0
      %1195 = vmatprep.subr.mxu0 0.0
      %1196 = vmatpush1.msra.mxu0 0.0
      %1197 = vmatprep.subr.mxu0 0.0
      %1198 = vmatpush1.msra.mxu0 0.0
      %1199 = vmatprep.subr.mxu0 0.0
      %1200 = vmatpush1.msra.mxu0 0.0
      %1201 = vmatprep.subr.mxu0 0.0
      %1202 = vmatpush1.msra.mxu0 0.0
      %1203 = vmatprep.subr.mxu0 0.0
      %1204 = vmatpush1.msra.mxu0 0.0
      %1205 = vmatprep.subr.mxu0 0.0
      %1206 = vmatpush1.msra.mxu0 0.0
      %1207 = vmatprep.subr.mxu0 0.0
      %1208 = vmatpush1.msra.mxu0 0.0
      %1209 = vmatprep.subr.mxu0 0.0
      %1210 = vmatpush1.msra.mxu0 0.0
      %1211 = vmatprep.subr.mxu0 0.0
      %1212 = vmatpush1.msra.mxu0 0.0
      %1213 = vmatprep.subr.mxu0 0.0
      %1214 = vmatpush1.msra.mxu0 0.0
      %1215 = vmatprep.subr.mxu0 0.0
      %1216 = vmatpush1.msra.mxu0 0.0
      %1217 = vmatprep.subr.mxu0 0.0
      %1218 = vmatpush1.msra.mxu0 0.0
      %1219 = vmatprep.subr.mxu0 0.0
      %1220 = vmatpush1.msra.mxu0 0.0
      %1221 = vmatprep.subr.mxu0 0.0
      %1222 = vmatpush1.msra.mxu0 0.0
      %1223 = vmatprep.subr.mxu0 0.0
      %1224 = vmatpush1.msra.mxu0 0.0
      %1225 = vmatprep.subr.mxu0 0.0
      %1226 = vmatpush1.msra.mxu0 0.0
      %1227 = vmatprep.subr.mxu0 0.0
      %1228 = vmatpush1.msra.mxu0 0.0
      %1229 = vmatprep.subr.mxu0 0.0
      %1230 = vmatpush1.msra.mxu0 0.0
      %1231 = vmatprep.subr.mxu0 0.0
      %1232 = vmatpush1.msra.mxu0 0.0
      %1233 = vmatprep.subr.mxu0 0.0
      %1234 = vmatpush1.msra.mxu0 0.0
      %1235 = vmatprep.subr.mxu0 0.0
      %1236 = vmatpush1.msra.mxu0 0.0
      %1237 = vmatprep.subr.mxu0 0.0
      %1238 = vmatpush1.msra.mxu0 0.0
      %1239 = vmatprep.subr.mxu0 0.0
      %1240 = vmatpush1.msra.mxu0 0.0
      %1241 = vmatprep.subr.mxu0 0.0
      %1242 = vmatpush1.msra.mxu0 0.0
      %1243 = vmatprep.subr.mxu0 0.0
      %1244 = vmatpush1.msra.mxu0 0.0
      %1245 = vmatprep.subr.mxu0 0.0
      %1246 = vmatpush1.msra.mxu0 0.0
      %1247 = vmatprep.subr.mxu0 0.0
      %1248 = vmatpush1.msra.mxu0 0.0
      %1249 = vmatprep.mubr.f32.mxu0 0.0
      %1250 = vmatmul.mubr.f32.gmra.mrb[0].mxu0 %v1177
      %v1251 = vpop.f32.mrb[0].mxu0
      %v1252 = vadd.f32 %v1163, %v1251
      %v1253 = vpop.f32.mrb[0].mxu0
      %1254 = vmatprep.mubr.f32.mxu0 0.0
      %1255 = vmatmul.mubr.f32.gmra.mrb[0].mxu0 %v1180
      %v1256 = vpop.f32.mrb[0].mxu0
      %v1257 = vadd.f32 %v1168, %v1256
      %v1258 = vpop.f32.mrb[0].mxu0
      %1259 = vmatprep.mubr.f32.mxu0 0.0
      %1260 = vmatmul.mubr.f32.gmra.mrb[0].mxu0 %v1183
      %v1261 = vpop.f32.mrb[0].mxu0
      %v1262 = vadd.f32 %v1173, %v1261
      %v1263 = vpop.f32.mrb[0].mxu0
      %1264 = vdwg.mxu0
      %1265 = vrot.lane.b32.xlu0 %v593, 112
      %v1266 = vpop.permute.xlu0 %1265
      %1267 = vrot.lane.b32.xlu0 %v598, 112
      %v1268 = vpop.permute.xlu0 %1267
      %1269 = vrot.lane.b32.xlu0 %v603, 112
      %v1270 = vpop.permute.xlu0 %1269
      %1271 = vrot.lane.b32.xlu0 %v593, 80
      %v1272 = vpop.permute.xlu0 %1271
      %1273 = vrot.lane.b32.xlu0 %v598, 80
      %v1274 = vpop.permute.xlu0 %1273
      %1275 = vrot.lane.b32.xlu0 %v603, 80
      %v1276 = vpop.permute.xlu0 %1275
      %v1277 = vsel %vm615, %v1266, 0
      %v1279 = vsel %vm615, %v1268, 0
      %v1281 = vsel %vm615, %v1270, 0
      %v1283 = vsel %vm615, %v1272, 0
      %v1285 = vsel %vm615, %v1274, 0
      %v1287 = vsel %vm615, %v1276, 0
      %1289 = vmatprep.subr.mxu0 0.0
      %1290 = vmatpush1.xpose.msra.mxu0 %v1283
      %1291 = vmatprep.subr.mxu0 0.0
      %1292 = vmatpush1.xpose.msra.mxu0 %v1285
      %1293 = vmatprep.subr.mxu0 0.0
      %1294 = vmatpush1.xpose.msra.mxu0 %v1287
      %1295 = vmatprep.subr.mxu0 0.0
      %1296 = vmatpush1.xpose.msra.mxu0 0.0
      %1297 = vmatprep.subr.mxu0 0.0
      %1298 = vmatpush1.xpose.msra.mxu0 0.0
      %1299 = vmatprep.subr.mxu0 0.0
      %1300 = vmatpush1.xpose.msra.mxu0 0.0
      %1301 = vmatprep.subr.mxu0 0.0
      %1302 = vmatpush1.xpose.msra.mxu0 0.0
      %1303 = vmatprep.subr.mxu0 0.0
      %1304 = vmatpush1.xpose.msra.mxu0 0.0
      %1305 = vmatprep.subr.mxu0 0.0
      %1306 = vmatpush1.xpose.msra.mxu0 0.0
      %1307 = vmatprep.subr.mxu0 0.0
      %1308 = vmatpush1.xpose.msra.mxu0 0.0
      %1309 = vmatprep.subr.mxu0 0.0
      %1310 = vmatpush1.xpose.msra.mxu0 0.0
      %1311 = vmatprep.subr.mxu0 0.0
      %1312 = vmatpush1.xpose.msra.mxu0 0.0
      %1313 = vmatprep.subr.mxu0 0.0
      %1314 = vmatpush1.xpose.msra.mxu0 0.0
      %1315 = vmatprep.subr.mxu0 0.0
      %1316 = vmatpush1.xpose.msra.mxu0 0.0
      %1317 = vmatprep.subr.mxu0 0.0
      %1318 = vmatpush1.xpose.msra.mxu0 0.0
      %1319 = vmatprep.subr.mxu0 0.0
      %1320 = vmatpush1.xpose.msra.mxu0 0.0
      %1321 = vmatprep.subr.mxu0 0.0
      %1322 = vmatpush1.xpose.msra.mxu0 0.0
      %1323 = vmatprep.subr.mxu0 0.0
      %1324 = vmatpush1.xpose.msra.mxu0 0.0
      %1325 = vmatprep.subr.mxu0 0.0
      %1326 = vmatpush1.xpose.msra.mxu0 0.0
      %1327 = vmatprep.subr.mxu0 0.0
      %1328 = vmatpush1.xpose.msra.mxu0 0.0
      %1329 = vmatprep.subr.mxu0 0.0
      %1330 = vmatpush1.xpose.msra.mxu0 0.0
      %1331 = vmatprep.subr.mxu0 0.0
      %1332 = vmatpush1.xpose.msra.mxu0 0.0
      %1333 = vmatprep.subr.mxu0 0.0
      %1334 = vmatpush1.xpose.msra.mxu0 0.0
      %1335 = vmatprep.subr.mxu0 0.0
      %1336 = vmatpush1.xpose.msra.mxu0 0.0
      %1337 = vmatprep.subr.mxu0 0.0
      %1338 = vmatpush1.xpose.msra.mxu0 0.0
      %1339 = vmatprep.subr.mxu0 0.0
      %1340 = vmatpush1.xpose.msra.mxu0 0.0
      %1341 = vmatprep.subr.mxu0 0.0
      %1342 = vmatpush1.xpose.msra.mxu0 0.0
      %1343 = vmatprep.subr.mxu0 0.0
      %1344 = vmatpush1.xpose.msra.mxu0 0.0
      %1345 = vmatprep.subr.mxu0 0.0
      %1346 = vmatpush1.xpose.msra.mxu0 0.0
      %1347 = vmatprep.subr.mxu0 0.0
      %1348 = vmatpush1.xpose.msra.mxu0 0.0
      %1349 = vmatprep.subr.mxu0 0.0
      %1350 = vmatpush1.xpose.msra.mxu0 0.0
      %1351 = vmatprep.subr.mxu0 0.0
      %1352 = vmatpush1.xpose.msra.mxu0 0.0
      %1353 = vmatprep.mubr.f32.mxu0 0.0
      %1354 = vmatmul.mubr.f32.gmra.mrb[0].mxu0 %v1277
      %v1355 = vpop.f32.mrb[0].mxu0
      %v1356 = vadd.f32 0.0, %v1355
      %v1357 = vpop.f32.mrb[0].mxu0
      %1358 = vmatprep.mubr.f32.mxu0 0.0
      %1359 = vmatmul.mubr.f32.gmra.mrb[0].mxu0 %v1279
      %v1360 = vpop.f32.mrb[0].mxu0
      %v1361 = vadd.f32 0.0, %v1360
      %v1362 = vpop.f32.mrb[0].mxu0
      %1363 = vmatprep.mubr.f32.mxu0 0.0
      %1364 = vmatmul.mubr.f32.gmra.mrb[0].mxu0 %v1281
      %v1365 = vpop.f32.mrb[0].mxu0
      %v1366 = vadd.f32 0.0, %v1365
      %v1367 = vpop.f32.mrb[0].mxu0
      %1368 = vdwg.mxu0
      %v1369 = vmul.f32 %v1356, 0.35355338
      %v1370 = vmul.f32 %v1361, 0.35355338
      %v1371 = vmul.f32 %v1366, 0.35355338
      %v1372 = vsel %vm711, %v1369, -inf
      %1373 = vmax.xlane.f32.xlu0 %v1372
      %v1374 = vpop.xlane.xlu0 %1373
      %v1375 = vsel %vm711, %v1370, -inf
      %1376 = vmax.xlane.f32.xlu0 %v1375
      %v1377 = vpop.xlane.xlu0 %1376
      %v1378 = vsel %vm718, %v1371, -inf
      %1379 = vmax.xlane.f32.xlu0 %v1378
      %v1380 = vpop.xlane.xlu0 %1379
      %v1381 = vsub.f32 %v1369, %v1374
      %v1382 = vsub.f32 %v1370, %v1377
      %v1383 = vsub.f32 %v1371, %v1380
      %v1384 = vmul.f32 %v1381, 1.442695
      %v1385 = vpow.pop %v1384
      %v1386 = vmul.f32 %v1382, 1.442695
      %v1387 = vpow.pop %v1386
      %v1388 = vmul.f32 %v1383, 1.442695
      %v1389 = vpow.pop %v1388
      %v1390 = vsel %vm711, %v1385, 0.0
      %1391 = vadd.xlane.f32.xlu0 %v1390
      %v1392 = vpop.xlane.xlu0 %1391
      %v1393 = vsel %vm711, %v1387, 0.0
      %1394 = vadd.xlane.f32.xlu0 %v1393
      %v1395 = vpop.xlane.xlu0 %1394
      %v1396 = vsel %vm718, %v1389, 0.0
      %1397 = vadd.xlane.f32.xlu0 %v1396
      %v1398 = vpop.xlane.xlu0 %1397
      %v1399 = vrcp.pop %v1392
      %v1400 = vrcp.pop %v1395
      %v1401 = vrcp.pop %v1398
      %v1402 = vmul.f32 %v1385, %v1399
      %v1403 = vmul.f32 %v1387, %v1400
      %v1404 = vmul.f32 %v1389, %v1401
      %1405 = vrot.lane.b32.xlu0 %v593, 48
      %v1406 = vpop.permute.xlu0 %1405
      %1407 = vrot.lane.b32.xlu0 %v598, 48
      %v1408 = vpop.permute.xlu0 %1407
      %1409 = vrot.lane.b32.xlu0 %v603, 48
      %v1410 = vpop.permute.xlu0 %1409
      %v1414 = vsel %vm711, %v1402, 0
      %v1417 = vsel %vm711, %v1403, 0
      %v1420 = vsel %vm711, %v1404, 0
      %v1422 = vsel %vm763, %v1410, 0
      %1424 = vmatprep.subr.mxu0 0.0
      %1425 = vmatpush1.msra.mxu0 %v1406
      %1426 = vmatprep.subr.mxu0 0.0
      %1427 = vmatpush1.msra.mxu0 %v1408
      %1428 = vmatprep.subr.mxu0 0.0
      %1429 = vmatpush1.msra.mxu0 %v1422
      %1430 = vmatprep.subr.mxu0 0.0
      %1431 = vmatpush1.msra.mxu0 0.0
      %1432 = vmatprep.subr.mxu0 0.0
      %1433 = vmatpush1.msra.mxu0 0.0
      %1434 = vmatprep.subr.mxu0 0.0
      %1435 = vmatpush1.msra.mxu0 0.0
      %1436 = vmatprep.subr.mxu0 0.0
      %1437 = vmatpush1.msra.mxu0 0.0
      %1438 = vmatprep.subr.mxu0 0.0
      %1439 = vmatpush1.msra.mxu0 0.0
      %1440 = vmatprep.subr.mxu0 0.0
      %1441 = vmatpush1.msra.mxu0 0.0
      %1442 = vmatprep.subr.mxu0 0.0
      %1443 = vmatpush1.msra.mxu0 0.0
      %1444 = vmatprep.subr.mxu0 0.0
      %1445 = vmatpush1.msra.mxu0 0.0
      %1446 = vmatprep.subr.mxu0 0.0
      %1447 = vmatpush1.msra.mxu0 0.0
      %1448 = vmatprep.subr.mxu0 0.0
      %1449 = vmatpush1.msra.mxu0 0.0
      %1450 = vmatprep.subr.mxu0 0.0
      %1451 = vmatpush1.msra.mxu0 0.0
      %1452 = vmatprep.subr.mxu0 0.0
      %1453 = vmatpush1.msra.mxu0 0.0
      %1454 = vmatprep.subr.mxu0 0.0
      %1455 = vmatpush1.msra.mxu0 0.0
      %1456 = vmatprep.subr.mxu0 0.0
      %1457 = vmatpush1.msra.mxu0 0.0
      %1458 = vmatprep.subr.mxu0 0.0
      %1459 = vmatpush1.msra.mxu0 0.0
      %1460 = vmatprep.subr.mxu0 0.0
      %1461 = vmatpush1.msra.mxu0 0.0
      %1462 = vmatprep.subr.mxu0 0.0
      %1463 = vmatpush1.msra.mxu0 0.0
      %1464 = vmatprep.subr.mxu0 0.0
      %1465 = vmatpush1.msra.mxu0 0.0
      %1466 = vmatprep.subr.mxu0 0.0
      %1467 = vmatpush1.msra.mxu0 0.0
      %1468 = vmatprep.subr.mxu0 0.0
      %1469 = vmatpush1.msra.mxu0 0.0
      %1470 = vmatprep.subr.mxu0 0.0
      %1471 = vmatpush1.msra.mxu0 0.0
      %1472 = vmatprep.subr.mxu0 0.0
      %1473 = vmatpush1.msra.mxu0 0.0
      %1474 = vmatprep.subr.mxu0 0.0
      %1475 = vmatpush1.msra.mxu0 0.0
      %1476 = vmatprep.subr.mxu0 0.0
      %1477 = vmatpush1.msra.mxu0 0.0
      %1478 = vmatprep.subr.mxu0 0.0
      %1479 = vmatpush1.msra.mxu0 0.0
      %1480 = vmatprep.subr.mxu0 0.0
      %1481 = vmatpush1.msra.mxu0 0.0
      %1482 = vmatprep.subr.mxu0 0.0
      %1483 = vmatpush1.msra.mxu0 0.0
      %1484 = vmatprep.subr.mxu0 0.0
      %1485 = vmatpush1.msra.mxu0 0.0
      %1486 = vmatprep.subr.mxu0 0.0
      %1487 = vmatpush1.msra.mxu0 0.0
      %1488 = vmatprep.mubr.f32.mxu0 0.0
      %1489 = vmatmul.mubr.f32.gmra.mrb[0].mxu0 %v1414
      %v1490 = vpop.f32.mrb[0].mxu0
      %v1491 = vadd.f32 0.0, %v1490
      %v1492 = vpop.f32.mrb[0].mxu0
      %1493 = vmatprep.mubr.f32.mxu0 0.0
      %1494 = vmatmul.mubr.f32.gmra.mrb[0].mxu0 %v1417
      %v1495 = vpop.f32.mrb[0].mxu0
      %v1496 = vadd.f32 0.0, %v1495
      %v1497 = vpop.f32.mrb[0].mxu0
      %1498 = vmatprep.mubr.f32.mxu0 0.0
      %1499 = vmatmul.mubr.f32.gmra.mrb[0].mxu0 %v1420
      %v1500 = vpop.f32.mrb[0].mxu0
      %v1501 = vadd.f32 0.0, %v1500
      %v1502 = vpop.f32.mrb[0].mxu0
      %1503 = vdwg.mxu0
      %v1504 = vld [vmem:[%s3 + $0x10] sm:$0xff]
      %v1506 = vsel %vm615, %v1491, 0
      %v1509 = vsel %vm615, %v1496, 0
      %v1512 = vsel %vm615, %v1501, 0
      %1514 = vmatprep.subr.mxu0 0.0
      %1515 = vmatpush1.msra.mxu0 %v1504
      %1516 = vmatprep.subr.mxu0 0.0
      %1517 = vmatpush1.msra.mxu0 0.0
      %1518 = vmatprep.subr.mxu0 0.0
      %1519 = vmatpush1.msra.mxu0 0.0
      %1520 = vmatprep.subr.mxu0 0.0
      %1521 = vmatpush1.msra.mxu0 0.0
      %1522 = vmatprep.subr.mxu0 0.0
      %1523 = vmatpush1.msra.mxu0 0.0
      %1524 = vmatprep.subr.mxu0 0.0
      %1525 = vmatpush1.msra.mxu0 0.0
      %1526 = vmatprep.subr.mxu0 0.0
      %1527 = vmatpush1.msra.mxu0 0.0
      %1528 = vmatprep.subr.mxu0 0.0
      %1529 = vmatpush1.msra.mxu0 0.0
      %1530 = vmatprep.subr.mxu0 0.0
      %1531 = vmatpush1.msra.mxu0 0.0
      %1532 = vmatprep.subr.mxu0 0.0
      %1533 = vmatpush1.msra.mxu0 0.0
      %1534 = vmatprep.subr.mxu0 0.0
      %1535 = vmatpush1.msra.mxu0 0.0
      %1536 = vmatprep.subr.mxu0 0.0
      %1537 = vmatpush1.msra.mxu0 0.0
      %1538 = vmatprep.subr.mxu0 0.0
      %1539 = vmatpush1.msra.mxu0 0.0
      %1540 = vmatprep.subr.mxu0 0.0
      %1541 = vmatpush1.msra.mxu0 0.0
      %1542 = vmatprep.subr.mxu0 0.0
      %1543 = vmatpush1.msra.mxu0 0.0
      %1544 = vmatprep.subr.mxu0 0.0
      %1545 = vmatpush1.msra.mxu0 0.0
      %1546 = vmatprep.subr.mxu0 0.0
      %1547 = vmatpush1.msra.mxu0 0.0
      %1548 = vmatprep.subr.mxu0 0.0
      %1549 = vmatpush1.msra.mxu0 0.0
      %1550 = vmatprep.subr.mxu0 0.0
      %1551 = vmatpush1.msra.mxu0 0.0
      %1552 = vmatprep.subr.mxu0 0.0
      %1553 = vmatpush1.msra.mxu0 0.0
      %1554 = vmatprep.subr.mxu0 0.0
      %1555 = vmatpush1.msra.mxu0 0.0
      %1556 = vmatprep.subr.mxu0 0.0
      %1557 = vmatpush1.msra.mxu0 0.0
      %1558 = vmatprep.subr.mxu0 0.0
      %1559 = vmatpush1.msra.mxu0 0.0
      %1560 = vmatprep.subr.mxu0 0.0
      %1561 = vmatpush1.msra.mxu0 0.0
      %1562 = vmatprep.subr.mxu0 0.0
      %1563 = vmatpush1.msra.mxu0 0.0
      %1564 = vmatprep.subr.mxu0 0.0
      %1565 = vmatpush1.msra.mxu0 0.0
      %1566 = vmatprep.subr.mxu0 0.0
      %1567 = vmatpush1.msra.mxu0 0.0
      %1568 = vmatprep.subr.mxu0 0.0
      %1569 = vmatpush1.msra.mxu0 0.0
      %1570 = vmatprep.subr.mxu0 0.0
      %1571 = vmatpush1.msra.mxu0 0.0
      %1572 = vmatprep.subr.mxu0 0.0
      %1573 = vmatpush1.msra.mxu0 0.0
      %1574 = vmatprep.subr.mxu0 0.0
      %1575 = vmatpush1.msra.mxu0 0.0
      %1576 = vmatprep.subr.mxu0 0.0
      %1577 = vmatpush1.msra.mxu0 0.0
      %1578 = vmatprep.mubr.f32.mxu0 0.0
      %1579 = vmatmul.mubr.f32.gmra.mrb[0].mxu0 %v1506
      %v1580 = vpop.f32.mrb[0].mxu0
      %v1581 = vadd.f32 0.0, %v1580
      %v1582 = vpop.f32.mrb[0].mxu0
      %1583 = vmatprep.mubr.f32.mxu0 0.0
      %1584 = vmatmul.mubr.f32.gmra.mrb[0].mxu0 %v1509
      %v1585 = vpop.f32.mrb[0].mxu0
      %v1586 = vadd.f32 0.0, %v1585
      %v1587 = vpop.f32.mrb[0].mxu0
      %1588 = vmatprep.mubr.f32.mxu0 0.0
      %1589 = vmatmul.mubr.f32.gmra.mrb[0].mxu0 %v1512
      %v1590 = vpop.f32.mrb[0].mxu0
      %v1591 = vadd.f32 0.0, %v1590
      %v1592 = vpop.f32.mrb[0].mxu0
      %1593 = vdwg.mxu0
      %v1594 = vadd.f32 %v1252, %v1581
      %v1595 = vadd.f32 %v1257, %v1586
      %v1596 = vadd.f32 %v1262, %v1591
      %1597 = vrot.lane.b32.xlu0 %v593, 104
      %v1598 = vpop.permute.xlu0 %1597
      %1599 = vrot.lane.b32.xlu0 %v598, 104
      %v1600 = vpop.permute.xlu0 %1599
      %1601 = vrot.lane.b32.xlu0 %v603, 104
      %v1602 = vpop.permute.xlu0 %1601
      %1603 = vrot.lane.b32.xlu0 %v593, 72
      %v1604 = vpop.permute.xlu0 %1603
      %1605 = vrot.lane.b32.xlu0 %v598, 72
      %v1606 = vpop.permute.xlu0 %1605
      %1607 = vrot.lane.b32.xlu0 %v603, 72
      %v1608 = vpop.permute.xlu0 %1607
      %v1609 = vsel %vm615, %v1598, 0
      %v1611 = vsel %vm615, %v1600, 0
      %v1613 = vsel %vm615, %v1602, 0
      %v1615 = vsel %vm615, %v1604, 0
      %v1617 = vsel %vm615, %v1606, 0
      %v1619 = vsel %vm615, %v1608, 0
      %1621 = vmatprep.subr.mxu0 0.0
      %1622 = vmatpush1.xpose.msra.mxu0 %v1615
      %1623 = vmatprep.subr.mxu0 0.0
      %1624 = vmatpush1.xpose.msra.mxu0 %v1617
      %1625 = vmatprep.subr.mxu0 0.0
      %1626 = vmatpush1.xpose.msra.mxu0 %v1619
      %1627 = vmatprep.subr.mxu0 0.0
      %1628 = vmatpush1.xpose.msra.mxu0 0.0
      %1629 = vmatprep.subr.mxu0 0.0
      %1630 = vmatpush1.xpose.msra.mxu0 0.0
      %1631 = vmatprep.subr.mxu0 0.0
      %1632 = vmatpush1.xpose.msra.mxu0 0.0
      %1633 = vmatprep.subr.mxu0 0.0
      %1634 = vmatpush1.xpose.msra.mxu0 0.0
      %1635 = vmatprep.subr.mxu0 0.0
      %1636 = vmatpush1.xpose.msra.mxu0 0.0
      %1637 = vmatprep.subr.mxu0 0.0
      %1638 = vmatpush1.xpose.msra.mxu0 0.0
      %1639 = vmatprep.subr.mxu0 0.0
      %1640 = vmatpush1.xpose.msra.mxu0 0.0
      %1641 = vmatprep.subr.mxu0 0.0
      %1642 = vmatpush1.xpose.msra.mxu0 0.0
      %1643 = vmatprep.subr.mxu0 0.0
      %1644 = vmatpush1.xpose.msra.mxu0 0.0
      %1645 = vmatprep.subr.mxu0 0.0
      %1646 = vmatpush1.xpose.msra.mxu0 0.0
      %1647 = vmatprep.subr.mxu0 0.0
      %1648 = vmatpush1.xpose.msra.mxu0 0.0
      %1649 = vmatprep.subr.mxu0 0.0
      %1650 = vmatpush1.xpose.msra.mxu0 0.0
      %1651 = vmatprep.subr.mxu0 0.0
      %1652 = vmatpush1.xpose.msra.mxu0 0.0
      %1653 = vmatprep.subr.mxu0 0.0
      %1654 = vmatpush1.xpose.msra.mxu0 0.0
      %1655 = vmatprep.subr.mxu0 0.0
      %1656 = vmatpush1.xpose.msra.mxu0 0.0
      %1657 = vmatprep.subr.mxu0 0.0
      %1658 = vmatpush1.xpose.msra.mxu0 0.0
      %1659 = vmatprep.subr.mxu0 0.0
      %1660 = vmatpush1.xpose.msra.mxu0 0.0
      %1661 = vmatprep.subr.mxu0 0.0
      %1662 = vmatpush1.xpose.msra.mxu0 0.0
      %1663 = vmatprep.subr.mxu0 0.0
      %1664 = vmatpush1.xpose.msra.mxu0 0.0
      %1665 = vmatprep.subr.mxu0 0.0
      %1666 = vmatpush1.xpose.msra.mxu0 0.0
      %1667 = vmatprep.subr.mxu0 0.0
      %1668 = vmatpush1.xpose.msra.mxu0 0.0
      %1669 = vmatprep.subr.mxu0 0.0
      %1670 = vmatpush1.xpose.msra.mxu0 0.0
      %1671 = vmatprep.subr.mxu0 0.0
      %1672 = vmatpush1.xpose.msra.mxu0 0.0
      %1673 = vmatprep.subr.mxu0 0.0
      %1674 = vmatpush1.xpose.msra.mxu0 0.0
      %1675 = vmatprep.subr.mxu0 0.0
      %1676 = vmatpush1.xpose.msra.mxu0 0.0
      %1677 = vmatprep.subr.mxu0 0.0
      %1678 = vmatpush1.xpose.msra.mxu0 0.0
      %1679 = vmatprep.subr.mxu0 0.0
      %1680 = vmatpush1.xpose.msra.mxu0 0.0
      %1681 = vmatprep.subr.mxu0 0.0
      %1682 = vmatpush1.xpose.msra.mxu0 0.0
      %1683 = vmatprep.subr.mxu0 0.0
      %1684 = vmatpush1.xpose.msra.mxu0 0.0
      %1685 = vmatprep.mubr.f32.mxu0 0.0
      %1686 = vmatmul.mubr.f32.gmra.mrb[0].mxu0 %v1609
      %v1687 = vpop.f32.mrb[0].mxu0
      %v1688 = vadd.f32 0.0, %v1687
      %v1689 = vpop.f32.mrb[0].mxu0
      %1690 = vmatprep.mubr.f32.mxu0 0.0
      %1691 = vmatmul.mubr.f32.gmra.mrb[0].mxu0 %v1611
      %v1692 = vpop.f32.mrb[0].mxu0
      %v1693 = vadd.f32 0.0, %v1692
      %v1694 = vpop.f32.mrb[0].mxu0
      %1695 = vmatprep.mubr.f32.mxu0 0.0
      %1696 = vmatmul.mubr.f32.gmra.mrb[0].mxu0 %v1613
      %v1697 = vpop.f32.mrb[0].mxu0
      %v1698 = vadd.f32 0.0, %v1697
      %v1699 = vpop.f32.mrb[0].mxu0
      %1700 = vdwg.mxu0
      %v1701 = vmul.f32 %v1688, 0.35355338
      %v1702 = vmul.f32 %v1693, 0.35355338
      %v1703 = vmul.f32 %v1698, 0.35355338
      %v1704 = vsel %vm711, %v1701, -inf
      %1705 = vmax.xlane.f32.xlu0 %v1704
      %v1706 = vpop.xlane.xlu0 %1705
      %v1707 = vsel %vm711, %v1702, -inf
      %1708 = vmax.xlane.f32.xlu0 %v1707
      %v1709 = vpop.xlane.xlu0 %1708
      %v1710 = vsel %vm718, %v1703, -inf
      %1711 = vmax.xlane.f32.xlu0 %v1710
      %v1712 = vpop.xlane.xlu0 %1711
      %v1713 = vsub.f32 %v1701, %v1706
      %v1714 = vsub.f32 %v1702, %v1709
      %v1715 = vsub.f32 %v1703, %v1712
      %v1716 = vmul.f32 %v1713, 1.442695
      %v1717 = vpow.pop %v1716
      %v1718 = vmul.f32 %v1714, 1.442695
      %v1719 = vpow.pop %v1718
      %v1720 = vmul.f32 %v1715, 1.442695
      %v1721 = vpow.pop %v1720
      %v1722 = vsel %vm711, %v1717, 0.0
      %1723 = vadd.xlane.f32.xlu0 %v1722
      %v1724 = vpop.xlane.xlu0 %1723
      %v1725 = vsel %vm711, %v1719, 0.0
      %1726 = vadd.xlane.f32.xlu0 %v1725
      %v1727 = vpop.xlane.xlu0 %1726
      %v1728 = vsel %vm718, %v1721, 0.0
      %1729 = vadd.xlane.f32.xlu0 %v1728
      %v1730 = vpop.xlane.xlu0 %1729
      %v1731 = vrcp.pop %v1724
      %v1732 = vrcp.pop %v1727
      %v1733 = vrcp.pop %v1730
      %v1734 = vmul.f32 %v1717, %v1731
      %v1735 = vmul.f32 %v1719, %v1732
      %v1736 = vmul.f32 %v1721, %v1733
      %1737 = vrot.lane.b32.xlu0 %v593, 40
      %v1738 = vpop.permute.xlu0 %1737
      %1739 = vrot.lane.b32.xlu0 %v598, 40
      %v1740 = vpop.permute.xlu0 %1739
      %1741 = vrot.lane.b32.xlu0 %v603, 40
      %v1742 = vpop.permute.xlu0 %1741
      %v1746 = vsel %vm711, %v1734, 0
      %v1749 = vsel %vm711, %v1735, 0
      %v1752 = vsel %vm711, %v1736, 0
      %v1754 = vsel %vm763, %v1742, 0
      %1756 = vmatprep.subr.mxu0 0.0
      %1757 = vmatpush1.msra.mxu0 %v1738
      %1758 = vmatprep.subr.mxu0 0.0
      %1759 = vmatpush1.msra.mxu0 %v1740
      %1760 = vmatprep.subr.mxu0 0.0
      %1761 = vmatpush1.msra.mxu0 %v1754
      %1762 = vmatprep.subr.mxu0 0.0
      %1763 = vmatpush1.msra.mxu0 0.0
      %1764 = vmatprep.subr.mxu0 0.0
      %1765 = vmatpush1.msra.mxu0 0.0
      %1766 = vmatprep.subr.mxu0 0.0
      %1767 = vmatpush1.msra.mxu0 0.0
      %1768 = vmatprep.subr.mxu0 0.0
      %1769 = vmatpush1.msra.mxu0 0.0
      %1770 = vmatprep.subr.mxu0 0.0
      %1771 = vmatpush1.msra.mxu0 0.0
      %1772 = vmatprep.subr.mxu0 0.0
      %1773 = vmatpush1.msra.mxu0 0.0
      %1774 = vmatprep.subr.mxu0 0.0
      %1775 = vmatpush1.msra.mxu0 0.0
      %1776 = vmatprep.subr.mxu0 0.0
      %1777 = vmatpush1.msra.mxu0 0.0
      %1778 = vmatprep.subr.mxu0 0.0
      %1779 = vmatpush1.msra.mxu0 0.0
      %1780 = vmatprep.subr.mxu0 0.0
      %1781 = vmatpush1.msra.mxu0 0.0
      %1782 = vmatprep.subr.mxu0 0.0
      %1783 = vmatpush1.msra.mxu0 0.0
      %1784 = vmatprep.subr.mxu0 0.0
      %1785 = vmatpush1.msra.mxu0 0.0
      %1786 = vmatprep.subr.mxu0 0.0
      %1787 = vmatpush1.msra.mxu0 0.0
      %1788 = vmatprep.subr.mxu0 0.0
      %1789 = vmatpush1.msra.mxu0 0.0
      %1790 = vmatprep.subr.mxu0 0.0
      %1791 = vmatpush1.msra.mxu0 0.0
      %1792 = vmatprep.subr.mxu0 0.0
      %1793 = vmatpush1.msra.mxu0 0.0
      %1794 = vmatprep.subr.mxu0 0.0
      %1795 = vmatpush1.msra.mxu0 0.0
      %1796 = vmatprep.subr.mxu0 0.0
      %1797 = vmatpush1.msra.mxu0 0.0
      %1798 = vmatprep.subr.mxu0 0.0
      %1799 = vmatpush1.msra.mxu0 0.0
      %1800 = vmatprep.subr.mxu0 0.0
      %1801 = vmatpush1.msra.mxu0 0.0
      %1802 = vmatprep.subr.mxu0 0.0
      %1803 = vmatpush1.msra.mxu0 0.0
      %1804 = vmatprep.subr.mxu0 0.0
      %1805 = vmatpush1.msra.mxu0 0.0
      %1806 = vmatprep.subr.mxu0 0.0
      %1807 = vmatpush1.msra.mxu0 0.0
      %1808 = vmatprep.subr.mxu0 0.0
      %1809 = vmatpush1.msra.mxu0 0.0
      %1810 = vmatprep.subr.mxu0 0.0
      %1811 = vmatpush1.msra.mxu0 0.0
      %1812 = vmatprep.subr.mxu0 0.0
      %1813 = vmatpush1.msra.mxu0 0.0
      %1814 = vmatprep.subr.mxu0 0.0
      %1815 = vmatpush1.msra.mxu0 0.0
      %1816 = vmatprep.subr.mxu0 0.0
      %1817 = vmatpush1.msra.mxu0 0.0
      %1818 = vmatprep.subr.mxu0 0.0
      %1819 = vmatpush1.msra.mxu0 0.0
      %1820 = vmatprep.mubr.f32.mxu0 0.0
      %1821 = vmatmul.mubr.f32.gmra.mrb[0].mxu0 %v1746
      %v1822 = vpop.f32.mrb[0].mxu0
      %v1823 = vadd.f32 0.0, %v1822
      %v1824 = vpop.f32.mrb[0].mxu0
      %1825 = vmatprep.mubr.f32.mxu0 0.0
      %1826 = vmatmul.mubr.f32.gmra.mrb[0].mxu0 %v1749
      %v1827 = vpop.f32.mrb[0].mxu0
      %v1828 = vadd.f32 0.0, %v1827
      %v1829 = vpop.f32.mrb[0].mxu0
      %1830 = vmatprep.mubr.f32.mxu0 0.0
      %1831 = vmatmul.mubr.f32.gmra.mrb[0].mxu0 %v1752
      %v1832 = vpop.f32.mrb[0].mxu0
      %v1833 = vadd.f32 0.0, %v1832
      %v1834 = vpop.f32.mrb[0].mxu0
      %1835 = vdwg.mxu0
      %v1836 = vld [vmem:[%s3 + $0x18] sm:$0xff]
      %v1838 = vsel %vm615, %v1823, 0
      %v1841 = vsel %vm615, %v1828, 0
      %v1844 = vsel %vm615, %v1833, 0
      %1846 = vmatprep.subr.mxu0 0.0
      %1847 = vmatpush1.msra.mxu0 %v1836
      %1848 = vmatprep.subr.mxu0 0.0
      %1849 = vmatpush1.msra.mxu0 0.0
      %1850 = vmatprep.subr.mxu0 0.0
      %1851 = vmatpush1.msra.mxu0 0.0
      %1852 = vmatprep.subr.mxu0 0.0
      %1853 = vmatpush1.msra.mxu0 0.0
      %1854 = vmatprep.subr.mxu0 0.0
      %1855 = vmatpush1.msra.mxu0 0.0
      %1856 = vmatprep.subr.mxu0 0.0
      %1857 = vmatpush1.msra.mxu0 0.0
      %1858 = vmatprep.subr.mxu0 0.0
      %1859 = vmatpush1.msra.mxu0 0.0
      %1860 = vmatprep.subr.mxu0 0.0
      %1861 = vmatpush1.msra.mxu0 0.0
      %1862 = vmatprep.subr.mxu0 0.0
      %1863 = vmatpush1.msra.mxu0 0.0
      %1864 = vmatprep.subr.mxu0 0.0
      %1865 = vmatpush1.msra.mxu0 0.0
      %1866 = vmatprep.subr.mxu0 0.0
      %1867 = vmatpush1.msra.mxu0 0.0
      %1868 = vmatprep.subr.mxu0 0.0
      %1869 = vmatpush1.msra.mxu0 0.0
      %1870 = vmatprep.subr.mxu0 0.0
      %1871 = vmatpush1.msra.mxu0 0.0
      %1872 = vmatprep.subr.mxu0 0.0
      %1873 = vmatpush1.msra.mxu0 0.0
      %1874 = vmatprep.subr.mxu0 0.0
      %1875 = vmatpush1.msra.mxu0 0.0
      %1876 = vmatprep.subr.mxu0 0.0
      %1877 = vmatpush1.msra.mxu0 0.0
      %1878 = vmatprep.subr.mxu0 0.0
      %1879 = vmatpush1.msra.mxu0 0.0
      %1880 = vmatprep.subr.mxu0 0.0
      %1881 = vmatpush1.msra.mxu0 0.0
      %1882 = vmatprep.subr.mxu0 0.0
      %1883 = vmatpush1.msra.mxu0 0.0
      %1884 = vmatprep.subr.mxu0 0.0
      %1885 = vmatpush1.msra.mxu0 0.0
      %1886 = vmatprep.subr.mxu0 0.0
      %1887 = vmatpush1.msra.mxu0 0.0
      %1888 = vmatprep.subr.mxu0 0.0
      %1889 = vmatpush1.msra.mxu0 0.0
      %1890 = vmatprep.subr.mxu0 0.0
      %1891 = vmatpush1.msra.mxu0 0.0
      %1892 = vmatprep.subr.mxu0 0.0
      %1893 = vmatpush1.msra.mxu0 0.0
      %1894 = vmatprep.subr.mxu0 0.0
      %1895 = vmatpush1.msra.mxu0 0.0
      %1896 = vmatprep.subr.mxu0 0.0
      %1897 = vmatpush1.msra.mxu0 0.0
      %1898 = vmatprep.subr.mxu0 0.0
      %1899 = vmatpush1.msra.mxu0 0.0
      %1900 = vmatprep.subr.mxu0 0.0
      %1901 = vmatpush1.msra.mxu0 0.0
      %1902 = vmatprep.subr.mxu0 0.0
      %1903 = vmatpush1.msra.mxu0 0.0
      %1904 = vmatprep.subr.mxu0 0.0
      %1905 = vmatpush1.msra.mxu0 0.0
      %1906 = vmatprep.subr.mxu0 0.0
      %1907 = vmatpush1.msra.mxu0 0.0
      %1908 = vmatprep.subr.mxu0 0.0
      %1909 = vmatpush1.msra.mxu0 0.0
      %1910 = vmatprep.mubr.f32.mxu0 0.0
      %1911 = vmatmul.mubr.f32.gmra.mrb[0].mxu0 %v1838
      %v1912 = vpop.f32.mrb[0].mxu0
      %v1913 = vadd.f32 0.0, %v1912
      %v1914 = vpop.f32.mrb[0].mxu0
      %1915 = vmatprep.mubr.f32.mxu0 0.0
      %1916 = vmatmul.mubr.f32.gmra.mrb[0].mxu0 %v1841
      %v1917 = vpop.f32.mrb[0].mxu0
      %v1918 = vadd.f32 0.0, %v1917
      %v1919 = vpop.f32.mrb[0].mxu0
      %1920 = vmatprep.mubr.f32.mxu0 0.0
      %1921 = vmatmul.mubr.f32.gmra.mrb[0].mxu0 %v1844
      %v1922 = vpop.f32.mrb[0].mxu0
      %v1923 = vadd.f32 0.0, %v1922
      %v1924 = vpop.f32.mrb[0].mxu0
      %1925 = vdwg.mxu0
      %v1926 = vadd.f32 %v1594, %v1913
      %v1927 = vadd.f32 %v1595, %v1918
      %v1928 = vadd.f32 %v1596, %v1923
      %v1929 = vadd.f32 %v441, %v1926
      %v1930 = vadd.f32 %v442, %v1927
      %v1931 = vadd.f32 %v443, %v1928
      %v1932 = vld [vmem:[%s4] sm:$0x1]
      %v1934 = vlaneseq
      %v1935 = vshrl.u32 %v1934, 7
      %v1936 = vsub.s32 0, %v1935
      %v1937 = vrot.slane %v1932, %v1936
      %v1939 = vadd.f32 %v1929, %v1937
      %v1940 = vadd.f32 %v1930, %v1937
      %v1941 = vadd.f32 %v1931, %v1937
      %v1942 = vld [vmem:[%s11] sm:$0x1]
      %v1943 = vld [vmem:[%s12] sm:$0x1]
      %v1944 = vsel %vm446, %v1939, 0.0
      %1945 = vadd.xlane.f32.xlu0 %v1944
      %v1946 = vpop.xlane.xlu0 %1945
      %v1947 = vsel %vm446, %v1940, 0.0
      %1948 = vadd.xlane.f32.xlu0 %v1947
      %v1949 = vpop.xlane.xlu0 %1948
      %v1950 = vsel %vm453, %v1941, 0.0
      %1951 = vadd.xlane.f32.xlu0 %v1950
      %v1952 = vpop.xlane.xlu0 %1951
      %v1953 = vmul.f32 %v1946, %v457
      %v1954 = vmul.f32 %v1949, %v457
      %v1955 = vmul.f32 %v1952, %v457
      %v1956 = vsub.f32 %v1939, %v1953
      %v1957 = vsub.f32 %v1940, %v1954
      %v1958 = vsub.f32 %v1941, %v1955
      %v1959 = vmul.f32 %v1956, %v1956
      %v1960 = vmul.f32 %v1957, %v1957
      %v1961 = vmul.f32 %v1958, %v1958
      %v1962 = vsel %vm446, %v1959, 0.0
      %1963 = vadd.xlane.f32.xlu0 %v1962
      %v1964 = vpop.xlane.xlu0 %1963
      %v1965 = vsel %vm446, %v1960, 0.0
      %1966 = vadd.xlane.f32.xlu0 %v1965
      %v1967 = vpop.xlane.xlu0 %1966
      %v1968 = vsel %vm453, %v1961, 0.0
      %1969 = vadd.xlane.f32.xlu0 %v1968
      %v1970 = vpop.xlane.xlu0 %1969
      %v1971 = vmul.f32 %v1964, %v457
      %v1972 = vmul.f32 %v1967, %v457
      %v1973 = vmul.f32 %v1970, %v457
      %v1974 = vadd.f32 %v1971, 1e-05
      %v1975 = vadd.f32 %v1972, 1e-05
      %v1976 = vadd.f32 %v1973, 1e-05
      %v1977 = vrsqrt.pop %v1974
      %v1978 = vrsqrt.pop %v1975
      %v1979 = vrsqrt.pop %v1976
      %v1980 = vmul.f32 %v1956, %v1977
      %v1981 = vmul.f32 %v1957, %v1978
      %v1982 = vmul.f32 %v1958, %v1979
      %v1984 = vlaneseq
      %v1985 = vshrl.u32 %v1984, 7
      %v1986 = vsub.s32 0, %v1985
      %v1987 = vrot.slane %v1942, %v1986
      %v1989 = vmul.f32 %v1980, %v1987
      %v1990 = vmul.f32 %v1981, %v1987
      %v1991 = vmul.f32 %v1982, %v1987
      %v1993 = vlaneseq
      %v1994 = vshrl.u32 %v1993, 7
      %v1995 = vsub.s32 0, %v1994
      %v1996 = vrot.slane %v1943, %v1995
      %v1998 = vadd.f32 %v1989, %v1996
      %v1999 = vadd.f32 %v1990, %v1996
      %v2000 = vadd.f32 %v1991, %v1996
      %v2001 = vld [vmem:[%s5] sm:$0xff]
      %v2002 = vld [vmem:[%s5 + $0x8] sm:$0xff]
      %v2003 = vld [vmem:[%s5 + $0x10] sm:$0xff]
      %v2004 = vld [vmem:[%s5 + $0x18] sm:$0xff]
      %v2005 = vld [vmem:[%s6] sm:$0x1]
      %v2007 = vlaneseq
      %v2008 = vshrl.u32 %v2007, 7
      %v2009 = vsub.s32 0, %v2008
      %v2010 = vrot.slane %v2005, %v2009
      %v2013 = vsel %vm446, %v1998, 0
      %v2016 = vsel %vm446, %v1999, 0
      %v2019 = vsel %vm446, %v2000, 0
      %2021 = vmatprep.subr.mxu0 0.0
      %2022 = vmatpush1.msra.mxu0 %v2001
      %2023 = vmatprep.subr.mxu0 0.0
      %2024 = vmatpush1.msra.mxu0 %v2002
      %2025 = vmatprep.subr.mxu0 0.0
      %2026 = vmatpush1.msra.mxu0 %v2003
      %2027 = vmatprep.subr.mxu0 0.0
      %2028 = vmatpush1.msra.mxu0 %v2004
      %2029 = vmatprep.subr.mxu0 0.0
      %2030 = vmatpush1.msra.mxu0 0.0
      %2031 = vmatprep.subr.mxu0 0.0
      %2032 = vmatpush1.msra.mxu0 0.0
      %2033 = vmatprep.subr.mxu0 0.0
      %2034 = vmatpush1.msra.mxu0 0.0
      %2035 = vmatprep.subr.mxu0 0.0
      %2036 = vmatpush1.msra.mxu0 0.0
      %2037 = vmatprep.subr.mxu0 0.0
      %2038 = vmatpush1.msra.mxu0 0.0
      %2039 = vmatprep.subr.mxu0 0.0
      %2040 = vmatpush1.msra.mxu0 0.0
      %2041 = vmatprep.subr.mxu0 0.0
      %2042 = vmatpush1.msra.mxu0 0.0
      %2043 = vmatprep.subr.mxu0 0.0
      %2044 = vmatpush1.msra.mxu0 0.0
      %2045 = vmatprep.subr.mxu0 0.0
      %2046 = vmatpush1.msra.mxu0 0.0
      %2047 = vmatprep.subr.mxu0 0.0
      %2048 = vmatpush1.msra.mxu0 0.0
      %2049 = vmatprep.subr.mxu0 0.0
      %2050 = vmatpush1.msra.mxu0 0.0
      %2051 = vmatprep.subr.mxu0 0.0
      %2052 = vmatpush1.msra.mxu0 0.0
      %2053 = vmatprep.subr.mxu0 0.0
      %2054 = vmatpush1.msra.mxu0 0.0
      %2055 = vmatprep.subr.mxu0 0.0
      %2056 = vmatpush1.msra.mxu0 0.0
      %2057 = vmatprep.subr.mxu0 0.0
      %2058 = vmatpush1.msra.mxu0 0.0
      %2059 = vmatprep.subr.mxu0 0.0
      %2060 = vmatpush1.msra.mxu0 0.0
      %2061 = vmatprep.subr.mxu0 0.0
      %2062 = vmatpush1.msra.mxu0 0.0
      %2063 = vmatprep.subr.mxu0 0.0
      %2064 = vmatpush1.msra.mxu0 0.0
      %2065 = vmatprep.subr.mxu0 0.0
      %2066 = vmatpush1.msra.mxu0 0.0
      %2067 = vmatprep.subr.mxu0 0.0
      %2068 = vmatpush1.msra.mxu0 0.0
      %2069 = vmatprep.subr.mxu0 0.0
      %2070 = vmatpush1.msra.mxu0 0.0
      %2071 = vmatprep.subr.mxu0 0.0
      %2072 = vmatpush1.msra.mxu0 0.0
      %2073 = vmatprep.subr.mxu0 0.0
      %2074 = vmatpush1.msra.mxu0 0.0
      %2075 = vmatprep.subr.mxu0 0.0
      %2076 = vmatpush1.msra.mxu0 0.0
      %2077 = vmatprep.subr.mxu0 0.0
      %2078 = vmatpush1.msra.mxu0 0.0
      %2079 = vmatprep.subr.mxu0 0.0
      %2080 = vmatpush1.msra.mxu0 0.0
      %2081 = vmatprep.subr.mxu0 0.0
      %2082 = vmatpush1.msra.mxu0 0.0
      %2083 = vmatprep.subr.mxu0 0.0
      %2084 = vmatpush1.msra.mxu0 0.0
      %2085 = vmatprep.mubr.f32.mxu0 0.0
      %2086 = vmatmul.mubr.f32.gmra.mrb[0].mxu0 %v2013
      %v2087 = vpop.f32.mrb[0].mxu0
      %v2088 = vadd.f32 %v2010, %v2087
      %v2089 = vpop.f32.mrb[0].mxu0
      %2090 = vmatprep.mubr.f32.mxu0 0.0
      %2091 = vmatmul.mubr.f32.gmra.mrb[0].mxu0 %v2016
      %v2092 = vpop.f32.mrb[0].mxu0
      %v2093 = vadd.f32 %v2010, %v2092
      %v2094 = vpop.f32.mrb[0].mxu0
      %2095 = vmatprep.mubr.f32.mxu0 0.0
      %2096 = vmatmul.mubr.f32.gmra.mrb[0].mxu0 %v2019
      %v2097 = vpop.f32.mrb[0].mxu0
      %v2098 = vadd.f32 %v2010, %v2097
      %v2099 = vpop.f32.mrb[0].mxu0
      %2100 = vdwg.mxu0
      %v2101 = vmul.f32 %v2088, 0.5
      %v2102 = vmul.f32 %v2093, 0.5
      %v2103 = vmul.f32 %v2098, 0.5
      %v2104 = vmul.f32 %v2088, 0.70710677
      %v2105 = vmul.f32 %v2093, 0.70710677
      %v2106 = vmul.f32 %v2098, 0.70710677
      %v2107 = verf.f32.pop %v2104
      %v2108 = verf.f32.pop %v2105
      %v2109 = verf.f32.pop %v2106
      %v2110 = vadd.f32 %v2107, 1.0
      %v2111 = vadd.f32 %v2108, 1.0
      %v2112 = vadd.f32 %v2109, 1.0
      %v2113 = vmul.f32 %v2101, %v2110
      %v2114 = vmul.f32 %v2102, %v2111
      %v2115 = vmul.f32 %v2103, %v2112
      %v2116 = vld [vmem:[%s7] sm:$0xff]
      %v2117 = vld [vmem:[%s7 + $0x8] sm:$0xff]
      %v2118 = vld [vmem:[%s7 + $0x10] sm:$0xff]
      %v2119 = vld [vmem:[%s7 + $0x18] sm:$0xff]
      %v2120 = vld [vmem:[%s7 + $0x20] sm:$0xff]
      %v2121 = vld [vmem:[%s7 + $0x28] sm:$0xff]
      %v2122 = vld [vmem:[%s7 + $0x30] sm:$0xff]
      %v2123 = vld [vmem:[%s7 + $0x38] sm:$0xff]
      %v2124 = vld [vmem:[%s7 + $0x40] sm:$0xff]
      %v2125 = vld [vmem:[%s7 + $0x48] sm:$0xff]
      %v2126 = vld [vmem:[%s7 + $0x50] sm:$0xff]
      %v2127 = vld [vmem:[%s7 + $0x58] sm:$0xff]
      %v2128 = vld [vmem:[%s7 + $0x60] sm:$0xff]
      %v2129 = vld [vmem:[%s7 + $0x68] sm:$0xff]
      %v2130 = vld [vmem:[%s7 + $0x70] sm:$0xff]
      %v2131 = vld [vmem:[%s7 + $0x78] sm:$0xff]
      %2132 = vmatprep.subr.mxu0 0.0
      %2133 = vmatpush1.msra.mxu0 %v2116
      %2134 = vmatprep.subr.mxu0 0.0
      %2135 = vmatpush1.msra.mxu0 %v2117
      %2136 = vmatprep.subr.mxu0 0.0
      %2137 = vmatpush1.msra.mxu0 %v2118
      %2138 = vmatprep.subr.mxu0 0.0
      %2139 = vmatpush1.msra.mxu0 %v2119
      %2140 = vmatprep.subr.mxu0 0.0
      %2141 = vmatpush1.msra.mxu0 %v2120
      %2142 = vmatprep.subr.mxu0 0.0
      %2143 = vmatpush1.msra.mxu0 %v2121
      %2144 = vmatprep.subr.mxu0 0.0
      %2145 = vmatpush1.msra.mxu0 %v2122
      %2146 = vmatprep.subr.mxu0 0.0
      %2147 = vmatpush1.msra.mxu0 %v2123
      %2148 = vmatprep.subr.mxu0 0.0
      %2149 = vmatpush1.msra.mxu0 %v2124
      %2150 = vmatprep.subr.mxu0 0.0
      %2151 = vmatpush1.msra.mxu0 %v2125
      %2152 = vmatprep.subr.mxu0 0.0
      %2153 = vmatpush1.msra.mxu0 %v2126
      %2154 = vmatprep.subr.mxu0 0.0
      %2155 = vmatpush1.msra.mxu0 %v2127
      %2156 = vmatprep.subr.mxu0 0.0
      %2157 = vmatpush1.msra.mxu0 %v2128
      %2158 = vmatprep.subr.mxu0 0.0
      %2159 = vmatpush1.msra.mxu0 %v2129
      %2160 = vmatprep.subr.mxu0 0.0
      %2161 = vmatpush1.msra.mxu0 %v2130
      %2162 = vmatprep.subr.mxu0 0.0
      %2163 = vmatpush1.msra.mxu0 %v2131
      %2164 = vmatprep.subr.mxu0 0.0
      %2165 = vmatpush1.msra.mxu0 0.0
      %2166 = vmatprep.subr.mxu0 0.0
      %2167 = vmatpush1.msra.mxu0 0.0
      %2168 = vmatprep.subr.mxu0 0.0
      %2169 = vmatpush1.msra.mxu0 0.0
      %2170 = vmatprep.subr.mxu0 0.0
      %2171 = vmatpush1.msra.mxu0 0.0
      %2172 = vmatprep.subr.mxu0 0.0
      %2173 = vmatpush1.msra.mxu0 0.0
      %2174 = vmatprep.subr.mxu0 0.0
      %2175 = vmatpush1.msra.mxu0 0.0
      %2176 = vmatprep.subr.mxu0 0.0
      %2177 = vmatpush1.msra.mxu0 0.0
      %2178 = vmatprep.subr.mxu0 0.0
      %2179 = vmatpush1.msra.mxu0 0.0
      %2180 = vmatprep.subr.mxu0 0.0
      %2181 = vmatpush1.msra.mxu0 0.0
      %2182 = vmatprep.subr.mxu0 0.0
      %2183 = vmatpush1.msra.mxu0 0.0
      %2184 = vmatprep.subr.mxu0 0.0
      %2185 = vmatpush1.msra.mxu0 0.0
      %2186 = vmatprep.subr.mxu0 0.0
      %2187 = vmatpush1.msra.mxu0 0.0
      %2188 = vmatprep.subr.mxu0 0.0
      %2189 = vmatpush1.msra.mxu0 0.0
      %2190 = vmatprep.subr.mxu0 0.0
      %2191 = vmatpush1.msra.mxu0 0.0
      %2192 = vmatprep.subr.mxu0 0.0
      %2193 = vmatpush1.msra.mxu0 0.0
      %2194 = vmatprep.subr.mxu0 0.0
      %2195 = vmatpush1.msra.mxu0 0.0
      %2196 = vmatprep.mubr.f32.mxu0 0.0
      %2197 = vmatmul.mubr.f32.gmra.mrb[0].mxu0 %v2113
      %v2198 = vpop.f32.mrb[0].mxu0
      %v2199 = vadd.f32 0.0, %v2198
      %v2200 = vpop.f32.mrb[0].mxu0
      %2201 = vmatprep.mubr.f32.mxu0 0.0
      %2202 = vmatmul.mubr.f32.gmra.mrb[0].mxu0 %v2114
      %v2203 = vpop.f32.mrb[0].mxu0
      %v2204 = vadd.f32 0.0, %v2203
      %v2205 = vpop.f32.mrb[0].mxu0
      %2206 = vmatprep.mubr.f32.mxu0 0.0
      %2207 = vmatmul.mubr.f32.gmra.mrb[0].mxu0 %v2115
      %v2208 = vpop.f32.mrb[0].mxu0
      %v2209 = vadd.f32 0.0, %v2208
      %v2210 = vpop.f32.mrb[0].mxu0
      %2211 = vdwg.mxu0
      %v2212 = vadd.f32 %v1939, %v2199
      %v2213 = vadd.f32 %v1940, %v2204
      %v2214 = vadd.f32 %v1941, %v2209
      %v2215 = vld [vmem:[%s8] sm:$0x1]
      %v2217 = vlaneseq
      %v2218 = vshrl.u32 %v2217, 7
      %v2219 = vsub.s32 0, %v2218
      %v2220 = vrot.slane %v2215, %v2219
      %v2222 = vadd.f32 %v2212, %v2220
      %v2223 = vadd.f32 %v2213, %v2220
      %v2224 = vadd.f32 %v2214, %v2220
      %2225 = vst.msk [vmem:[%s440] sm:$0xff] %vm446, %v2222
      %2226 = vst.msk [vmem:[%s440 + $0x8] sm:$0xff] %vm446, %v2223
      %2227 = vst.msk [vmem:[%s440 + $0x10] sm:$0x1] %vm453, %v2224
      %p2228 = scmp.lt.s32.totalorder %s24, 1
      %s2229 = scalar_select %p2228, %s24, 1
      %s2230 = smul.addr %s2229, 3
      %s2231 = smul.addr %s2230, 8
      %s2232 = scalar_lea.vmem %s13, %s2231
      // Predicated region
      $region73: #{mae_decoder_forward.4} parent=71 // pred_check
        %p2233 = pneg %p320
      $region74: #{mae_decoder_forward.4} parent=71 // pred_check_branch
        %2235 = sbr.rel (%p2233) target = $region76
      $region75: #{mae_decoder_forward.4} parent=71 // pred_region
        _
      $region76: #{mae_decoder_forward.4} parent=71 // pred_fallthru
        _
    $region72: #{mae_decoder_forward.4} parent=5 // pred_fallthru
      _
    %p2236 = scmp.le.s32.totalorder 2, %s19
    // Predicated region
    $region77: #{mae_decoder_forward.4} parent=5 // pred_check
      %p2237 = pneg %p2236
    $region78: #{mae_decoder_forward.4} parent=5 // pred_check_branch
      %2239 = sbr.rel (%p2237) target = $region80
    $region79: #{mae_decoder_forward.4} parent=5 // pred_region
      %s2240 = ssub.s32 %s19, 2
      // Predicated region
      $region81: #{mae_decoder_forward.4} parent=79 // pred_check
        %p2241 = pneg %p326
      $region82: #{mae_decoder_forward.4} parent=79 // pred_check_branch
        %2243 = sbr.rel (%p2241) target = $region84
      $region83: #{mae_decoder_forward.4} parent=79 // pred_region
        %p2244 = scmp.lt.s32.totalorder %s25, 1
        %s2245 = scalar_select %p2244, %s25, 1
        %s2246 = smul.addr %s2245, 3
        %s2247 = smul.addr %s2246, 8
        %s2248 = scalar_lea.vmem %s13, %s2247
      $region84: #{mae_decoder_forward.4} parent=79 // pred_fallthru
        _
    $region80: #{mae_decoder_forward.4} parent=5 // pred_fallthru
      _
  $region6: #{mae_decoder_forward.4} parent=0 // loop_footer
    %s23 = sadd.s32 1, %s19
  $region7: #{mae_decoder_forward.4} parent=0 // loop_footer_branch
    %18 = sbr.rel target = $region3
  $region8: #{mae_decoder_forward.4} parent=0 // loop_exit
    _

</llo_original>
